<compile_context>
chip_gen: v5e
topology: v5e:2x2
jax: 0.10.0
libtpu: 0.0.40
codegen_flags: <defaults>
</compile_context>

<pallas_src>
import math

import jax
import jax.numpy as jnp
import numpy as np
from jax.experimental import pallas as pl
from jax.experimental.pallas import tpu as pltpu

POINT_DIM = 3
COND_DIM = 128
TIME_DIM = 128
HIDDEN_DIM = 128
OUT_PAD = 8            # narrow padded output width (real output is 3 lanes)
LN_EPS = 1e-5


def _layernorm(z, gamma, beta):
    # Single-pass variance (mean(z^2) - mu^2), clamped for numerical safety.
    mu = jnp.mean(z, axis=-1, keepdims=True)
    var = jnp.maximum(jnp.mean(z * z, axis=-1, keepdims=True) - mu * mu, 0.0)
    return (z - mu) * jax.lax.rsqrt(var + LN_EPS) * gamma + beta


def ddpm_deformer_kernel(
    x_ref, ct_ref,
    wt1_ref, wc_ref, wtf_ref, wx_ref, w2_ref, w3_ref, vecs_ref,
    out_ref,
):
    f32 = jnp.float32
    bf16 = jnp.bfloat16

    # Packed per-feature vectors: one (8,128) f32 load.
    vecs = vecs_ref[...]
    bt1 = vecs[0:1, :]
    b1f = vecs[1:2, :]    # b1 + bt2 @ wt   (folded at prepare time)
    g1 = vecs[2:3, :]
    be1 = vecs[3:4, :]
    b2 = vecs[4:5, :]
    g2 = vecs[5:6, :]
    be2 = vecs[6:7, :]
    b3 = vecs[7:8, :]     # final bias, zero-padded to 128 lanes

    # Packed (tm, 256) bf16 input: cond | t_embed.
    cond = ct_ref[:, :COND_DIM]
    temb = ct_ref[:, COND_DIM:]

    # --- t_embed_proj first Linear + ReLU (second Linear folded into wtf) ---
    t1 = jnp.dot(temb, wt1_ref[...], preferred_element_type=f32) + bt1
    t1 = jnp.maximum(t1, 0.0)

    # --- first net Linear on cat([x, cond, t2], -1) ---
    # cond / t parts as two K=128 bf16 dots; x part (K=3) on the VPU.
    z = jnp.dot(cond, wc_ref[...], preferred_element_type=f32)
    z = z + jnp.dot(t1.astype(bf16), wtf_ref[...], preferred_element_type=f32)

    x = x_ref[...]            # (tm, 3) f32
    wx = wx_ref[...]          # (3, 128) f32
    z = (z
         + x[:, 0:1] * wx[0:1, :]
         + x[:, 1:2] * wx[1:2, :]
         + x[:, 2:3] * wx[2:3, :]
         + b1f)

    # --- LayerNorm -> ReLU ---
    # NOTE: zero-padded rows still produce finite values here (discarded later).
    h1 = jnp.maximum(_layernorm(z, g1, be1), 0.0)

    # --- Linear -> LayerNorm -> ReLU ---
    z2 = jnp.dot(h1.astype(bf16), w2_ref[...], preferred_element_type=f32) + b2
    h2 = jnp.maximum(_layernorm(z2, g2, be2), 0.0)

    # --- final Linear: full 128-wide MXU matmul, store only the first 8 lanes ---
    res = jnp.dot(h2.astype(bf16), w3_ref[...], preferred_element_type=f32) + b3
    out_ref[...] = res[:, :OUT_PAD]


def init_params(key, point_dim=POINT_DIM, cond_dim=COND_DIM,
                time_dim=TIME_DIM, hidden_dim=HIDDEN_DIM):
    """Deterministic synthetic parameters (torch.nn.Linear-like uniform init),
    stored in (in_features, out_features) layout; biases as (1, out)."""
    in_dim = point_dim + cond_dim + time_dim
    keys = jax.random.split(key, 12)

    def lin(k, fan_in, fan_out):
        kw, kb = jax.random.split(k)
        bound = 1.0 / math.sqrt(fan_in)
        w = jax.random.uniform(kw, (fan_in, fan_out), jnp.float32, -bound, bound)
        b = jax.random.uniform(kb, (1, fan_out), jnp.float32, -bound, bound)
        return w, b

    wt1, bt1 = lin(keys[0], time_dim, time_dim)
    wt2, bt2 = lin(keys[1], time_dim, time_dim)
    w1, b1 = lin(keys[2], in_dim, hidden_dim)
    w2, b2 = lin(keys[3], hidden_dim, hidden_dim)
    w3, b3 = lin(keys[4], hidden_dim, 3)

    # split first layer weight into x / cond / t chunks (cat order: x, cond, t)
    wx = w1[:point_dim]
    wc = w1[point_dim:point_dim + cond_dim]
    wt = w1[point_dim + cond_dim:]

    g1 = jnp.ones((1, hidden_dim), jnp.float32)
    be1 = jnp.zeros((1, hidden_dim), jnp.float32)
    g2 = jnp.ones((1, hidden_dim), jnp.float32)
    be2 = jnp.zeros((1, hidden_dim), jnp.float32)

    return dict(wt1=wt1, bt1=bt1, wt2=wt2, bt2=bt2,
                wx=wx, wc=wc, wt=wt, b1=b1, g1=g1, be1=be1,
                w2=w2, b2=b2, g2=g2, be2=be2, w3=w3, b3=b3)


def prepare_params(p):
    """One-time trace-time fusion / packing of kernel weights (exact in f32,
    then cast). Call ONCE; pass the result to the forward."""
    wtf = p["wt2"] @ p["wt"]                 # (128,128): wt2 folded through wt
    b1f = p["b1"] + p["bt2"] @ p["wt"]       # bt2 folded into first net bias
    w3p = jnp.zeros((HIDDEN_DIM, HIDDEN_DIM), jnp.float32).at[:, :POINT_DIM].set(p["w3"])
    b3p = jnp.zeros((1, HIDDEN_DIM), jnp.float32).at[:, :POINT_DIM].set(p["b3"])
    vecs = jnp.concatenate(
        [p["bt1"], b1f, p["g1"], p["be1"], p["b2"], p["g2"], p["be2"], b3p],
        axis=0).astype(jnp.float32)          # (8,128)
    prep = dict(
        wt1=p["wt1"].astype(jnp.bfloat16),
        wc=p["wc"].astype(jnp.bfloat16),
        wtf=wtf.astype(jnp.bfloat16),
        wx=p["wx"].astype(jnp.float32),      # (3,128), used on the VPU
        w2=p["w2"].astype(jnp.bfloat16),
        w3=w3p.astype(jnp.bfloat16),
        vecs=vecs,
    )
    return jax.tree_util.tree_map(jax.block_until_ready, prep)


def _pick_tm(M):
    """Row-tile choice: largest tile (<=2048) that divides M with >=2 grid steps
    (no row padding, feeds both v7x TCs / overlaps writeback); else largest tile
    with >=2 steps; else a single padded step. VMEM is never the constraint."""
    candidates = (2048, 1024, 512, 256, 128, 64, 32, 16, 8)
    for tm in candidates:
        if M % tm == 0 and M // tm >= 2:
            return tm
    for tm in candidates:
        if pl.cdiv(M, tm) >= 2:
            return tm
    return max(8, int(pl.cdiv(M, 8)) * 8)


def ddpm_deformer_forward(x_t, t_embed, cond_feat, prep, tm=None):
    """x_t: (..., 3), t_embed: (..., time_dim), cond_feat: (..., cond_dim)."""
    lead = x_t.shape[:-1]
    M = int(np.prod(lead)) if lead else 1
    tm = _pick_tm(M) if tm is None else tm
    M_pad = int(pl.cdiv(M, tm)) * tm

    # x stays f32 (VPU path); cond|t_embed packed into ONE (M,256) bf16 array.
    x = x_t.reshape(M, POINT_DIM).astype(jnp.float32)
    ct = jnp.concatenate(
        [cond_feat.reshape(M, COND_DIM), t_embed.reshape(M, TIME_DIM)],
        axis=-1).astype(jnp.bfloat16)
    if M_pad != M:
        pad = M_pad - M
        x = jnp.pad(x, ((0, pad), (0, 0)))
        ct = jnp.pad(ct, ((0, pad), (0, 0)))

    weights = [prep["wt1"], prep["wc"], prep["wtf"], prep["wx"],
               prep["w2"], prep["w3"], prep["vecs"]]

    def full_spec(a):
        return pl.BlockSpec(a.shape, lambda i: (0,) * a.ndim)

    in_specs = [
        pl.BlockSpec((tm, POINT_DIM), lambda i: (i, 0)),
        pl.BlockSpec((tm, COND_DIM + TIME_DIM), lambda i: (i, 0)),
    ] + [full_spec(w) for w in weights]

    out = pl.pallas_call(
        ddpm_deformer_kernel,
        out_shape=jax.ShapeDtypeStruct((M_pad, OUT_PAD), jnp.float32),
        grid_spec=pltpu.PrefetchScalarGridSpec(
            num_scalar_prefetch=0,
            grid=(M_pad // tm,),
            in_specs=in_specs,
            out_specs=pl.BlockSpec((tm, OUT_PAD), lambda i: (i, 0)),
        ),
        compiler_params=pltpu.CompilerParams(
            dimension_semantics=("parallel",)),
    )(x, ct, *weights)

    return out[:M, :POINT_DIM].reshape(*lead, POINT_DIM)


_jit_forward = jax.jit(ddpm_deformer_forward, static_argnames=("tm",))


def _reference_forward(x_t, t_embed, cond_feat, p):
    """Pure-JAX f32 reference mirroring the PyTorch module."""
    t1 = jnp.maximum(t_embed @ p["wt1"] + p["bt1"], 0.0)
    t2 = t1 @ p["wt2"] + p["bt2"]
    h = jnp.concatenate([x_t, cond_feat, t2], axis=-1)
    w1 = jnp.concatenate([p["wx"], p["wc"], p["wt"]], axis=0)

    def ln(z, gamma, beta):
        mu = jnp.mean(z, axis=-1, keepdims=True)
        var = jnp.mean((z - mu) ** 2, axis=-1, keepdims=True)
        return (z - mu) * jax.lax.rsqrt(var + LN_EPS) * gamma + beta

    z = jnp.maximum(ln(h @ w1 + p["b1"], p["g1"], p["be1"]), 0.0)
    z2 = jnp.maximum(ln(z @ p["w2"] + p["b2"], p["g2"], p["be2"]), 0.0)
    return z2 @ p["w3"] + p["b3"]


if __name__ == "__main__":
    key = jax.random.PRNGKey(0)
    kx, kt, kc, kp = jax.random.split(key, 4)

    B, N = 2, 256  # 512 rows -> tm=256, 2 grid steps (divides exactly, no pad)
    x_t = jax.random.normal(kx, (B, N, POINT_DIM), jnp.float32)
    t_embed = jax.random.normal(kt, (B, N, TIME_DIM), jnp.float32)
    cond_feat = jax.random.normal(kc, (B, N, COND_DIM), jnp.float32)

    params = init_params(kp)
    prep = prepare_params(params)   # one-time weight fusion/packing

    out = jax.block_until_ready(_jit_forward(x_t, t_embed, cond_feat, prep))

    ref = _reference_forward(x_t, t_embed, cond_feat, params)
    assert out.shape == (B, N, 3)
    # bf16 matmul operands + algebraic fusion change rounding -> looser tolerance.
    np.testing.assert_allclose(np.asarray(out), np.asarray(ref), rtol=1e-1, atol=5e-2)

    print("KERNEL_OK")
</pallas_src>

<mosaic_0001>
module attributes {stable_mosaic.version = 11 : i64} {
  func.func @ddpm_deformer_kernel(%arg0: i32, %arg1: memref<256x3xf32, #tpu.memory_space<vmem>>, %arg2: memref<256x256xbf16, #tpu.memory_space<vmem>>, %arg3: memref<128x128xbf16, #tpu.memory_space<vmem>>, %arg4: memref<128x128xbf16, #tpu.memory_space<vmem>>, %arg5: memref<128x128xbf16, #tpu.memory_space<vmem>>, %arg6: memref<3x128xf32, #tpu.memory_space<vmem>>, %arg7: memref<128x128xbf16, #tpu.memory_space<vmem>>, %arg8: memref<128x128xbf16, #tpu.memory_space<vmem>>, %arg9: memref<8x128xf32, #tpu.memory_space<vmem>>, %arg10: memref<256x8xf32, #tpu.memory_space<vmem>>) attributes {dimension_semantics = [#tpu.dimension_semantics<parallel>], iteration_bounds = array<i64: 2>, scalar_prefetch = 0 : i64, scratch_operands = 0 : i64, tpu.core_type = #tpu.core_type<tc>, window_params = [{transform_indices = @transform_0, window_bounds = array<i64: 256, 3>}, {transform_indices = @transform_1, window_bounds = array<i64: 256, 256>}, {pipeline_mode = #tpu.pipeline_mode<synchronous>, transform_indices = @transform_2, window_bounds = array<i64: 128, 128>}, {pipeline_mode = #tpu.pipeline_mode<synchronous>, transform_indices = @transform_3, window_bounds = array<i64: 128, 128>}, {pipeline_mode = #tpu.pipeline_mode<synchronous>, transform_indices = @transform_4, window_bounds = array<i64: 128, 128>}, {pipeline_mode = #tpu.pipeline_mode<synchronous>, transform_indices = @transform_5, window_bounds = array<i64: 3, 128>}, {pipeline_mode = #tpu.pipeline_mode<synchronous>, transform_indices = @transform_6, window_bounds = array<i64: 128, 128>}, {pipeline_mode = #tpu.pipeline_mode<synchronous>, transform_indices = @transform_7, window_bounds = array<i64: 128, 128>}, {pipeline_mode = #tpu.pipeline_mode<synchronous>, transform_indices = @transform_8, window_bounds = array<i64: 8, 128>}, {transform_indices = @transform_9, window_bounds = array<i64: 256, 8>}]} {
    %c0 = arith.constant 0 : index
    %c0_0 = arith.constant 0 : index
    %0 = vector.load %arg9[%c0, %c0_0] : memref<8x128xf32, #tpu.memory_space<vmem>>, vector<8x128xf32>
    %1 = vector.extract_strided_slice %0 {offsets = [0, 0], sizes = [1, 128], strides = [1, 1]} : vector<8x128xf32> to vector<1x128xf32>
    %2 = vector.extract_strided_slice %0 {offsets = [1, 0], sizes = [1, 128], strides = [1, 1]} : vector<8x128xf32> to vector<1x128xf32>
    %3 = vector.extract_strided_slice %0 {offsets = [2, 0], sizes = [1, 128], strides = [1, 1]} : vector<8x128xf32> to vector<1x128xf32>
    %4 = vector.extract_strided_slice %0 {offsets = [3, 0], sizes = [1, 128], strides = [1, 1]} : vector<8x128xf32> to vector<1x128xf32>
    %5 = vector.extract_strided_slice %0 {offsets = [4, 0], sizes = [1, 128], strides = [1, 1]} : vector<8x128xf32> to vector<1x128xf32>
    %6 = vector.extract_strided_slice %0 {offsets = [5, 0], sizes = [1, 128], strides = [1, 1]} : vector<8x128xf32> to vector<1x128xf32>
    %7 = vector.extract_strided_slice %0 {offsets = [6, 0], sizes = [1, 128], strides = [1, 1]} : vector<8x128xf32> to vector<1x128xf32>
    %8 = vector.extract_strided_slice %0 {offsets = [7, 0], sizes = [1, 128], strides = [1, 1]} : vector<8x128xf32> to vector<1x128xf32>
    %c0_1 = arith.constant 0 : index
    %c0_2 = arith.constant 0 : index
    %9 = vector.load %arg2[%c0_1, %c0_2] : memref<256x256xbf16, #tpu.memory_space<vmem>>, vector<256x128xbf16>
    %c0_3 = arith.constant 0 : index
    %c128 = arith.constant 128 : index
    %10 = vector.load %arg2[%c0_3, %c128] : memref<256x256xbf16, #tpu.memory_space<vmem>>, vector<256x128xbf16>
    %c0_4 = arith.constant 0 : index
    %c0_5 = arith.constant 0 : index
    %11 = vector.load %arg3[%c0_4, %c0_5] : memref<128x128xbf16, #tpu.memory_space<vmem>>, vector<128x128xbf16>
    %cst = arith.constant dense<0.000000e+00> : vector<256x128xf32>
    %12 = tpu.matmul %10, %11, %cst {dimension_numbers = #tpu.dot_dimension_numbers<[1], [0], [0], [1], [0, 0, 1, 1], [], []>} : vector<256x128xbf16>, vector<128x128xbf16>, vector<256x128xf32> -> vector<256x128xf32>
    %13 = vector.broadcast %1 : vector<1x128xf32> to vector<256x128xf32>
    %14 = arith.addf %12, %13 : vector<256x128xf32>
    %cst_6 = arith.constant 0.000000e+00 : f32
    %15 = vector.broadcast %cst_6 : f32 to vector<256x128xf32>
    %16 = arith.maximumf %14, %15 : vector<256x128xf32>
    %c0_7 = arith.constant 0 : index
    %c0_8 = arith.constant 0 : index
    %17 = vector.load %arg4[%c0_7, %c0_8] : memref<128x128xbf16, #tpu.memory_space<vmem>>, vector<128x128xbf16>
    %cst_9 = arith.constant dense<0.000000e+00> : vector<256x128xf32>
    %18 = tpu.matmul %9, %17, %cst_9 {dimension_numbers = #tpu.dot_dimension_numbers<[1], [0], [0], [1], [0, 0, 1, 1], [], []>} : vector<256x128xbf16>, vector<128x128xbf16>, vector<256x128xf32> -> vector<256x128xf32>
    %19 = arith.truncf %16 : vector<256x128xf32> to vector<256x128xbf16>
    %c0_10 = arith.constant 0 : index
    %c0_11 = arith.constant 0 : index
    %20 = vector.load %arg5[%c0_10, %c0_11] : memref<128x128xbf16, #tpu.memory_space<vmem>>, vector<128x128xbf16>
    %cst_12 = arith.constant dense<0.000000e+00> : vector<256x128xf32>
    %21 = tpu.matmul %19, %20, %cst_12 {dimension_numbers = #tpu.dot_dimension_numbers<[1], [0], [0], [1], [0, 0, 1, 1], [], []>} : vector<256x128xbf16>, vector<128x128xbf16>, vector<256x128xf32> -> vector<256x128xf32>
    %22 = arith.addf %18, %21 : vector<256x128xf32>
    %c0_13 = arith.constant 0 : index
    %c0_14 = arith.constant 0 : index
    %23 = vector.load %arg1[%c0_13, %c0_14] : memref<256x3xf32, #tpu.memory_space<vmem>>, vector<256x3xf32>
    %c0_15 = arith.constant 0 : index
    %c0_16 = arith.constant 0 : index
    %24 = vector.load %arg6[%c0_15, %c0_16] : memref<3x128xf32, #tpu.memory_space<vmem>>, vector<3x128xf32>
    %25 = vector.extract_strided_slice %23 {offsets = [0, 0], sizes = [256, 1], strides = [1, 1]} : vector<256x3xf32> to vector<256x1xf32>
    %26 = vector.extract_strided_slice %24 {offsets = [0, 0], sizes = [1, 128], strides = [1, 1]} : vector<3x128xf32> to vector<1x128xf32>
    %27 = vector.broadcast %25 : vector<256x1xf32> to vector<256x128xf32>
    %28 = vector.broadcast %26 : vector<1x128xf32> to vector<256x128xf32>
    %29 = arith.mulf %27, %28 : vector<256x128xf32>
    %30 = arith.addf %22, %29 : vector<256x128xf32>
    %31 = vector.extract_strided_slice %23 {offsets = [0, 1], sizes = [256, 1], strides = [1, 1]} : vector<256x3xf32> to vector<256x1xf32>
    %32 = vector.extract_strided_slice %24 {offsets = [1, 0], sizes = [1, 128], strides = [1, 1]} : vector<3x128xf32> to vector<1x128xf32>
    %33 = vector.broadcast %31 : vector<256x1xf32> to vector<256x128xf32>
    %34 = vector.broadcast %32 : vector<1x128xf32> to vector<256x128xf32>
    %35 = arith.mulf %33, %34 : vector<256x128xf32>
    %36 = arith.addf %30, %35 : vector<256x128xf32>
    %37 = vector.extract_strided_slice %23 {offsets = [0, 2], sizes = [256, 1], strides = [1, 1]} : vector<256x3xf32> to vector<256x1xf32>
    %38 = vector.extract_strided_slice %24 {offsets = [2, 0], sizes = [1, 128], strides = [1, 1]} : vector<3x128xf32> to vector<1x128xf32>
    %39 = vector.broadcast %37 : vector<256x1xf32> to vector<256x128xf32>
    %40 = vector.broadcast %38 : vector<1x128xf32> to vector<256x128xf32>
    %41 = arith.mulf %39, %40 : vector<256x128xf32>
    %42 = arith.addf %36, %41 : vector<256x128xf32>
    %43 = vector.broadcast %2 : vector<1x128xf32> to vector<256x128xf32>
    %44 = arith.addf %42, %43 : vector<256x128xf32>
    %cst_17 = arith.constant dense<0.000000e+00> : vector<256xf32>
    %45 = vector.multi_reduction <add>, %44, %cst_17 [1] : vector<256x128xf32> to vector<256xf32>
    %46 = vector.shape_cast %45 : vector<256xf32> to vector<256x1xf32>
    %cst_18 = arith.constant 1.280000e+02 : f32
    %47 = vector.broadcast %cst_18 : f32 to vector<256x1xf32>
    %48 = arith.divf %46, %47 : vector<256x1xf32>
    %49 = arith.mulf %44, %44 : vector<256x128xf32>
    %cst_19 = arith.constant dense<0.000000e+00> : vector<256xf32>
    %50 = vector.multi_reduction <add>, %49, %cst_19 [1] : vector<256x128xf32> to vector<256xf32>
    %51 = vector.shape_cast %50 : vector<256xf32> to vector<256x1xf32>
    %cst_20 = arith.constant 1.280000e+02 : f32
    %52 = vector.broadcast %cst_20 : f32 to vector<256x1xf32>
    %53 = arith.divf %51, %52 : vector<256x1xf32>
    %54 = arith.mulf %48, %48 : vector<256x1xf32>
    %55 = arith.subf %53, %54 : vector<256x1xf32>
    %cst_21 = arith.constant 0.000000e+00 : f32
    %56 = vector.broadcast %cst_21 : f32 to vector<256x1xf32>
    %57 = arith.maximumf %55, %56 : vector<256x1xf32>
    %58 = vector.broadcast %48 : vector<256x1xf32> to vector<256x128xf32>
    %59 = arith.subf %44, %58 : vector<256x128xf32>
    %cst_22 = arith.constant 9.99999974E-6 : f32
    %60 = vector.broadcast %cst_22 : f32 to vector<256x1xf32>
    %61 = arith.addf %57, %60 : vector<256x1xf32>
    %62 = math.rsqrt %61 : vector<256x1xf32>
    %63 = vector.broadcast %62 : vector<256x1xf32> to vector<256x128xf32>
    %64 = arith.mulf %59, %63 : vector<256x128xf32>
    %65 = vector.broadcast %3 : vector<1x128xf32> to vector<256x128xf32>
    %66 = arith.mulf %64, %65 : vector<256x128xf32>
    %67 = vector.broadcast %4 : vector<1x128xf32> to vector<256x128xf32>
    %68 = arith.addf %66, %67 : vector<256x128xf32>
    %cst_23 = arith.constant 0.000000e+00 : f32
    %69 = vector.broadcast %cst_23 : f32 to vector<256x128xf32>
    %70 = arith.maximumf %68, %69 : vector<256x128xf32>
    %71 = arith.truncf %70 : vector<256x128xf32> to vector<256x128xbf16>
    %c0_24 = arith.constant 0 : index
    %c0_25 = arith.constant 0 : index
    %72 = vector.load %arg7[%c0_24, %c0_25] : memref<128x128xbf16, #tpu.memory_space<vmem>>, vector<128x128xbf16>
    %cst_26 = arith.constant dense<0.000000e+00> : vector<256x128xf32>
    %73 = tpu.matmul %71, %72, %cst_26 {dimension_numbers = #tpu.dot_dimension_numbers<[1], [0], [0], [1], [0, 0, 1, 1], [], []>} : vector<256x128xbf16>, vector<128x128xbf16>, vector<256x128xf32> -> vector<256x128xf32>
    %74 = vector.broadcast %5 : vector<1x128xf32> to vector<256x128xf32>
    %75 = arith.addf %73, %74 : vector<256x128xf32>
    %cst_27 = arith.constant dense<0.000000e+00> : vector<256xf32>
    %76 = vector.multi_reduction <add>, %75, %cst_27 [1] : vector<256x128xf32> to vector<256xf32>
    %77 = vector.shape_cast %76 : vector<256xf32> to vector<256x1xf32>
    %cst_28 = arith.constant 1.280000e+02 : f32
    %78 = vector.broadcast %cst_28 : f32 to vector<256x1xf32>
    %79 = arith.divf %77, %78 : vector<256x1xf32>
    %80 = arith.mulf %75, %75 : vector<256x128xf32>
    %cst_29 = arith.constant dense<0.000000e+00> : vector<256xf32>
    %81 = vector.multi_reduction <add>, %80, %cst_29 [1] : vector<256x128xf32> to vector<256xf32>
    %82 = vector.shape_cast %81 : vector<256xf32> to vector<256x1xf32>
    %cst_30 = arith.constant 1.280000e+02 : f32
    %83 = vector.broadcast %cst_30 : f32 to vector<256x1xf32>
    %84 = arith.divf %82, %83 : vector<256x1xf32>
    %85 = arith.mulf %79, %79 : vector<256x1xf32>
    %86 = arith.subf %84, %85 : vector<256x1xf32>
    %cst_31 = arith.constant 0.000000e+00 : f32
    %87 = vector.broadcast %cst_31 : f32 to vector<256x1xf32>
    %88 = arith.maximumf %86, %87 : vector<256x1xf32>
    %89 = vector.broadcast %79 : vector<256x1xf32> to vector<256x128xf32>
    %90 = arith.subf %75, %89 : vector<256x128xf32>
    %cst_32 = arith.constant 9.99999974E-6 : f32
    %91 = vector.broadcast %cst_32 : f32 to vector<256x1xf32>
    %92 = arith.addf %88, %91 : vector<256x1xf32>
    %93 = math.rsqrt %92 : vector<256x1xf32>
    %94 = vector.broadcast %93 : vector<256x1xf32> to vector<256x128xf32>
    %95 = arith.mulf %90, %94 : vector<256x128xf32>
    %96 = vector.broadcast %6 : vector<1x128xf32> to vector<256x128xf32>
    %97 = arith.mulf %95, %96 : vector<256x128xf32>
    %98 = vector.broadcast %7 : vector<1x128xf32> to vector<256x128xf32>
    %99 = arith.addf %97, %98 : vector<256x128xf32>
    %cst_33 = arith.constant 0.000000e+00 : f32
    %100 = vector.broadcast %cst_33 : f32 to vector<256x128xf32>
    %101 = arith.maximumf %99, %100 : vector<256x128xf32>
    %102 = arith.truncf %101 : vector<256x128xf32> to vector<256x128xbf16>
    %c0_34 = arith.constant 0 : index
    %c0_35 = arith.constant 0 : index
    %103 = vector.load %arg8[%c0_34, %c0_35] : memref<128x128xbf16, #tpu.memory_space<vmem>>, vector<128x128xbf16>
    %cst_36 = arith.constant dense<0.000000e+00> : vector<256x128xf32>
    %104 = tpu.matmul %102, %103, %cst_36 {dimension_numbers = #tpu.dot_dimension_numbers<[1], [0], [0], [1], [0, 0, 1, 1], [], []>} : vector<256x128xbf16>, vector<128x128xbf16>, vector<256x128xf32> -> vector<256x128xf32>
    %105 = vector.broadcast %8 : vector<1x128xf32> to vector<256x128xf32>
    %106 = arith.addf %104, %105 : vector<256x128xf32>
    %107 = vector.extract_strided_slice %106 {offsets = [0, 0], sizes = [256, 8], strides = [1, 1]} : vector<256x128xf32> to vector<256x8xf32>
    %c0_37 = arith.constant 0 : index
    %c0_38 = arith.constant 0 : index
    %108 = vector.load %arg10[%c0_37, %c0_38] : memref<256x8xf32, #tpu.memory_space<vmem>>, vector<256x8xf32>
    tpu.vector_store %arg10[%c0_37, %c0_38], %107 {strides = array<i32>} : memref<256x8xf32, #tpu.memory_space<vmem>>, vector<256x8xf32>,
    return
  }
  func.func @transform_0(%arg0: i32) -> (i32, i32) {
    %c0_i32 = arith.constant 0 : i32
    %c0_i32_0 = arith.constant 0 : i32
    return %arg0, %c0_i32 : i32, i32
  }
  func.func @transform_1(%arg0: i32) -> (i32, i32) {
    %c0_i32 = arith.constant 0 : i32
    %c0_i32_0 = arith.constant 0 : i32
    return %arg0, %c0_i32 : i32, i32
  }
  func.func @transform_2(%arg0: i32) -> (i32, i32) {
    %c0_i32 = arith.constant 0 : i32
    %c0_i32_0 = arith.constant 0 : i32
    %c0_i32_1 = arith.constant 0 : i32
    return %c0_i32, %c0_i32_0 : i32, i32
  }
  func.func @transform_3(%arg0: i32) -> (i32, i32) {
    %c0_i32 = arith.constant 0 : i32
    %c0_i32_0 = arith.constant 0 : i32
    %c0_i32_1 = arith.constant 0 : i32
    return %c0_i32, %c0_i32_0 : i32, i32
  }
  func.func @transform_4(%arg0: i32) -> (i32, i32) {
    %c0_i32 = arith.constant 0 : i32
    %c0_i32_0 = arith.constant 0 : i32
    %c0_i32_1 = arith.constant 0 : i32
    return %c0_i32, %c0_i32_0 : i32, i32
  }
  func.func @transform_5(%arg0: i32) -> (i32, i32) {
    %c0_i32 = arith.constant 0 : i32
    %c0_i32_0 = arith.constant 0 : i32
    %c0_i32_1 = arith.constant 0 : i32
    return %c0_i32, %c0_i32_0 : i32, i32
  }
  func.func @transform_6(%arg0: i32) -> (i32, i32) {
    %c0_i32 = arith.constant 0 : i32
    %c0_i32_0 = arith.constant 0 : i32
    %c0_i32_1 = arith.constant 0 : i32
    return %c0_i32, %c0_i32_0 : i32, i32
  }
  func.func @transform_7(%arg0: i32) -> (i32, i32) {
    %c0_i32 = arith.constant 0 : i32
    %c0_i32_0 = arith.constant 0 : i32
    %c0_i32_1 = arith.constant 0 : i32
    return %c0_i32, %c0_i32_0 : i32, i32
  }
  func.func @transform_8(%arg0: i32) -> (i32, i32) {
    %c0_i32 = arith.constant 0 : i32
    %c0_i32_0 = arith.constant 0 : i32
    %c0_i32_1 = arith.constant 0 : i32
    return %c0_i32, %c0_i32_0 : i32, i32
  }
  func.func @transform_9(%arg0: i32) -> (i32, i32) {
    %c0_i32 = arith.constant 0 : i32
    %c0_i32_0 = arith.constant 0 : i32
    return %arg0, %c0_i32 : i32, i32
  }
}

</mosaic_0001>

<llo_original>
// kernel: ddpm_deformer_forward.1
$region0: #{ddpm_deformer_forward.1}
  #allocation0 [shape = 'u32[]', space=smem, size = 0x4, offset = 0x4, fixed_abs, tag = 'smem constant byte address 0x4 - core index']
  #allocation1 [shape = 'u32[72,128]{1,0:T(1,128)}', space=vmem, size = 0x9000, scoped, tag = 'internal scratch']
  %s0 = inlined_call_operand.vmem [shape: f32[512,3], index: 0, kind: input, shape index: {}]
  %s1 = inlined_call_operand.vmem [shape: bf16[512,256], index: 1, kind: input, shape index: {}]
  %s2 = inlined_call_operand.vmem [shape: bf16[128,128], index: 2, kind: input, shape index: {}]
  %s3 = inlined_call_operand.vmem [shape: bf16[128,128], index: 3, kind: input, shape index: {}]
  %s4 = inlined_call_operand.vmem [shape: bf16[128,128], index: 4, kind: input, shape index: {}]
  %s5 = inlined_call_operand.vmem [shape: f32[3,128], index: 5, kind: input, shape index: {}]
  %s6 = inlined_call_operand.vmem [shape: bf16[128,128], index: 6, kind: input, shape index: {}]
  %s7 = inlined_call_operand.vmem [shape: bf16[128,128], index: 7, kind: input, shape index: {}]
  %s8 = inlined_call_operand.vmem [shape: f32[8,128], index: 8, kind: input, shape index: {}]
  %s9 = inlined_call_operand.vmem [shape: f32[512,8], index: 9, kind: output, shape index: {}]
  %s10 = sld [smem:[#allocation0]]
  $region69: #{ddpm_deformer_forward.1} parent=0
    _
  %s12 = ssub.s32 1, %s10
  %s13 = scalar_select 0, %s12, %s10
  loop: start=0, step=1, limit=4
  $region2: #{ddpm_deformer_forward.1} parent=0 // loop_pre_header
    _
  $region3: #{ddpm_deformer_forward.1} parent=0 // loop_header
    %s15 = sphi 0, %s19
    %p16 = scmp.ge.s32.totalorder %s15, 4
    %s25 = sphi 0, %s27
    %s28 = sphi 0, %s25
    %s29 = sphi 0, %s28
    %s45 = sphi 0, %s29
    %s51 = sphi 0, %s53
    %s54 = sphi 0, %s51
    %s55 = sphi 0, %s54
    %s71 = sphi 0, %s55
    %s75 = sphi 0, %s75
    %s77 = sphi 0, %s75
    %s78 = sphi 0, %s77
    %s92 = sphi 0, %s78
    %s96 = sphi 0, %s96
    %s98 = sphi 0, %s96
    %s99 = sphi 0, %s98
    %s113 = sphi 0, %s99
    %s117 = sphi 0, %s117
    %s119 = sphi 0, %s117
    %s120 = sphi 0, %s119
    %s134 = sphi 0, %s120
    %s138 = sphi 0, %s138
    %s140 = sphi 0, %s138
    %s141 = sphi 0, %s140
    %s155 = sphi 0, %s141
    %s159 = sphi 0, %s159
    %s161 = sphi 0, %s159
    %s162 = sphi 0, %s161
    %s176 = sphi 0, %s162
    %s180 = sphi 0, %s180
    %s182 = sphi 0, %s180
    %s183 = sphi 0, %s182
    %s197 = sphi 0, %s183
    %s201 = sphi 0, %s201
    %s203 = sphi 0, %s201
    %s204 = sphi 0, %s203
    %s218 = sphi 0, %s204
    %s224 = sphi 0, %s226
    %s227 = sphi 0, %s224
    %s228 = sphi 0, %s227
    %s244 = sphi 0, %s228
  $region4: #{ddpm_deformer_forward.1} parent=0 // loop_header_branch
    %18 = sbr.rel (%p16) target = $region8
  $region5: #{ddpm_deformer_forward.1} parent=0 // loop_body
    %s20 = ssub.s32 %s15, 1
    %s21 = ssub.s32 %s15, 2
    %s22 = sadd.s32 %s15, 1
    %s23 = ssub.s32 %s15, %s22
    %p24 = scmp.eq.s32.totalorder %s23, 0
    %s26 = sadd.s32 %s25, 1
    %s27 = scalar_select %p24, %s25, %s26
    %p30 = pneg %p24
    %p31 = scmp.eq.s32.totalorder %s15, 1
    %p32 = por %p30, %p31
    %p33 = scmp.ne.s32.totalorder %s25, %s28
    %p34 = scmp.eq.s32.totalorder %s15, 0
    %p35 = por %p33, %p34
    %p36 = scmp.ne.s32.totalorder %s25, %s28
    %p37 = scmp.eq.s32.totalorder %s20, 1
    %p38 = por %p36, %p37
    %p39 = scmp.ne.s32.totalorder %s28, %s29
    %p40 = scmp.eq.s32.totalorder %s20, 0
    %p41 = por %p39, %p40
    %p42 = scmp.ne.s32.totalorder %s28, %s29
    %p43 = scmp.eq.s32.totalorder %s21, 1
    %p44 = por %p42, %p43
    %p46 = scmp.ne.s32.totalorder %s29, %s45
    %p47 = scmp.eq.s32.totalorder %s21, 0
    %p48 = por %p46, %p47
    %s49 = ssub.s32 %s15, %s22
    %p50 = scmp.eq.s32.totalorder %s49, 0
    %s52 = sadd.s32 %s51, 1
    %s53 = scalar_select %p50, %s51, %s52
    %p56 = pneg %p50
    %p57 = scmp.eq.s32.totalorder %s15, 1
    %p58 = por %p56, %p57
    %p59 = scmp.ne.s32.totalorder %s51, %s54
    %p60 = scmp.eq.s32.totalorder %s15, 0
    %p61 = por %p59, %p60
    %p62 = scmp.ne.s32.totalorder %s51, %s54
    %p63 = scmp.eq.s32.totalorder %s20, 1
    %p64 = por %p62, %p63
    %p65 = scmp.ne.s32.totalorder %s54, %s55
    %p66 = scmp.eq.s32.totalorder %s20, 0
    %p67 = por %p65, %p66
    %p68 = scmp.ne.s32.totalorder %s54, %s55
    %p69 = scmp.eq.s32.totalorder %s21, 1
    %p70 = por %p68, %p69
    %p72 = scmp.ne.s32.totalorder %s55, %s71
    %p73 = scmp.eq.s32.totalorder %s21, 0
    %p74 = por %p72, %p73
    %s76 = sadd.s32 %s75, 1
    %p79 = scmp.eq.s32.totalorder %s15, 1
    %p80 = scmp.ne.s32.totalorder %s75, %s77
    %p81 = scmp.eq.s32.totalorder %s15, 0
    %p82 = por %p80, %p81
    %p83 = scmp.ne.s32.totalorder %s75, %s77
    %p84 = scmp.eq.s32.totalorder %s20, 1
    %p85 = por %p83, %p84
    %p86 = scmp.ne.s32.totalorder %s77, %s78
    %p87 = scmp.eq.s32.totalorder %s20, 0
    %p88 = por %p86, %p87
    %p89 = scmp.ne.s32.totalorder %s77, %s78
    %p90 = scmp.eq.s32.totalorder %s21, 1
    %p91 = por %p89, %p90
    %p93 = scmp.ne.s32.totalorder %s78, %s92
    %p94 = scmp.eq.s32.totalorder %s21, 0
    %p95 = por %p93, %p94
    %s97 = sadd.s32 %s96, 1
    %p100 = scmp.eq.s32.totalorder %s15, 1
    %p101 = scmp.ne.s32.totalorder %s96, %s98
    %p102 = scmp.eq.s32.totalorder %s15, 0
    %p103 = por %p101, %p102
    %p104 = scmp.ne.s32.totalorder %s96, %s98
    %p105 = scmp.eq.s32.totalorder %s20, 1
    %p106 = por %p104, %p105
    %p107 = scmp.ne.s32.totalorder %s98, %s99
    %p108 = scmp.eq.s32.totalorder %s20, 0
    %p109 = por %p107, %p108
    %p110 = scmp.ne.s32.totalorder %s98, %s99
    %p111 = scmp.eq.s32.totalorder %s21, 1
    %p112 = por %p110, %p111
    %p114 = scmp.ne.s32.totalorder %s99, %s113
    %p115 = scmp.eq.s32.totalorder %s21, 0
    %p116 = por %p114, %p115
    %s118 = sadd.s32 %s117, 1
    %p121 = scmp.eq.s32.totalorder %s15, 1
    %p122 = scmp.ne.s32.totalorder %s117, %s119
    %p123 = scmp.eq.s32.totalorder %s15, 0
    %p124 = por %p122, %p123
    %p125 = scmp.ne.s32.totalorder %s117, %s119
    %p126 = scmp.eq.s32.totalorder %s20, 1
    %p127 = por %p125, %p126
    %p128 = scmp.ne.s32.totalorder %s119, %s120
    %p129 = scmp.eq.s32.totalorder %s20, 0
    %p130 = por %p128, %p129
    %p131 = scmp.ne.s32.totalorder %s119, %s120
    %p132 = scmp.eq.s32.totalorder %s21, 1
    %p133 = por %p131, %p132
    %p135 = scmp.ne.s32.totalorder %s120, %s134
    %p136 = scmp.eq.s32.totalorder %s21, 0
    %p137 = por %p135, %p136
    %s139 = sadd.s32 %s138, 1
    %p142 = scmp.eq.s32.totalorder %s15, 1
    %p143 = scmp.ne.s32.totalorder %s138, %s140
    %p144 = scmp.eq.s32.totalorder %s15, 0
    %p145 = por %p143, %p144
    %p146 = scmp.ne.s32.totalorder %s138, %s140
    %p147 = scmp.eq.s32.totalorder %s20, 1
    %p148 = por %p146, %p147
    %p149 = scmp.ne.s32.totalorder %s140, %s141
    %p150 = scmp.eq.s32.totalorder %s20, 0
    %p151 = por %p149, %p150
    %p152 = scmp.ne.s32.totalorder %s140, %s141
    %p153 = scmp.eq.s32.totalorder %s21, 1
    %p154 = por %p152, %p153
    %p156 = scmp.ne.s32.totalorder %s141, %s155
    %p157 = scmp.eq.s32.totalorder %s21, 0
    %p158 = por %p156, %p157
    %s160 = sadd.s32 %s159, 1
    %p163 = scmp.eq.s32.totalorder %s15, 1
    %p164 = scmp.ne.s32.totalorder %s159, %s161
    %p165 = scmp.eq.s32.totalorder %s15, 0
    %p166 = por %p164, %p165
    %p167 = scmp.ne.s32.totalorder %s159, %s161
    %p168 = scmp.eq.s32.totalorder %s20, 1
    %p169 = por %p167, %p168
    %p170 = scmp.ne.s32.totalorder %s161, %s162
    %p171 = scmp.eq.s32.totalorder %s20, 0
    %p172 = por %p170, %p171
    %p173 = scmp.ne.s32.totalorder %s161, %s162
    %p174 = scmp.eq.s32.totalorder %s21, 1
    %p175 = por %p173, %p174
    %p177 = scmp.ne.s32.totalorder %s162, %s176
    %p178 = scmp.eq.s32.totalorder %s21, 0
    %p179 = por %p177, %p178
    %s181 = sadd.s32 %s180, 1
    %p184 = scmp.eq.s32.totalorder %s15, 1
    %p185 = scmp.ne.s32.totalorder %s180, %s182
    %p186 = scmp.eq.s32.totalorder %s15, 0
    %p187 = por %p185, %p186
    %p188 = scmp.ne.s32.totalorder %s180, %s182
    %p189 = scmp.eq.s32.totalorder %s20, 1
    %p190 = por %p188, %p189
    %p191 = scmp.ne.s32.totalorder %s182, %s183
    %p192 = scmp.eq.s32.totalorder %s20, 0
    %p193 = por %p191, %p192
    %p194 = scmp.ne.s32.totalorder %s182, %s183
    %p195 = scmp.eq.s32.totalorder %s21, 1
    %p196 = por %p194, %p195
    %p198 = scmp.ne.s32.totalorder %s183, %s197
    %p199 = scmp.eq.s32.totalorder %s21, 0
    %p200 = por %p198, %p199
    %s202 = sadd.s32 %s201, 1
    %p205 = scmp.eq.s32.totalorder %s15, 1
    %p206 = scmp.ne.s32.totalorder %s201, %s203
    %p207 = scmp.eq.s32.totalorder %s15, 0
    %p208 = por %p206, %p207
    %p209 = scmp.ne.s32.totalorder %s201, %s203
    %p210 = scmp.eq.s32.totalorder %s20, 1
    %p211 = por %p209, %p210
    %p212 = scmp.ne.s32.totalorder %s203, %s204
    %p213 = scmp.eq.s32.totalorder %s20, 0
    %p214 = por %p212, %p213
    %p215 = scmp.ne.s32.totalorder %s203, %s204
    %p216 = scmp.eq.s32.totalorder %s21, 1
    %p217 = por %p215, %p216
    %p219 = scmp.ne.s32.totalorder %s204, %s218
    %p220 = scmp.eq.s32.totalorder %s21, 0
    %p221 = por %p219, %p220
    %s222 = ssub.s32 %s15, %s22
    %p223 = scmp.eq.s32.totalorder %s222, 0
    %s225 = sadd.s32 %s224, 1
    %s226 = scalar_select %p223, %s224, %s225
    %p229 = pneg %p223
    %p230 = scmp.eq.s32.totalorder %s15, 1
    %p231 = por %p229, %p230
    %p232 = scmp.ne.s32.totalorder %s224, %s227
    %p233 = scmp.eq.s32.totalorder %s15, 0
    %p234 = por %p232, %p233
    %p235 = scmp.ne.s32.totalorder %s224, %s227
    %p236 = scmp.eq.s32.totalorder %s20, 1
    %p237 = por %p235, %p236
    %p238 = scmp.ne.s32.totalorder %s227, %s228
    %p239 = scmp.eq.s32.totalorder %s20, 0
    %p240 = por %p238, %p239
    %p241 = scmp.ne.s32.totalorder %s227, %s228
    %p242 = scmp.eq.s32.totalorder %s21, 1
    %p243 = por %p241, %p242
    %p245 = scmp.ne.s32.totalorder %s228, %s244
    %p246 = scmp.eq.s32.totalorder %s21, 0
    %p247 = por %p245, %p246
    %p248 = scmp.le.s32.totalorder 1, %s15
    %p249 = scmp.lt.s32.totalorder %s15, 3
    %p250 = pnand %p248, %p249
    %p251 = pneg %p250
    // Predicated region
    $region9: #{ddpm_deformer_forward.1} parent=5 // pred_check
      _
    $region10: #{ddpm_deformer_forward.1} parent=5 // pred_check_branch
      %253 = sbr.rel (%p250) target = $region12
    $region11: #{ddpm_deformer_forward.1} parent=5 // pred_region
      %s254 = ssub.s32 %s15, 1
      // Predicated region
      $region13: #{ddpm_deformer_forward.1} parent=11 // pred_check
        %p255 = pneg %p88
      $region14: #{ddpm_deformer_forward.1} parent=11 // pred_check_branch
        %257 = sbr.rel (%p255) target = $region16
      $region15: #{ddpm_deformer_forward.1} parent=11 // pred_region
        _
      $region16: #{ddpm_deformer_forward.1} parent=11 // pred_fallthru
        _
      // Predicated region
      $region17: #{ddpm_deformer_forward.1} parent=11 // pred_check
        %p258 = pneg %p109
      $region18: #{ddpm_deformer_forward.1} parent=11 // pred_check_branch
        %260 = sbr.rel (%p258) target = $region20
      $region19: #{ddpm_deformer_forward.1} parent=11 // pred_region
        _
      $region20: #{ddpm_deformer_forward.1} parent=11 // pred_fallthru
        _
      // Predicated region
      $region21: #{ddpm_deformer_forward.1} parent=11 // pred_check
        %p261 = pneg %p130
      $region22: #{ddpm_deformer_forward.1} parent=11 // pred_check_branch
        %263 = sbr.rel (%p261) target = $region24
      $region23: #{ddpm_deformer_forward.1} parent=11 // pred_region
        _
      $region24: #{ddpm_deformer_forward.1} parent=11 // pred_fallthru
        _
      // Predicated region
      $region25: #{ddpm_deformer_forward.1} parent=11 // pred_check
        %p264 = pneg %p151
      $region26: #{ddpm_deformer_forward.1} parent=11 // pred_check_branch
        %266 = sbr.rel (%p264) target = $region28
      $region27: #{ddpm_deformer_forward.1} parent=11 // pred_region
        _
      $region28: #{ddpm_deformer_forward.1} parent=11 // pred_fallthru
        _
      // Predicated region
      $region29: #{ddpm_deformer_forward.1} parent=11 // pred_check
        %p267 = pneg %p172
      $region30: #{ddpm_deformer_forward.1} parent=11 // pred_check_branch
        %269 = sbr.rel (%p267) target = $region32
      $region31: #{ddpm_deformer_forward.1} parent=11 // pred_region
        _
      $region32: #{ddpm_deformer_forward.1} parent=11 // pred_fallthru
        _
      // Predicated region
      $region33: #{ddpm_deformer_forward.1} parent=11 // pred_check
        %p270 = pneg %p193
      $region34: #{ddpm_deformer_forward.1} parent=11 // pred_check_branch
        %272 = sbr.rel (%p270) target = $region36
      $region35: #{ddpm_deformer_forward.1} parent=11 // pred_region
        _
      $region36: #{ddpm_deformer_forward.1} parent=11 // pred_fallthru
        _
      // Predicated region
      $region37: #{ddpm_deformer_forward.1} parent=11 // pred_check
        %p273 = pneg %p214
      $region38: #{ddpm_deformer_forward.1} parent=11 // pred_check_branch
        %275 = sbr.rel (%p273) target = $region40
      $region39: #{ddpm_deformer_forward.1} parent=11 // pred_region
        _
      $region40: #{ddpm_deformer_forward.1} parent=11 // pred_fallthru
        _
    $region12: #{ddpm_deformer_forward.1} parent=5 // pred_fallthru
      _
    %p276 = scmp.lt.s32.totalorder %s15, 2
    // Predicated region
    $region41: #{ddpm_deformer_forward.1} parent=5 // pred_check
      %p277 = pneg %p276
    $region42: #{ddpm_deformer_forward.1} parent=5 // pred_check_branch
      %279 = sbr.rel (%p277) target = $region44
    $region43: #{ddpm_deformer_forward.1} parent=5 // pred_region
      // Predicated region
      $region45: #{ddpm_deformer_forward.1} parent=43 // pred_check
        %p280 = pneg %p35
      $region46: #{ddpm_deformer_forward.1} parent=43 // pred_check_branch
        %282 = sbr.rel (%p280) target = $region48
      $region47: #{ddpm_deformer_forward.1} parent=43 // pred_region
        %s283 = smul.u32 32, %s15
        %p284 = scmp.lt.s32.totalorder %s283, 63
        %s285 = scalar_select %p284, %s283, 63
        %s286 = smul.addr %s285, 8
        %s287 = scalar_lea.vmem %s0, %s286
        %s288 = smul.u32 32, %s15
      $region48: #{ddpm_deformer_forward.1} parent=43 // pred_fallthru
        _
      // Predicated region
      $region49: #{ddpm_deformer_forward.1} parent=43 // pred_check
        %p289 = pneg %p61
      $region50: #{ddpm_deformer_forward.1} parent=43 // pred_check_branch
        %291 = sbr.rel (%p289) target = $region52
      $region51: #{ddpm_deformer_forward.1} parent=43 // pred_region
        %s292 = smul.u32 32, %s15
        %p293 = scmp.lt.s32.totalorder %s292, 63
        %s294 = scalar_select %p293, %s292, 63
        %s295 = smul.addr %s294, 2
        %s296 = smul.addr %s295, 4
        %s297 = scalar_lea.vmem %s1, %s296
        %s298 = smul.u32 32, %s15
      $region52: #{ddpm_deformer_forward.1} parent=43 // pred_fallthru
        _
    $region44: #{ddpm_deformer_forward.1} parent=5 // pred_fallthru
      _
    %p299 = scmp.le.s32.totalorder 1, %s15
    %p300 = scmp.lt.s32.totalorder %s15, 3
    %p301 = pnand %p299, %p300
    %p302 = pneg %p301
    // Predicated region
    $region53: #{ddpm_deformer_forward.1} parent=5 // pred_check
      _
    $region54: #{ddpm_deformer_forward.1} parent=5 // pred_check_branch
      %304 = sbr.rel (%p301) target = $region56
    $region55: #{ddpm_deformer_forward.1} parent=5 // pred_region
      %s305 = ssub.s32 %s15, 1
      %s306 = smul.u32 32, %s20
      %p307 = scmp.lt.s32.totalorder %s306, 63
      %s308 = scalar_select %p307, %s306, 63
      %s309 = smul.addr %s308, 8
      %s310 = scalar_lea.vmem %s0, %s309
      %p311 = pneg %p41
      %p312 = pneg %p38
      %s313 = smul.u32 32, %s20
      %p314 = scmp.lt.s32.totalorder %s313, 63
      %s315 = scalar_select %p314, %s313, 63
      %s316 = smul.addr %s315, 2
      %s317 = smul.addr %s316, 4
      %s318 = scalar_lea.vmem %s1, %s317
      %p319 = pneg %p67
      %p320 = pneg %p64
      %p321 = pneg %p88
      %p322 = pneg %p85
      %p323 = pneg %p109
      %p324 = pneg %p106
      %p325 = pneg %p130
      %p326 = pneg %p127
      %p327 = pneg %p151
      %p328 = pneg %p148
      %p329 = pneg %p172
      %p330 = pneg %p169
      %p331 = pneg %p193
      %p332 = pneg %p190
      %p333 = pneg %p214
      %p334 = pneg %p211
      %p335 = pneg %p240
      %p336 = pneg %p237
      %s337 = smul.u32 32, %s20
      %p338 = scmp.lt.s32.totalorder %s337, 63
      %s339 = scalar_select %p338, %s337, 63
      %s340 = smul.addr %s339, 8
      %s341 = scalar_lea.vmem %s9, %s340
      %s342 = smul.u32 32, %s20
      %p343 = scmp.lt.s32.totalorder %s342, 63
      %s344 = scalar_select %p343, %s342, 63
      %s345 = smul.addr %s344, 8
      %s346 = scalar_lea.vmem %s0, %s345
      %s347 = smul.u32 32, %s20
      %s348 = smul.u32 32, %s20
      %p349 = scmp.lt.s32.totalorder %s348, 63
      %s350 = scalar_select %p349, %s348, 63
      %s351 = smul.addr %s350, 2
      %s352 = smul.addr %s351, 4
      %s353 = scalar_lea.vmem %s1, %s352
      %s354 = smul.u32 32, %s20
      %s355 = smul.u32 32, %s20
      %p356 = scmp.lt.s32.totalorder %s355, 63
      %s357 = scalar_select %p356, %s355, 63
      %s358 = smul.addr %s357, 8
      %s359 = scalar_lea.vmem %s9, %s358
      %s360 = smul.u32 32, %s20
      %v361 = vld [vmem:[%s8] sm:$0xff]
      %v362 = vld [vmem:[%s353] sm:$0xf]
      %v363 = vld [vmem:[%s353 + $0x8] sm:$0xf]
      %v364 = vld [vmem:[%s353 + $0x10] sm:$0xf]
      %v365 = vld [vmem:[%s353 + $0x18] sm:$0xf]
      %v366 = vld [vmem:[%s353 + $0x20] sm:$0xf]
      %v367 = vld [vmem:[%s353 + $0x28] sm:$0xf]
      %v368 = vld [vmem:[%s353 + $0x30] sm:$0xf]
      %v369 = vld [vmem:[%s353 + $0x38] sm:$0xf]
      %v370 = vld [vmem:[%s353 + $0x40] sm:$0xf]
      %v371 = vld [vmem:[%s353 + $0x48] sm:$0xf]
      %v372 = vld [vmem:[%s353 + $0x50] sm:$0xf]
      %v373 = vld [vmem:[%s353 + $0x58] sm:$0xf]
      %v374 = vld [vmem:[%s353 + $0x60] sm:$0xf]
      %v375 = vld [vmem:[%s353 + $0x68] sm:$0xf]
      %v376 = vld [vmem:[%s353 + $0x70] sm:$0xf]
      %v377 = vld [vmem:[%s353 + $0x78] sm:$0xf]
      %v378 = vld [vmem:[%s353 + $0x80] sm:$0xf]
      %v379 = vld [vmem:[%s353 + $0x88] sm:$0xf]
      %v380 = vld [vmem:[%s353 + $0x90] sm:$0xf]
      %v381 = vld [vmem:[%s353 + $0x98] sm:$0xf]
      %v382 = vld [vmem:[%s353 + $0xa0] sm:$0xf]
      %v383 = vld [vmem:[%s353 + $0xa8] sm:$0xf]
      %v384 = vld [vmem:[%s353 + $0xb0] sm:$0xf]
      %v385 = vld [vmem:[%s353 + $0xb8] sm:$0xf]
      %v386 = vld [vmem:[%s353 + $0xc0] sm:$0xf]
      %v387 = vld [vmem:[%s353 + $0xc8] sm:$0xf]
      %v388 = vld [vmem:[%s353 + $0xd0] sm:$0xf]
      %v389 = vld [vmem:[%s353 + $0xd8] sm:$0xf]
      %v390 = vld [vmem:[%s353 + $0xe0] sm:$0xf]
      %v391 = vld [vmem:[%s353 + $0xe8] sm:$0xf]
      %v392 = vld [vmem:[%s353 + $0xf0] sm:$0xf]
      %v393 = vld [vmem:[%s353 + $0xf8] sm:$0xf]
      %v394 = vld [vmem:[%s353 + $0x4] sm:$0xf]
      %v395 = vld [vmem:[%s353 + $0xc] sm:$0xf]
      %v396 = vld [vmem:[%s353 + $0x14] sm:$0xf]
      %v397 = vld [vmem:[%s353 + $0x1c] sm:$0xf]
      %v398 = vld [vmem:[%s353 + $0x24] sm:$0xf]
      %v399 = vld [vmem:[%s353 + $0x2c] sm:$0xf]
      %v400 = vld [vmem:[%s353 + $0x34] sm:$0xf]
      %v401 = vld [vmem:[%s353 + $0x3c] sm:$0xf]
      %v402 = vld [vmem:[%s353 + $0x44] sm:$0xf]
      %v403 = vld [vmem:[%s353 + $0x4c] sm:$0xf]
      %v404 = vld [vmem:[%s353 + $0x54] sm:$0xf]
      %v405 = vld [vmem:[%s353 + $0x5c] sm:$0xf]
      %v406 = vld [vmem:[%s353 + $0x64] sm:$0xf]
      %v407 = vld [vmem:[%s353 + $0x6c] sm:$0xf]
      %v408 = vld [vmem:[%s353 + $0x74] sm:$0xf]
      %v409 = vld [vmem:[%s353 + $0x7c] sm:$0xf]
      %v410 = vld [vmem:[%s353 + $0x84] sm:$0xf]
      %v411 = vld [vmem:[%s353 + $0x8c] sm:$0xf]
      %v412 = vld [vmem:[%s353 + $0x94] sm:$0xf]
      %v413 = vld [vmem:[%s353 + $0x9c] sm:$0xf]
      %v414 = vld [vmem:[%s353 + $0xa4] sm:$0xf]
      %v415 = vld [vmem:[%s353 + $0xac] sm:$0xf]
      %v416 = vld [vmem:[%s353 + $0xb4] sm:$0xf]
      %v417 = vld [vmem:[%s353 + $0xbc] sm:$0xf]
      %v418 = vld [vmem:[%s353 + $0xc4] sm:$0xf]
      %v419 = vld [vmem:[%s353 + $0xcc] sm:$0xf]
      %v420 = vld [vmem:[%s353 + $0xd4] sm:$0xf]
      %v421 = vld [vmem:[%s353 + $0xdc] sm:$0xf]
      %v422 = vld [vmem:[%s353 + $0xe4] sm:$0xf]
      %v423 = vld [vmem:[%s353 + $0xec] sm:$0xf]
      %v424 = vld [vmem:[%s353 + $0xf4] sm:$0xf]
      %v425 = vld [vmem:[%s353 + $0xfc] sm:$0xf]
      %v426 = vld [vmem:[%s2] sm:$0xf]
      %v427 = vld [vmem:[%s2 + $0x4] sm:$0xf]
      %v428 = vld [vmem:[%s2 + $0x8] sm:$0xf]
      %v429 = vld [vmem:[%s2 + $0xc] sm:$0xf]
      %v430 = vld [vmem:[%s2 + $0x10] sm:$0xf]
      %v431 = vld [vmem:[%s2 + $0x14] sm:$0xf]
      %v432 = vld [vmem:[%s2 + $0x18] sm:$0xf]
      %v433 = vld [vmem:[%s2 + $0x1c] sm:$0xf]
      %v434 = vld [vmem:[%s2 + $0x20] sm:$0xf]
      %v435 = vld [vmem:[%s2 + $0x24] sm:$0xf]
      %v436 = vld [vmem:[%s2 + $0x28] sm:$0xf]
      %v437 = vld [vmem:[%s2 + $0x2c] sm:$0xf]
      %v438 = vld [vmem:[%s2 + $0x30] sm:$0xf]
      %v439 = vld [vmem:[%s2 + $0x34] sm:$0xf]
      %v440 = vld [vmem:[%s2 + $0x38] sm:$0xf]
      %v441 = vld [vmem:[%s2 + $0x3c] sm:$0xf]
      %v442 = vperm.slane %v361, 0
      %v475 = vunpack.c.l.b16 %v394
      %v476 = vunpack.c.l.b16 %v395
      %v477 = vunpack.c.l.b16 %v396
      %v478 = vunpack.c.l.b16 %v397
      %v479 = vunpack.c.l.b16 %v398
      %v480 = vunpack.c.l.b16 %v399
      %v481 = vunpack.c.l.b16 %v400
      %v482 = vunpack.c.l.b16 %v401
      %v483 = vunpack.c.l.b16 %v402
      %v484 = vunpack.c.l.b16 %v403
      %v485 = vunpack.c.l.b16 %v404
      %v486 = vunpack.c.l.b16 %v405
      %v487 = vunpack.c.l.b16 %v406
      %v488 = vunpack.c.l.b16 %v407
      %v489 = vunpack.c.l.b16 %v408
      %v490 = vunpack.c.l.b16 %v409
      %v491 = vunpack.c.l.b16 %v410
      %v492 = vunpack.c.l.b16 %v411
      %v493 = vunpack.c.l.b16 %v412
      %v494 = vunpack.c.l.b16 %v413
      %v495 = vunpack.c.l.b16 %v414
      %v496 = vunpack.c.l.b16 %v415
      %v497 = vunpack.c.l.b16 %v416
      %v498 = vunpack.c.l.b16 %v417
      %v499 = vunpack.c.l.b16 %v418
      %v500 = vunpack.c.l.b16 %v419
      %v501 = vunpack.c.l.b16 %v420
      %v502 = vunpack.c.l.b16 %v421
      %v503 = vunpack.c.l.b16 %v422
      %v504 = vunpack.c.l.b16 %v423
      %v505 = vunpack.c.l.b16 %v424
      %v506 = vunpack.c.l.b16 %v425
      %v507 = vpack.c.b16 %v476, %v475
      %v508 = vpack.c.b16 %v478, %v477
      %v509 = vpack.c.b16 %v480, %v479
      %v510 = vpack.c.b16 %v482, %v481
      %v511 = vpack.c.b16 %v484, %v483
      %v512 = vpack.c.b16 %v486, %v485
      %v513 = vpack.c.b16 %v488, %v487
      %v514 = vpack.c.b16 %v490, %v489
      %v515 = vpack.c.b16 %v492, %v491
      %v516 = vpack.c.b16 %v494, %v493
      %v517 = vpack.c.b16 %v496, %v495
      %v518 = vpack.c.b16 %v498, %v497
      %v519 = vpack.c.b16 %v500, %v499
      %v520 = vpack.c.b16 %v502, %v501
      %v521 = vpack.c.b16 %v504, %v503
      %v522 = vpack.c.b16 %v506, %v505
      %v555 = vunpack.c.l.b16 %v426
      %v556 = vunpack.c.l.b16 %v427
      %v557 = vunpack.c.l.b16 %v428
      %v558 = vunpack.c.l.b16 %v429
      %v559 = vunpack.c.l.b16 %v430
      %v560 = vunpack.c.l.b16 %v431
      %v561 = vunpack.c.l.b16 %v432
      %v562 = vunpack.c.l.b16 %v433
      %v563 = vunpack.c.l.b16 %v434
      %v564 = vunpack.c.l.b16 %v435
      %v565 = vunpack.c.l.b16 %v436
      %v566 = vunpack.c.l.b16 %v437
      %v567 = vunpack.c.l.b16 %v438
      %v568 = vunpack.c.l.b16 %v439
      %v569 = vunpack.c.l.b16 %v440
      %v570 = vunpack.c.l.b16 %v441
      %v571 = vpack.c.b16 %v556, %v555
      %v572 = vpack.c.b16 %v558, %v557
      %v573 = vpack.c.b16 %v560, %v559
      %v574 = vpack.c.b16 %v562, %v561
      %v575 = vpack.c.b16 %v564, %v563
      %v576 = vpack.c.b16 %v566, %v565
      %v577 = vpack.c.b16 %v568, %v567
      %v578 = vpack.c.b16 %v570, %v569
      %587 = vmatpush.bf16.msra.mxu0 %v578
      %588 = vmatpush.bf16.msra.mxu0 %v577
      %589 = vmatpush.bf16.msra.mxu0 %v576
      %590 = vmatpush.bf16.msra.mxu0 %v575
      %591 = vmatpush.bf16.msra.mxu0 %v574
      %592 = vmatpush.bf16.msra.mxu0 %v573
      %593 = vmatpush.bf16.msra.mxu0 %v572
      %594 = vmatpush.bf16.msra.mxu0 %v571
      %595 = vmatmul.bf16.gmra.mxu0 %v507
      %v596 = vpop.f32.mrf.mxu0
      %v597 = vadd.f32 %v442, %v596
      %v598 = vpop.f32.mrf.mxu0
      %v599 = vadd.f32 %v442, %v598
      %600 = vmatmul.bf16.gmra.mxu0 %v508
      %v601 = vpop.f32.mrf.mxu0
      %v602 = vadd.f32 %v442, %v601
      %v603 = vpop.f32.mrf.mxu0
      %v604 = vadd.f32 %v442, %v603
      %605 = vmatmul.bf16.gmra.mxu0 %v509
      %v606 = vpop.f32.mrf.mxu0
      %v607 = vadd.f32 %v442, %v606
      %v608 = vpop.f32.mrf.mxu0
      %v609 = vadd.f32 %v442, %v608
      %610 = vmatmul.bf16.gmra.mxu0 %v510
      %v611 = vpop.f32.mrf.mxu0
      %v612 = vadd.f32 %v442, %v611
      %v613 = vpop.f32.mrf.mxu0
      %v614 = vadd.f32 %v442, %v613
      %615 = vmatmul.bf16.gmra.mxu0 %v511
      %v616 = vpop.f32.mrf.mxu0
      %v617 = vadd.f32 %v442, %v616
      %v618 = vpop.f32.mrf.mxu0
      %v619 = vadd.f32 %v442, %v618
      %620 = vmatmul.bf16.gmra.mxu0 %v512
      %v621 = vpop.f32.mrf.mxu0
      %v622 = vadd.f32 %v442, %v621
      %v623 = vpop.f32.mrf.mxu0
      %v624 = vadd.f32 %v442, %v623
      %625 = vmatmul.bf16.gmra.mxu0 %v513
      %v626 = vpop.f32.mrf.mxu0
      %v627 = vadd.f32 %v442, %v626
      %v628 = vpop.f32.mrf.mxu0
      %v629 = vadd.f32 %v442, %v628
      %630 = vmatmul.bf16.gmra.mxu0 %v514
      %v631 = vpop.f32.mrf.mxu0
      %v632 = vadd.f32 %v442, %v631
      %v633 = vpop.f32.mrf.mxu0
      %v634 = vadd.f32 %v442, %v633
      %635 = vmatmul.bf16.gmra.mxu0 %v515
      %v636 = vpop.f32.mrf.mxu0
      %v637 = vadd.f32 %v442, %v636
      %v638 = vpop.f32.mrf.mxu0
      %v639 = vadd.f32 %v442, %v638
      %640 = vmatmul.bf16.gmra.mxu0 %v516
      %v641 = vpop.f32.mrf.mxu0
      %v642 = vadd.f32 %v442, %v641
      %v643 = vpop.f32.mrf.mxu0
      %v644 = vadd.f32 %v442, %v643
      %645 = vmatmul.bf16.gmra.mxu0 %v517
      %v646 = vpop.f32.mrf.mxu0
      %v647 = vadd.f32 %v442, %v646
      %v648 = vpop.f32.mrf.mxu0
      %v649 = vadd.f32 %v442, %v648
      %650 = vmatmul.bf16.gmra.mxu0 %v518
      %v651 = vpop.f32.mrf.mxu0
      %v652 = vadd.f32 %v442, %v651
      %v653 = vpop.f32.mrf.mxu0
      %v654 = vadd.f32 %v442, %v653
      %655 = vmatmul.bf16.gmra.mxu0 %v519
      %v656 = vpop.f32.mrf.mxu0
      %v657 = vadd.f32 %v442, %v656
      %v658 = vpop.f32.mrf.mxu0
      %v659 = vadd.f32 %v442, %v658
      %660 = vmatmul.bf16.gmra.mxu0 %v520
      %v661 = vpop.f32.mrf.mxu0
      %v662 = vadd.f32 %v442, %v661
      %v663 = vpop.f32.mrf.mxu0
      %v664 = vadd.f32 %v442, %v663
      %665 = vmatmul.bf16.gmra.mxu0 %v521
      %v666 = vpop.f32.mrf.mxu0
      %v667 = vadd.f32 %v442, %v666
      %v668 = vpop.f32.mrf.mxu0
      %v669 = vadd.f32 %v442, %v668
      %670 = vmatmul.bf16.gmra.mxu0 %v522
      %v671 = vpop.f32.mrf.mxu0
      %v672 = vadd.f32 %v442, %v671
      %v673 = vpop.f32.mrf.mxu0
      %v674 = vadd.f32 %v442, %v673
      %675 = vdwg.mxu0
      %v676 = vmax.f32 %v597, 0.0
      %v677 = vmax.f32 %v599, 0.0
      %v678 = vmax.f32 %v602, 0.0
      %v679 = vmax.f32 %v604, 0.0
      %v680 = vmax.f32 %v607, 0.0
      %v681 = vmax.f32 %v609, 0.0
      %v682 = vmax.f32 %v612, 0.0
      %v683 = vmax.f32 %v614, 0.0
      %v684 = vmax.f32 %v617, 0.0
      %v685 = vmax.f32 %v619, 0.0
      %v686 = vmax.f32 %v622, 0.0
      %v687 = vmax.f32 %v624, 0.0
      %v688 = vmax.f32 %v627, 0.0
      %v689 = vmax.f32 %v629, 0.0
      %v690 = vmax.f32 %v632, 0.0
      %v691 = vmax.f32 %v634, 0.0
      %v692 = vmax.f32 %v637, 0.0
      %v693 = vmax.f32 %v639, 0.0
      %v694 = vmax.f32 %v642, 0.0
      %v695 = vmax.f32 %v644, 0.0
      %v696 = vmax.f32 %v647, 0.0
      %v697 = vmax.f32 %v649, 0.0
      %v698 = vmax.f32 %v652, 0.0
      %v699 = vmax.f32 %v654, 0.0
      %v700 = vmax.f32 %v657, 0.0
      %v701 = vmax.f32 %v659, 0.0
      %v702 = vmax.f32 %v662, 0.0
      %v703 = vmax.f32 %v664, 0.0
      %v704 = vmax.f32 %v667, 0.0
      %v705 = vmax.f32 %v669, 0.0
      %v706 = vmax.f32 %v672, 0.0
      %v707 = vmax.f32 %v674, 0.0
      %v708 = vld [vmem:[%s3] sm:$0xf]
      %v709 = vld [vmem:[%s3 + $0x4] sm:$0xf]
      %v710 = vld [vmem:[%s3 + $0x8] sm:$0xf]
      %v711 = vld [vmem:[%s3 + $0xc] sm:$0xf]
      %v712 = vld [vmem:[%s3 + $0x10] sm:$0xf]
      %v713 = vld [vmem:[%s3 + $0x14] sm:$0xf]
      %v714 = vld [vmem:[%s3 + $0x18] sm:$0xf]
      %v715 = vld [vmem:[%s3 + $0x1c] sm:$0xf]
      %v716 = vld [vmem:[%s3 + $0x20] sm:$0xf]
      %v717 = vld [vmem:[%s3 + $0x24] sm:$0xf]
      %v718 = vld [vmem:[%s3 + $0x28] sm:$0xf]
      %v719 = vld [vmem:[%s3 + $0x2c] sm:$0xf]
      %v720 = vld [vmem:[%s3 + $0x30] sm:$0xf]
      %v721 = vld [vmem:[%s3 + $0x34] sm:$0xf]
      %v722 = vld [vmem:[%s3 + $0x38] sm:$0xf]
      %v723 = vld [vmem:[%s3 + $0x3c] sm:$0xf]
      %v724 = vpack.c.bf16 %v677, %v676
      %v725 = vpack.c.bf16 %v679, %v678
      %v726 = vpack.c.bf16 %v681, %v680
      %v727 = vpack.c.bf16 %v683, %v682
      %v728 = vpack.c.bf16 %v685, %v684
      %v729 = vpack.c.bf16 %v687, %v686
      %v730 = vpack.c.bf16 %v689, %v688
      %v731 = vpack.c.bf16 %v691, %v690
      %v732 = vpack.c.bf16 %v693, %v692
      %v733 = vpack.c.bf16 %v695, %v694
      %v734 = vpack.c.bf16 %v697, %v696
      %v735 = vpack.c.bf16 %v699, %v698
      %v736 = vpack.c.bf16 %v701, %v700
      %v737 = vpack.c.bf16 %v703, %v702
      %v738 = vpack.c.bf16 %v705, %v704
      %v739 = vpack.c.bf16 %v707, %v706
      %v740 = vld [vmem:[%s4] sm:$0xf]
      %v741 = vld [vmem:[%s4 + $0x4] sm:$0xf]
      %v742 = vld [vmem:[%s4 + $0x8] sm:$0xf]
      %v743 = vld [vmem:[%s4 + $0xc] sm:$0xf]
      %v744 = vld [vmem:[%s4 + $0x10] sm:$0xf]
      %v745 = vld [vmem:[%s4 + $0x14] sm:$0xf]
      %v746 = vld [vmem:[%s4 + $0x18] sm:$0xf]
      %v747 = vld [vmem:[%s4 + $0x1c] sm:$0xf]
      %v748 = vld [vmem:[%s4 + $0x20] sm:$0xf]
      %v749 = vld [vmem:[%s4 + $0x24] sm:$0xf]
      %v750 = vld [vmem:[%s4 + $0x28] sm:$0xf]
      %v751 = vld [vmem:[%s4 + $0x2c] sm:$0xf]
      %v752 = vld [vmem:[%s4 + $0x30] sm:$0xf]
      %v753 = vld [vmem:[%s4 + $0x34] sm:$0xf]
      %v754 = vld [vmem:[%s4 + $0x38] sm:$0xf]
      %v755 = vld [vmem:[%s4 + $0x3c] sm:$0xf]
      %v772 = vunpack.c.l.b16 %v740
      %v773 = vunpack.c.l.b16 %v741
      %v774 = vunpack.c.l.b16 %v742
      %v775 = vunpack.c.l.b16 %v743
      %v776 = vunpack.c.l.b16 %v744
      %v777 = vunpack.c.l.b16 %v745
      %v778 = vunpack.c.l.b16 %v746
      %v779 = vunpack.c.l.b16 %v747
      %v780 = vunpack.c.l.b16 %v748
      %v781 = vunpack.c.l.b16 %v749
      %v782 = vunpack.c.l.b16 %v750
      %v783 = vunpack.c.l.b16 %v751
      %v784 = vunpack.c.l.b16 %v752
      %v785 = vunpack.c.l.b16 %v753
      %v786 = vunpack.c.l.b16 %v754
      %v787 = vunpack.c.l.b16 %v755
      %v788 = vpack.c.b16 %v773, %v772
      %v789 = vpack.c.b16 %v775, %v774
      %v790 = vpack.c.b16 %v777, %v776
      %v791 = vpack.c.b16 %v779, %v778
      %v792 = vpack.c.b16 %v781, %v780
      %v793 = vpack.c.b16 %v783, %v782
      %v794 = vpack.c.b16 %v785, %v784
      %v795 = vpack.c.b16 %v787, %v786
      %804 = vmatpush.bf16.msra.mxu0 %v795
      %805 = vmatpush.bf16.msra.mxu0 %v794
      %806 = vmatpush.bf16.msra.mxu0 %v793
      %807 = vmatpush.bf16.msra.mxu0 %v792
      %808 = vmatpush.bf16.msra.mxu0 %v791
      %809 = vmatpush.bf16.msra.mxu0 %v790
      %810 = vmatpush.bf16.msra.mxu0 %v789
      %811 = vmatpush.bf16.msra.mxu0 %v788
      %812 = vmatmul.bf16.gmra.mxu0 %v724
      %v813 = vpop.f32.mrf.mxu0
      %v814 = vadd.f32 0.0, %v813
      %v815 = vpop.f32.mrf.mxu0
      %v816 = vadd.f32 0.0, %v815
      %817 = vmatmul.bf16.gmra.mxu0 %v725
      %v818 = vpop.f32.mrf.mxu0
      %v819 = vadd.f32 0.0, %v818
      %v820 = vpop.f32.mrf.mxu0
      %v821 = vadd.f32 0.0, %v820
      %822 = vmatmul.bf16.gmra.mxu0 %v726
      %v823 = vpop.f32.mrf.mxu0
      %v824 = vadd.f32 0.0, %v823
      %v825 = vpop.f32.mrf.mxu0
      %v826 = vadd.f32 0.0, %v825
      %827 = vmatmul.bf16.gmra.mxu0 %v727
      %v828 = vpop.f32.mrf.mxu0
      %v829 = vadd.f32 0.0, %v828
      %v830 = vpop.f32.mrf.mxu0
      %v831 = vadd.f32 0.0, %v830
      %832 = vmatmul.bf16.gmra.mxu0 %v728
      %v833 = vpop.f32.mrf.mxu0
      %v834 = vadd.f32 0.0, %v833
      %v835 = vpop.f32.mrf.mxu0
      %v836 = vadd.f32 0.0, %v835
      %837 = vmatmul.bf16.gmra.mxu0 %v729
      %v838 = vpop.f32.mrf.mxu0
      %v839 = vadd.f32 0.0, %v838
      %v840 = vpop.f32.mrf.mxu0
      %v841 = vadd.f32 0.0, %v840
      %842 = vmatmul.bf16.gmra.mxu0 %v730
      %v843 = vpop.f32.mrf.mxu0
      %v844 = vadd.f32 0.0, %v843
      %v845 = vpop.f32.mrf.mxu0
      %v846 = vadd.f32 0.0, %v845
      %847 = vmatmul.bf16.gmra.mxu0 %v731
      %v848 = vpop.f32.mrf.mxu0
      %v849 = vadd.f32 0.0, %v848
      %v850 = vpop.f32.mrf.mxu0
      %v851 = vadd.f32 0.0, %v850
      %852 = vmatmul.bf16.gmra.mxu0 %v732
      %v853 = vpop.f32.mrf.mxu0
      %v854 = vadd.f32 0.0, %v853
      %v855 = vpop.f32.mrf.mxu0
      %v856 = vadd.f32 0.0, %v855
      %857 = vmatmul.bf16.gmra.mxu0 %v733
      %v858 = vpop.f32.mrf.mxu0
      %v859 = vadd.f32 0.0, %v858
      %v860 = vpop.f32.mrf.mxu0
      %v861 = vadd.f32 0.0, %v860
      %862 = vmatmul.bf16.gmra.mxu0 %v734
      %v863 = vpop.f32.mrf.mxu0
      %v864 = vadd.f32 0.0, %v863
      %v865 = vpop.f32.mrf.mxu0
      %v866 = vadd.f32 0.0, %v865
      %867 = vmatmul.bf16.gmra.mxu0 %v735
      %v868 = vpop.f32.mrf.mxu0
      %v869 = vadd.f32 0.0, %v868
      %v870 = vpop.f32.mrf.mxu0
      %v871 = vadd.f32 0.0, %v870
      %872 = vmatmul.bf16.gmra.mxu0 %v736
      %v873 = vpop.f32.mrf.mxu0
      %v874 = vadd.f32 0.0, %v873
      %v875 = vpop.f32.mrf.mxu0
      %v876 = vadd.f32 0.0, %v875
      %877 = vmatmul.bf16.gmra.mxu0 %v737
      %v878 = vpop.f32.mrf.mxu0
      %v879 = vadd.f32 0.0, %v878
      %v880 = vpop.f32.mrf.mxu0
      %v881 = vadd.f32 0.0, %v880
      %882 = vmatmul.bf16.gmra.mxu0 %v738
      %v883 = vpop.f32.mrf.mxu0
      %v884 = vadd.f32 0.0, %v883
      %v885 = vpop.f32.mrf.mxu0
      %v886 = vadd.f32 0.0, %v885
      %887 = vmatmul.bf16.gmra.mxu0 %v739
      %v888 = vpop.f32.mrf.mxu0
      %v889 = vadd.f32 0.0, %v888
      %v890 = vpop.f32.mrf.mxu0
      %v891 = vadd.f32 0.0, %v890
      %892 = vdwg.mxu0
      %v925 = vunpack.c.l.b16 %v362
      %v926 = vunpack.c.l.b16 %v363
      %v927 = vunpack.c.l.b16 %v364
      %v928 = vunpack.c.l.b16 %v365
      %v929 = vunpack.c.l.b16 %v366
      %v930 = vunpack.c.l.b16 %v367
      %v931 = vunpack.c.l.b16 %v368
      %v932 = vunpack.c.l.b16 %v369
      %v933 = vunpack.c.l.b16 %v370
      %v934 = vunpack.c.l.b16 %v371
      %v935 = vunpack.c.l.b16 %v372
      %v936 = vunpack.c.l.b16 %v373
      %v937 = vunpack.c.l.b16 %v374
      %v938 = vunpack.c.l.b16 %v375
      %v939 = vunpack.c.l.b16 %v376
      %v940 = vunpack.c.l.b16 %v377
      %v941 = vunpack.c.l.b16 %v378
      %v942 = vunpack.c.l.b16 %v379
      %v943 = vunpack.c.l.b16 %v380
      %v944 = vunpack.c.l.b16 %v381
      %v945 = vunpack.c.l.b16 %v382
      %v946 = vunpack.c.l.b16 %v383
      %v947 = vunpack.c.l.b16 %v384
      %v948 = vunpack.c.l.b16 %v385
      %v949 = vunpack.c.l.b16 %v386
      %v950 = vunpack.c.l.b16 %v387
      %v951 = vunpack.c.l.b16 %v388
      %v952 = vunpack.c.l.b16 %v389
      %v953 = vunpack.c.l.b16 %v390
      %v954 = vunpack.c.l.b16 %v391
      %v955 = vunpack.c.l.b16 %v392
      %v956 = vunpack.c.l.b16 %v393
      %v957 = vpack.c.b16 %v926, %v925
      %v958 = vpack.c.b16 %v928, %v927
      %v959 = vpack.c.b16 %v930, %v929
      %v960 = vpack.c.b16 %v932, %v931
      %v961 = vpack.c.b16 %v934, %v933
      %v962 = vpack.c.b16 %v936, %v935
      %v963 = vpack.c.b16 %v938, %v937
      %v964 = vpack.c.b16 %v940, %v939
      %v965 = vpack.c.b16 %v942, %v941
      %v966 = vpack.c.b16 %v944, %v943
      %v967 = vpack.c.b16 %v946, %v945
      %v968 = vpack.c.b16 %v948, %v947
      %v969 = vpack.c.b16 %v950, %v949
      %v970 = vpack.c.b16 %v952, %v951
      %v971 = vpack.c.b16 %v954, %v953
      %v972 = vpack.c.b16 %v956, %v955
      %v1005 = vunpack.c.l.b16 %v708
      %v1006 = vunpack.c.l.b16 %v709
      %v1007 = vunpack.c.l.b16 %v710
      %v1008 = vunpack.c.l.b16 %v711
      %v1009 = vunpack.c.l.b16 %v712
      %v1010 = vunpack.c.l.b16 %v713
      %v1011 = vunpack.c.l.b16 %v714
      %v1012 = vunpack.c.l.b16 %v715
      %v1013 = vunpack.c.l.b16 %v716
      %v1014 = vunpack.c.l.b16 %v717
      %v1015 = vunpack.c.l.b16 %v718
      %v1016 = vunpack.c.l.b16 %v719
      %v1017 = vunpack.c.l.b16 %v720
      %v1018 = vunpack.c.l.b16 %v721
      %v1019 = vunpack.c.l.b16 %v722
      %v1020 = vunpack.c.l.b16 %v723
      %v1021 = vpack.c.b16 %v1006, %v1005
      %v1022 = vpack.c.b16 %v1008, %v1007
      %v1023 = vpack.c.b16 %v1010, %v1009
      %v1024 = vpack.c.b16 %v1012, %v1011
      %v1025 = vpack.c.b16 %v1014, %v1013
      %v1026 = vpack.c.b16 %v1016, %v1015
      %v1027 = vpack.c.b16 %v1018, %v1017
      %v1028 = vpack.c.b16 %v1020, %v1019
      %1037 = vmatpush.bf16.msra.mxu0 %v1028
      %1038 = vmatpush.bf16.msra.mxu0 %v1027
      %1039 = vmatpush.bf16.msra.mxu0 %v1026
      %1040 = vmatpush.bf16.msra.mxu0 %v1025
      %1041 = vmatpush.bf16.msra.mxu0 %v1024
      %1042 = vmatpush.bf16.msra.mxu0 %v1023
      %1043 = vmatpush.bf16.msra.mxu0 %v1022
      %1044 = vmatpush.bf16.msra.mxu0 %v1021
      %1045 = vmatmul.bf16.gmra.mxu0 %v957
      %v1046 = vpop.f32.mrf.mxu0
      %v1047 = vadd.f32 %v814, %v1046
      %v1048 = vpop.f32.mrf.mxu0
      %v1049 = vadd.f32 %v816, %v1048
      %1050 = vmatmul.bf16.gmra.mxu0 %v958
      %v1051 = vpop.f32.mrf.mxu0
      %v1052 = vadd.f32 %v819, %v1051
      %v1053 = vpop.f32.mrf.mxu0
      %v1054 = vadd.f32 %v821, %v1053
      %1055 = vmatmul.bf16.gmra.mxu0 %v959
      %v1056 = vpop.f32.mrf.mxu0
      %v1057 = vadd.f32 %v824, %v1056
      %v1058 = vpop.f32.mrf.mxu0
      %v1059 = vadd.f32 %v826, %v1058
      %1060 = vmatmul.bf16.gmra.mxu0 %v960
      %v1061 = vpop.f32.mrf.mxu0
      %v1062 = vadd.f32 %v829, %v1061
      %v1063 = vpop.f32.mrf.mxu0
      %v1064 = vadd.f32 %v831, %v1063
      %1065 = vmatmul.bf16.gmra.mxu0 %v961
      %v1066 = vpop.f32.mrf.mxu0
      %v1067 = vadd.f32 %v834, %v1066
      %v1068 = vpop.f32.mrf.mxu0
      %v1069 = vadd.f32 %v836, %v1068
      %1070 = vmatmul.bf16.gmra.mxu0 %v962
      %v1071 = vpop.f32.mrf.mxu0
      %v1072 = vadd.f32 %v839, %v1071
      %v1073 = vpop.f32.mrf.mxu0
      %v1074 = vadd.f32 %v841, %v1073
      %1075 = vmatmul.bf16.gmra.mxu0 %v963
      %v1076 = vpop.f32.mrf.mxu0
      %v1077 = vadd.f32 %v844, %v1076
      %v1078 = vpop.f32.mrf.mxu0
      %v1079 = vadd.f32 %v846, %v1078
      %1080 = vmatmul.bf16.gmra.mxu0 %v964
      %v1081 = vpop.f32.mrf.mxu0
      %v1082 = vadd.f32 %v849, %v1081
      %v1083 = vpop.f32.mrf.mxu0
      %v1084 = vadd.f32 %v851, %v1083
      %1085 = vmatmul.bf16.gmra.mxu0 %v965
      %v1086 = vpop.f32.mrf.mxu0
      %v1087 = vadd.f32 %v854, %v1086
      %v1088 = vpop.f32.mrf.mxu0
      %v1089 = vadd.f32 %v856, %v1088
      %1090 = vmatmul.bf16.gmra.mxu0 %v966
      %v1091 = vpop.f32.mrf.mxu0
      %v1092 = vadd.f32 %v859, %v1091
      %v1093 = vpop.f32.mrf.mxu0
      %v1094 = vadd.f32 %v861, %v1093
      %1095 = vmatmul.bf16.gmra.mxu0 %v967
      %v1096 = vpop.f32.mrf.mxu0
      %v1097 = vadd.f32 %v864, %v1096
      %v1098 = vpop.f32.mrf.mxu0
      %v1099 = vadd.f32 %v866, %v1098
      %1100 = vmatmul.bf16.gmra.mxu0 %v968
      %v1101 = vpop.f32.mrf.mxu0
      %v1102 = vadd.f32 %v869, %v1101
      %v1103 = vpop.f32.mrf.mxu0
      %v1104 = vadd.f32 %v871, %v1103
      %1105 = vmatmul.bf16.gmra.mxu0 %v969
      %v1106 = vpop.f32.mrf.mxu0
      %v1107 = vadd.f32 %v874, %v1106
      %v1108 = vpop.f32.mrf.mxu0
      %v1109 = vadd.f32 %v876, %v1108
      %1110 = vmatmul.bf16.gmra.mxu0 %v970
      %v1111 = vpop.f32.mrf.mxu0
      %v1112 = vadd.f32 %v879, %v1111
      %v1113 = vpop.f32.mrf.mxu0
      %v1114 = vadd.f32 %v881, %v1113
      %1115 = vmatmul.bf16.gmra.mxu0 %v971
      %v1116 = vpop.f32.mrf.mxu0
      %v1117 = vadd.f32 %v884, %v1116
      %v1118 = vpop.f32.mrf.mxu0
      %v1119 = vadd.f32 %v886, %v1118
      %1120 = vmatmul.bf16.gmra.mxu0 %v972
      %v1121 = vpop.f32.mrf.mxu0
      %v1122 = vadd.f32 %v889, %v1121
      %v1123 = vpop.f32.mrf.mxu0
      %v1124 = vadd.f32 %v891, %v1123
      %1125 = vdwg.mxu0
      %v1126 = vld [vmem:[%s346] sm:$0xff]
      %v1127 = vld [vmem:[%s346 + $0x8] sm:$0xff]
      %v1128 = vld [vmem:[%s346 + $0x10] sm:$0xff]
      %v1129 = vld [vmem:[%s346 + $0x18] sm:$0xff]
      %v1130 = vld [vmem:[%s346 + $0x20] sm:$0xff]
      %v1131 = vld [vmem:[%s346 + $0x28] sm:$0xff]
      %v1132 = vld [vmem:[%s346 + $0x30] sm:$0xff]
      %v1133 = vld [vmem:[%s346 + $0x38] sm:$0xff]
      %v1134 = vld [vmem:[%s346 + $0x40] sm:$0xff]
      %v1135 = vld [vmem:[%s346 + $0x48] sm:$0xff]
      %v1136 = vld [vmem:[%s346 + $0x50] sm:$0xff]
      %v1137 = vld [vmem:[%s346 + $0x58] sm:$0xff]
      %v1138 = vld [vmem:[%s346 + $0x60] sm:$0xff]
      %v1139 = vld [vmem:[%s346 + $0x68] sm:$0xff]
      %v1140 = vld [vmem:[%s346 + $0x70] sm:$0xff]
      %v1141 = vld [vmem:[%s346 + $0x78] sm:$0xff]
      %v1142 = vld [vmem:[%s346 + $0x80] sm:$0xff]
      %v1143 = vld [vmem:[%s346 + $0x88] sm:$0xff]
      %v1144 = vld [vmem:[%s346 + $0x90] sm:$0xff]
      %v1145 = vld [vmem:[%s346 + $0x98] sm:$0xff]
      %v1146 = vld [vmem:[%s346 + $0xa0] sm:$0xff]
      %v1147 = vld [vmem:[%s346 + $0xa8] sm:$0xff]
      %v1148 = vld [vmem:[%s346 + $0xb0] sm:$0xff]
      %v1149 = vld [vmem:[%s346 + $0xb8] sm:$0xff]
      %v1150 = vld [vmem:[%s346 + $0xc0] sm:$0xff]
      %v1151 = vld [vmem:[%s346 + $0xc8] sm:$0xff]
      %v1152 = vld [vmem:[%s346 + $0xd0] sm:$0xff]
      %v1153 = vld [vmem:[%s346 + $0xd8] sm:$0xff]
      %v1154 = vld [vmem:[%s346 + $0xe0] sm:$0xff]
      %v1155 = vld [vmem:[%s346 + $0xe8] sm:$0xff]
      %v1156 = vld [vmem:[%s346 + $0xf0] sm:$0xff]
      %v1157 = vld [vmem:[%s346 + $0xf8] sm:$0xff]
      %v1158 = vld [vmem:[%s5] sm:$0x7]
      %1160 = vset.pattern.permute.xlu0 0
      %1161 = vperm.xlu0 %1160, %v1126
      %v1162 = vpop.permute.xlu0 %1161
      %1165 = vset.pattern.permute.xlu0 0
      %1166 = vperm.xlu0 %1165, %v1127
      %v1167 = vpop.permute.xlu0 %1166
      %1170 = vset.pattern.permute.xlu0 0
      %1171 = vperm.xlu0 %1170, %v1128
      %v1172 = vpop.permute.xlu0 %1171
      %1175 = vset.pattern.permute.xlu0 0
      %1176 = vperm.xlu0 %1175, %v1129
      %v1177 = vpop.permute.xlu0 %1176
      %1180 = vset.pattern.permute.xlu0 0
      %1181 = vperm.xlu0 %1180, %v1130
      %v1182 = vpop.permute.xlu0 %1181
      %1185 = vset.pattern.permute.xlu0 0
      %1186 = vperm.xlu0 %1185, %v1131
      %v1187 = vpop.permute.xlu0 %1186
      %1190 = vset.pattern.permute.xlu0 0
      %1191 = vperm.xlu0 %1190, %v1132
      %v1192 = vpop.permute.xlu0 %1191
      %1195 = vset.pattern.permute.xlu0 0
      %1196 = vperm.xlu0 %1195, %v1133
      %v1197 = vpop.permute.xlu0 %1196
      %1200 = vset.pattern.permute.xlu0 0
      %1201 = vperm.xlu0 %1200, %v1134
      %v1202 = vpop.permute.xlu0 %1201
      %1205 = vset.pattern.permute.xlu0 0
      %1206 = vperm.xlu0 %1205, %v1135
      %v1207 = vpop.permute.xlu0 %1206
      %1210 = vset.pattern.permute.xlu0 0
      %1211 = vperm.xlu0 %1210, %v1136
      %v1212 = vpop.permute.xlu0 %1211
      %1215 = vset.pattern.permute.xlu0 0
      %1216 = vperm.xlu0 %1215, %v1137
      %v1217 = vpop.permute.xlu0 %1216
      %1220 = vset.pattern.permute.xlu0 0
      %1221 = vperm.xlu0 %1220, %v1138
      %v1222 = vpop.permute.xlu0 %1221
      %1225 = vset.pattern.permute.xlu0 0
      %1226 = vperm.xlu0 %1225, %v1139
      %v1227 = vpop.permute.xlu0 %1226
      %1230 = vset.pattern.permute.xlu0 0
      %1231 = vperm.xlu0 %1230, %v1140
      %v1232 = vpop.permute.xlu0 %1231
      %1235 = vset.pattern.permute.xlu0 0
      %1236 = vperm.xlu0 %1235, %v1141
      %v1237 = vpop.permute.xlu0 %1236
      %1240 = vset.pattern.permute.xlu0 0
      %1241 = vperm.xlu0 %1240, %v1142
      %v1242 = vpop.permute.xlu0 %1241
      %1245 = vset.pattern.permute.xlu0 0
      %1246 = vperm.xlu0 %1245, %v1143
      %v1247 = vpop.permute.xlu0 %1246
      %1250 = vset.pattern.permute.xlu0 0
      %1251 = vperm.xlu0 %1250, %v1144
      %v1252 = vpop.permute.xlu0 %1251
      %1255 = vset.pattern.permute.xlu0 0
      %1256 = vperm.xlu0 %1255, %v1145
      %v1257 = vpop.permute.xlu0 %1256
      %1260 = vset.pattern.permute.xlu0 0
      %1261 = vperm.xlu0 %1260, %v1146
      %v1262 = vpop.permute.xlu0 %1261
      %1265 = vset.pattern.permute.xlu0 0
      %1266 = vperm.xlu0 %1265, %v1147
      %v1267 = vpop.permute.xlu0 %1266
      %1270 = vset.pattern.permute.xlu0 0
      %1271 = vperm.xlu0 %1270, %v1148
      %v1272 = vpop.permute.xlu0 %1271
      %1275 = vset.pattern.permute.xlu0 0
      %1276 = vperm.xlu0 %1275, %v1149
      %v1277 = vpop.permute.xlu0 %1276
      %1280 = vset.pattern.permute.xlu0 0
      %1281 = vperm.xlu0 %1280, %v1150
      %v1282 = vpop.permute.xlu0 %1281
      %1285 = vset.pattern.permute.xlu0 0
      %1286 = vperm.xlu0 %1285, %v1151
      %v1287 = vpop.permute.xlu0 %1286
      %1290 = vset.pattern.permute.xlu0 0
      %1291 = vperm.xlu0 %1290, %v1152
      %v1292 = vpop.permute.xlu0 %1291
      %1295 = vset.pattern.permute.xlu0 0
      %1296 = vperm.xlu0 %1295, %v1153
      %v1297 = vpop.permute.xlu0 %1296
      %1300 = vset.pattern.permute.xlu0 0
      %1301 = vperm.xlu0 %1300, %v1154
      %v1302 = vpop.permute.xlu0 %1301
      %1305 = vset.pattern.permute.xlu0 0
      %1306 = vperm.xlu0 %1305, %v1155
      %v1307 = vpop.permute.xlu0 %1306
      %1310 = vset.pattern.permute.xlu0 0
      %1311 = vperm.xlu0 %1310, %v1156
      %v1312 = vpop.permute.xlu0 %1311
      %1315 = vset.pattern.permute.xlu0 0
      %1316 = vperm.xlu0 %1315, %v1157
      %v1317 = vpop.permute.xlu0 %1316
      %v1319 = vperm.slane %v1158, 0
      %v1320 = vmul.f32 %v1162, %v1319
      %v1321 = vmul.f32 %v1167, %v1319
      %v1322 = vmul.f32 %v1172, %v1319
      %v1323 = vmul.f32 %v1177, %v1319
      %v1324 = vmul.f32 %v1182, %v1319
      %v1325 = vmul.f32 %v1187, %v1319
      %v1326 = vmul.f32 %v1192, %v1319
      %v1327 = vmul.f32 %v1197, %v1319
      %v1328 = vmul.f32 %v1202, %v1319
      %v1329 = vmul.f32 %v1207, %v1319
      %v1330 = vmul.f32 %v1212, %v1319
      %v1331 = vmul.f32 %v1217, %v1319
      %v1332 = vmul.f32 %v1222, %v1319
      %v1333 = vmul.f32 %v1227, %v1319
      %v1334 = vmul.f32 %v1232, %v1319
      %v1335 = vmul.f32 %v1237, %v1319
      %v1336 = vmul.f32 %v1242, %v1319
      %v1337 = vmul.f32 %v1247, %v1319
      %v1338 = vmul.f32 %v1252, %v1319
      %v1339 = vmul.f32 %v1257, %v1319
      %v1340 = vmul.f32 %v1262, %v1319
      %v1341 = vmul.f32 %v1267, %v1319
      %v1342 = vmul.f32 %v1272, %v1319
      %v1343 = vmul.f32 %v1277, %v1319
      %v1344 = vmul.f32 %v1282, %v1319
      %v1345 = vmul.f32 %v1287, %v1319
      %v1346 = vmul.f32 %v1292, %v1319
      %v1347 = vmul.f32 %v1297, %v1319
      %v1348 = vmul.f32 %v1302, %v1319
      %v1349 = vmul.f32 %v1307, %v1319
      %v1350 = vmul.f32 %v1312, %v1319
      %v1351 = vmul.f32 %v1317, %v1319
      %v1352 = vadd.f32 %v1047, %v1320
      %v1353 = vadd.f32 %v1049, %v1321
      %v1354 = vadd.f32 %v1052, %v1322
      %v1355 = vadd.f32 %v1054, %v1323
      %v1356 = vadd.f32 %v1057, %v1324
      %v1357 = vadd.f32 %v1059, %v1325
      %v1358 = vadd.f32 %v1062, %v1326
      %v1359 = vadd.f32 %v1064, %v1327
      %v1360 = vadd.f32 %v1067, %v1328
      %v1361 = vadd.f32 %v1069, %v1329
      %v1362 = vadd.f32 %v1072, %v1330
      %v1363 = vadd.f32 %v1074, %v1331
      %v1364 = vadd.f32 %v1077, %v1332
      %v1365 = vadd.f32 %v1079, %v1333
      %v1366 = vadd.f32 %v1082, %v1334
      %v1367 = vadd.f32 %v1084, %v1335
      %v1368 = vadd.f32 %v1087, %v1336
      %v1369 = vadd.f32 %v1089, %v1337
      %v1370 = vadd.f32 %v1092, %v1338
      %v1371 = vadd.f32 %v1094, %v1339
      %v1372 = vadd.f32 %v1097, %v1340
      %v1373 = vadd.f32 %v1099, %v1341
      %v1374 = vadd.f32 %v1102, %v1342
      %v1375 = vadd.f32 %v1104, %v1343
      %v1376 = vadd.f32 %v1107, %v1344
      %v1377 = vadd.f32 %v1109, %v1345
      %v1378 = vadd.f32 %v1112, %v1346
      %v1379 = vadd.f32 %v1114, %v1347
      %v1380 = vadd.f32 %v1117, %v1348
      %v1381 = vadd.f32 %v1119, %v1349
      %v1382 = vadd.f32 %v1122, %v1350
      %v1383 = vadd.f32 %v1124, %v1351
      %1384 = vset.pattern.permute.xlu0 1
      %1385 = vperm.xlu0 %1384, %v1126
      %v1386 = vpop.permute.xlu0 %1385
      %1388 = vset.pattern.permute.xlu0 1
      %1389 = vperm.xlu0 %1388, %v1127
      %v1390 = vpop.permute.xlu0 %1389
      %1392 = vset.pattern.permute.xlu0 1
      %1393 = vperm.xlu0 %1392, %v1128
      %v1394 = vpop.permute.xlu0 %1393
      %1396 = vset.pattern.permute.xlu0 1
      %1397 = vperm.xlu0 %1396, %v1129
      %v1398 = vpop.permute.xlu0 %1397
      %1400 = vset.pattern.permute.xlu0 1
      %1401 = vperm.xlu0 %1400, %v1130
      %v1402 = vpop.permute.xlu0 %1401
      %1404 = vset.pattern.permute.xlu0 1
      %1405 = vperm.xlu0 %1404, %v1131
      %v1406 = vpop.permute.xlu0 %1405
      %1408 = vset.pattern.permute.xlu0 1
      %1409 = vperm.xlu0 %1408, %v1132
      %v1410 = vpop.permute.xlu0 %1409
      %1412 = vset.pattern.permute.xlu0 1
      %1413 = vperm.xlu0 %1412, %v1133
      %v1414 = vpop.permute.xlu0 %1413
      %1416 = vset.pattern.permute.xlu0 1
      %1417 = vperm.xlu0 %1416, %v1134
      %v1418 = vpop.permute.xlu0 %1417
      %1420 = vset.pattern.permute.xlu0 1
      %1421 = vperm.xlu0 %1420, %v1135
      %v1422 = vpop.permute.xlu0 %1421
      %1424 = vset.pattern.permute.xlu0 1
      %1425 = vperm.xlu0 %1424, %v1136
      %v1426 = vpop.permute.xlu0 %1425
      %1428 = vset.pattern.permute.xlu0 1
      %1429 = vperm.xlu0 %1428, %v1137
      %v1430 = vpop.permute.xlu0 %1429
      %1432 = vset.pattern.permute.xlu0 1
      %1433 = vperm.xlu0 %1432, %v1138
      %v1434 = vpop.permute.xlu0 %1433
      %1436 = vset.pattern.permute.xlu0 1
      %1437 = vperm.xlu0 %1436, %v1139
      %v1438 = vpop.permute.xlu0 %1437
      %1440 = vset.pattern.permute.xlu0 1
      %1441 = vperm.xlu0 %1440, %v1140
      %v1442 = vpop.permute.xlu0 %1441
      %1444 = vset.pattern.permute.xlu0 1
      %1445 = vperm.xlu0 %1444, %v1141
      %v1446 = vpop.permute.xlu0 %1445
      %1448 = vset.pattern.permute.xlu0 1
      %1449 = vperm.xlu0 %1448, %v1142
      %v1450 = vpop.permute.xlu0 %1449
      %1452 = vset.pattern.permute.xlu0 1
      %1453 = vperm.xlu0 %1452, %v1143
      %v1454 = vpop.permute.xlu0 %1453
      %1456 = vset.pattern.permute.xlu0 1
      %1457 = vperm.xlu0 %1456, %v1144
      %v1458 = vpop.permute.xlu0 %1457
      %1460 = vset.pattern.permute.xlu0 1
      %1461 = vperm.xlu0 %1460, %v1145
      %v1462 = vpop.permute.xlu0 %1461
      %1464 = vset.pattern.permute.xlu0 1
      %1465 = vperm.xlu0 %1464, %v1146
      %v1466 = vpop.permute.xlu0 %1465
      %1468 = vset.pattern.permute.xlu0 1
      %1469 = vperm.xlu0 %1468, %v1147
      %v1470 = vpop.permute.xlu0 %1469
      %1472 = vset.pattern.permute.xlu0 1
      %1473 = vperm.xlu0 %1472, %v1148
      %v1474 = vpop.permute.xlu0 %1473
      %1476 = vset.pattern.permute.xlu0 1
      %1477 = vperm.xlu0 %1476, %v1149
      %v1478 = vpop.permute.xlu0 %1477
      %1480 = vset.pattern.permute.xlu0 1
      %1481 = vperm.xlu0 %1480, %v1150
      %v1482 = vpop.permute.xlu0 %1481
      %1484 = vset.pattern.permute.xlu0 1
      %1485 = vperm.xlu0 %1484, %v1151
      %v1486 = vpop.permute.xlu0 %1485
      %1488 = vset.pattern.permute.xlu0 1
      %1489 = vperm.xlu0 %1488, %v1152
      %v1490 = vpop.permute.xlu0 %1489
      %1492 = vset.pattern.permute.xlu0 1
      %1493 = vperm.xlu0 %1492, %v1153
      %v1494 = vpop.permute.xlu0 %1493
      %1496 = vset.pattern.permute.xlu0 1
      %1497 = vperm.xlu0 %1496, %v1154
      %v1498 = vpop.permute.xlu0 %1497
      %1500 = vset.pattern.permute.xlu0 1
      %1501 = vperm.xlu0 %1500, %v1155
      %v1502 = vpop.permute.xlu0 %1501
      %1504 = vset.pattern.permute.xlu0 1
      %1505 = vperm.xlu0 %1504, %v1156
      %v1506 = vpop.permute.xlu0 %1505
      %1508 = vset.pattern.permute.xlu0 1
      %1509 = vperm.xlu0 %1508, %v1157
      %v1510 = vpop.permute.xlu0 %1509
      %v1512 = vperm.slane %v1158, 1
      %v1513 = vmul.f32 %v1386, %v1512
      %v1514 = vmul.f32 %v1390, %v1512
      %v1515 = vmul.f32 %v1394, %v1512
      %v1516 = vmul.f32 %v1398, %v1512
      %v1517 = vmul.f32 %v1402, %v1512
      %v1518 = vmul.f32 %v1406, %v1512
      %v1519 = vmul.f32 %v1410, %v1512
      %v1520 = vmul.f32 %v1414, %v1512
      %v1521 = vmul.f32 %v1418, %v1512
      %v1522 = vmul.f32 %v1422, %v1512
      %v1523 = vmul.f32 %v1426, %v1512
      %v1524 = vmul.f32 %v1430, %v1512
      %v1525 = vmul.f32 %v1434, %v1512
      %v1526 = vmul.f32 %v1438, %v1512
      %v1527 = vmul.f32 %v1442, %v1512
      %v1528 = vmul.f32 %v1446, %v1512
      %v1529 = vmul.f32 %v1450, %v1512
      %v1530 = vmul.f32 %v1454, %v1512
      %v1531 = vmul.f32 %v1458, %v1512
      %v1532 = vmul.f32 %v1462, %v1512
      %v1533 = vmul.f32 %v1466, %v1512
      %v1534 = vmul.f32 %v1470, %v1512
      %v1535 = vmul.f32 %v1474, %v1512
      %v1536 = vmul.f32 %v1478, %v1512
      %v1537 = vmul.f32 %v1482, %v1512
      %v1538 = vmul.f32 %v1486, %v1512
      %v1539 = vmul.f32 %v1490, %v1512
      %v1540 = vmul.f32 %v1494, %v1512
      %v1541 = vmul.f32 %v1498, %v1512
      %v1542 = vmul.f32 %v1502, %v1512
      %v1543 = vmul.f32 %v1506, %v1512
      %v1544 = vmul.f32 %v1510, %v1512
      %v1545 = vadd.f32 %v1352, %v1513
      %v1546 = vadd.f32 %v1353, %v1514
      %v1547 = vadd.f32 %v1354, %v1515
      %v1548 = vadd.f32 %v1355, %v1516
      %v1549 = vadd.f32 %v1356, %v1517
      %v1550 = vadd.f32 %v1357, %v1518
      %v1551 = vadd.f32 %v1358, %v1519
      %v1552 = vadd.f32 %v1359, %v1520
      %v1553 = vadd.f32 %v1360, %v1521
      %v1554 = vadd.f32 %v1361, %v1522
      %v1555 = vadd.f32 %v1362, %v1523
      %v1556 = vadd.f32 %v1363, %v1524
      %v1557 = vadd.f32 %v1364, %v1525
      %v1558 = vadd.f32 %v1365, %v1526
      %v1559 = vadd.f32 %v1366, %v1527
      %v1560 = vadd.f32 %v1367, %v1528
      %v1561 = vadd.f32 %v1368, %v1529
      %v1562 = vadd.f32 %v1369, %v1530
      %v1563 = vadd.f32 %v1370, %v1531
      %v1564 = vadd.f32 %v1371, %v1532
      %v1565 = vadd.f32 %v1372, %v1533
      %v1566 = vadd.f32 %v1373, %v1534
      %v1567 = vadd.f32 %v1374, %v1535
      %v1568 = vadd.f32 %v1375, %v1536
      %v1569 = vadd.f32 %v1376, %v1537
      %v1570 = vadd.f32 %v1377, %v1538
      %v1571 = vadd.f32 %v1378, %v1539
      %v1572 = vadd.f32 %v1379, %v1540
      %v1573 = vadd.f32 %v1380, %v1541
      %v1574 = vadd.f32 %v1381, %v1542
      %v1575 = vadd.f32 %v1382, %v1543
      %v1576 = vadd.f32 %v1383, %v1544
      %1577 = vset.pattern.permute.xlu0 2
      %1578 = vperm.xlu0 %1577, %v1126
      %v1579 = vpop.permute.xlu0 %1578
      %1581 = vset.pattern.permute.xlu0 2
      %1582 = vperm.xlu0 %1581, %v1127
      %v1583 = vpop.permute.xlu0 %1582
      %1585 = vset.pattern.permute.xlu0 2
      %1586 = vperm.xlu0 %1585, %v1128
      %v1587 = vpop.permute.xlu0 %1586
      %1589 = vset.pattern.permute.xlu0 2
      %1590 = vperm.xlu0 %1589, %v1129
      %v1591 = vpop.permute.xlu0 %1590
      %1593 = vset.pattern.permute.xlu0 2
      %1594 = vperm.xlu0 %1593, %v1130
      %v1595 = vpop.permute.xlu0 %1594
      %1597 = vset.pattern.permute.xlu0 2
      %1598 = vperm.xlu0 %1597, %v1131
      %v1599 = vpop.permute.xlu0 %1598
      %1601 = vset.pattern.permute.xlu0 2
      %1602 = vperm.xlu0 %1601, %v1132
      %v1603 = vpop.permute.xlu0 %1602
      %1605 = vset.pattern.permute.xlu0 2
      %1606 = vperm.xlu0 %1605, %v1133
      %v1607 = vpop.permute.xlu0 %1606
      %1609 = vset.pattern.permute.xlu0 2
      %1610 = vperm.xlu0 %1609, %v1134
      %v1611 = vpop.permute.xlu0 %1610
      %1613 = vset.pattern.permute.xlu0 2
      %1614 = vperm.xlu0 %1613, %v1135
      %v1615 = vpop.permute.xlu0 %1614
      %1617 = vset.pattern.permute.xlu0 2
      %1618 = vperm.xlu0 %1617, %v1136
      %v1619 = vpop.permute.xlu0 %1618
      %1621 = vset.pattern.permute.xlu0 2
      %1622 = vperm.xlu0 %1621, %v1137
      %v1623 = vpop.permute.xlu0 %1622
      %1625 = vset.pattern.permute.xlu0 2
      %1626 = vperm.xlu0 %1625, %v1138
      %v1627 = vpop.permute.xlu0 %1626
      %1629 = vset.pattern.permute.xlu0 2
      %1630 = vperm.xlu0 %1629, %v1139
      %v1631 = vpop.permute.xlu0 %1630
      %1633 = vset.pattern.permute.xlu0 2
      %1634 = vperm.xlu0 %1633, %v1140
      %v1635 = vpop.permute.xlu0 %1634
      %1637 = vset.pattern.permute.xlu0 2
      %1638 = vperm.xlu0 %1637, %v1141
      %v1639 = vpop.permute.xlu0 %1638
      %1641 = vset.pattern.permute.xlu0 2
      %1642 = vperm.xlu0 %1641, %v1142
      %v1643 = vpop.permute.xlu0 %1642
      %1645 = vset.pattern.permute.xlu0 2
      %1646 = vperm.xlu0 %1645, %v1143
      %v1647 = vpop.permute.xlu0 %1646
      %1649 = vset.pattern.permute.xlu0 2
      %1650 = vperm.xlu0 %1649, %v1144
      %v1651 = vpop.permute.xlu0 %1650
      %1653 = vset.pattern.permute.xlu0 2
      %1654 = vperm.xlu0 %1653, %v1145
      %v1655 = vpop.permute.xlu0 %1654
      %1657 = vset.pattern.permute.xlu0 2
      %1658 = vperm.xlu0 %1657, %v1146
      %v1659 = vpop.permute.xlu0 %1658
      %1661 = vset.pattern.permute.xlu0 2
      %1662 = vperm.xlu0 %1661, %v1147
      %v1663 = vpop.permute.xlu0 %1662
      %1665 = vset.pattern.permute.xlu0 2
      %1666 = vperm.xlu0 %1665, %v1148
      %v1667 = vpop.permute.xlu0 %1666
      %1669 = vset.pattern.permute.xlu0 2
      %1670 = vperm.xlu0 %1669, %v1149
      %v1671 = vpop.permute.xlu0 %1670
      %1673 = vset.pattern.permute.xlu0 2
      %1674 = vperm.xlu0 %1673, %v1150
      %v1675 = vpop.permute.xlu0 %1674
      %1677 = vset.pattern.permute.xlu0 2
      %1678 = vperm.xlu0 %1677, %v1151
      %v1679 = vpop.permute.xlu0 %1678
      %1681 = vset.pattern.permute.xlu0 2
      %1682 = vperm.xlu0 %1681, %v1152
      %v1683 = vpop.permute.xlu0 %1682
      %1685 = vset.pattern.permute.xlu0 2
      %1686 = vperm.xlu0 %1685, %v1153
      %v1687 = vpop.permute.xlu0 %1686
      %1689 = vset.pattern.permute.xlu0 2
      %1690 = vperm.xlu0 %1689, %v1154
      %v1691 = vpop.permute.xlu0 %1690
      %1693 = vset.pattern.permute.xlu0 2
      %1694 = vperm.xlu0 %1693, %v1155
      %v1695 = vpop.permute.xlu0 %1694
      %1697 = vset.pattern.permute.xlu0 2
      %1698 = vperm.xlu0 %1697, %v1156
      %v1699 = vpop.permute.xlu0 %1698
      %1701 = vset.pattern.permute.xlu0 2
      %1702 = vperm.xlu0 %1701, %v1157
      %v1703 = vpop.permute.xlu0 %1702
      %v1705 = vperm.slane %v1158, 2
      %v1706 = vmul.f32 %v1579, %v1705
      %v1707 = vmul.f32 %v1583, %v1705
      %v1708 = vmul.f32 %v1587, %v1705
      %v1709 = vmul.f32 %v1591, %v1705
      %v1710 = vmul.f32 %v1595, %v1705
      %v1711 = vmul.f32 %v1599, %v1705
      %v1712 = vmul.f32 %v1603, %v1705
      %v1713 = vmul.f32 %v1607, %v1705
      %v1714 = vmul.f32 %v1611, %v1705
      %v1715 = vmul.f32 %v1615, %v1705
      %v1716 = vmul.f32 %v1619, %v1705
      %v1717 = vmul.f32 %v1623, %v1705
      %v1718 = vmul.f32 %v1627, %v1705
      %v1719 = vmul.f32 %v1631, %v1705
      %v1720 = vmul.f32 %v1635, %v1705
      %v1721 = vmul.f32 %v1639, %v1705
      %v1722 = vmul.f32 %v1643, %v1705
      %v1723 = vmul.f32 %v1647, %v1705
      %v1724 = vmul.f32 %v1651, %v1705
      %v1725 = vmul.f32 %v1655, %v1705
      %v1726 = vmul.f32 %v1659, %v1705
      %v1727 = vmul.f32 %v1663, %v1705
      %v1728 = vmul.f32 %v1667, %v1705
      %v1729 = vmul.f32 %v1671, %v1705
      %v1730 = vmul.f32 %v1675, %v1705
      %v1731 = vmul.f32 %v1679, %v1705
      %v1732 = vmul.f32 %v1683, %v1705
      %v1733 = vmul.f32 %v1687, %v1705
      %v1734 = vmul.f32 %v1691, %v1705
      %v1735 = vmul.f32 %v1695, %v1705
      %v1736 = vmul.f32 %v1699, %v1705
      %v1737 = vmul.f32 %v1703, %v1705
      %v1738 = vadd.f32 %v1545, %v1706
      %v1739 = vadd.f32 %v1546, %v1707
      %v1740 = vadd.f32 %v1547, %v1708
      %v1741 = vadd.f32 %v1548, %v1709
      %v1742 = vadd.f32 %v1549, %v1710
      %v1743 = vadd.f32 %v1550, %v1711
      %v1744 = vadd.f32 %v1551, %v1712
      %v1745 = vadd.f32 %v1552, %v1713
      %v1746 = vadd.f32 %v1553, %v1714
      %v1747 = vadd.f32 %v1554, %v1715
      %v1748 = vadd.f32 %v1555, %v1716
      %v1749 = vadd.f32 %v1556, %v1717
      %v1750 = vadd.f32 %v1557, %v1718
      %v1751 = vadd.f32 %v1558, %v1719
      %v1752 = vadd.f32 %v1559, %v1720
      %v1753 = vadd.f32 %v1560, %v1721
      %v1754 = vadd.f32 %v1561, %v1722
      %v1755 = vadd.f32 %v1562, %v1723
      %v1756 = vadd.f32 %v1563, %v1724
      %v1757 = vadd.f32 %v1564, %v1725
      %v1758 = vadd.f32 %v1565, %v1726
      %v1759 = vadd.f32 %v1566, %v1727
      %v1760 = vadd.f32 %v1567, %v1728
      %v1761 = vadd.f32 %v1568, %v1729
      %v1762 = vadd.f32 %v1569, %v1730
      %v1763 = vadd.f32 %v1570, %v1731
      %v1764 = vadd.f32 %v1571, %v1732
      %v1765 = vadd.f32 %v1572, %v1733
      %v1766 = vadd.f32 %v1573, %v1734
      %v1767 = vadd.f32 %v1574, %v1735
      %v1768 = vadd.f32 %v1575, %v1736
      %v1769 = vadd.f32 %v1576, %v1737
      %v1770 = vperm.slane %v361, 1
      %v1771 = vadd.f32 %v1738, %v1770
      %v1772 = vadd.f32 %v1739, %v1770
      %v1773 = vadd.f32 %v1740, %v1770
      %v1774 = vadd.f32 %v1741, %v1770
      %v1775 = vadd.f32 %v1742, %v1770
      %v1776 = vadd.f32 %v1743, %v1770
      %v1777 = vadd.f32 %v1744, %v1770
      %v1778 = vadd.f32 %v1745, %v1770
      %v1779 = vadd.f32 %v1746, %v1770
      %v1780 = vadd.f32 %v1747, %v1770
      %v1781 = vadd.f32 %v1748, %v1770
      %v1782 = vadd.f32 %v1749, %v1770
      %v1783 = vadd.f32 %v1750, %v1770
      %v1784 = vadd.f32 %v1751, %v1770
      %v1785 = vadd.f32 %v1752, %v1770
      %v1786 = vadd.f32 %v1753, %v1770
      %v1787 = vadd.f32 %v1754, %v1770
      %v1788 = vadd.f32 %v1755, %v1770
      %v1789 = vadd.f32 %v1756, %v1770
      %v1790 = vadd.f32 %v1757, %v1770
      %v1791 = vadd.f32 %v1758, %v1770
      %v1792 = vadd.f32 %v1759, %v1770
      %v1793 = vadd.f32 %v1760, %v1770
      %v1794 = vadd.f32 %v1761, %v1770
      %v1795 = vadd.f32 %v1762, %v1770
      %v1796 = vadd.f32 %v1763, %v1770
      %v1797 = vadd.f32 %v1764, %v1770
      %v1798 = vadd.f32 %v1765, %v1770
      %v1799 = vadd.f32 %v1766, %v1770
      %v1800 = vadd.f32 %v1767, %v1770
      %v1801 = vadd.f32 %v1768, %v1770
      %v1802 = vadd.f32 %v1769, %v1770
      %1803 = vadd.xlane.f32.xlu0 %v1771
      %v1804 = vpop.xlane.xlu0 %1803
      %1805 = vadd.xlane.f32.xlu0 %v1772
      %v1806 = vpop.xlane.xlu0 %1805
      %1807 = vadd.xlane.f32.xlu0 %v1773
      %v1808 = vpop.xlane.xlu0 %1807
      %1809 = vadd.xlane.f32.xlu0 %v1774
      %v1810 = vpop.xlane.xlu0 %1809
      %1811 = vadd.xlane.f32.xlu0 %v1775
      %v1812 = vpop.xlane.xlu0 %1811
      %1813 = vadd.xlane.f32.xlu0 %v1776
      %v1814 = vpop.xlane.xlu0 %1813
      %1815 = vadd.xlane.f32.xlu0 %v1777
      %v1816 = vpop.xlane.xlu0 %1815
      %1817 = vadd.xlane.f32.xlu0 %v1778
      %v1818 = vpop.xlane.xlu0 %1817
      %1819 = vadd.xlane.f32.xlu0 %v1779
      %v1820 = vpop.xlane.xlu0 %1819
      %1821 = vadd.xlane.f32.xlu0 %v1780
      %v1822 = vpop.xlane.xlu0 %1821
      %1823 = vadd.xlane.f32.xlu0 %v1781
      %v1824 = vpop.xlane.xlu0 %1823
      %1825 = vadd.xlane.f32.xlu0 %v1782
      %v1826 = vpop.xlane.xlu0 %1825
      %1827 = vadd.xlane.f32.xlu0 %v1783
      %v1828 = vpop.xlane.xlu0 %1827
      %1829 = vadd.xlane.f32.xlu0 %v1784
      %v1830 = vpop.xlane.xlu0 %1829
      %1831 = vadd.xlane.f32.xlu0 %v1785
      %v1832 = vpop.xlane.xlu0 %1831
      %1833 = vadd.xlane.f32.xlu0 %v1786
      %v1834 = vpop.xlane.xlu0 %1833
      %1835 = vadd.xlane.f32.xlu0 %v1787
      %v1836 = vpop.xlane.xlu0 %1835
      %1837 = vadd.xlane.f32.xlu0 %v1788
      %v1838 = vpop.xlane.xlu0 %1837
      %1839 = vadd.xlane.f32.xlu0 %v1789
      %v1840 = vpop.xlane.xlu0 %1839
      %1841 = vadd.xlane.f32.xlu0 %v1790
      %v1842 = vpop.xlane.xlu0 %1841
      %1843 = vadd.xlane.f32.xlu0 %v1791
      %v1844 = vpop.xlane.xlu0 %1843
      %1845 = vadd.xlane.f32.xlu0 %v1792
      %v1846 = vpop.xlane.xlu0 %1845
      %1847 = vadd.xlane.f32.xlu0 %v1793
      %v1848 = vpop.xlane.xlu0 %1847
      %1849 = vadd.xlane.f32.xlu0 %v1794
      %v1850 = vpop.xlane.xlu0 %1849
      %1851 = vadd.xlane.f32.xlu0 %v1795
      %v1852 = vpop.xlane.xlu0 %1851
      %1853 = vadd.xlane.f32.xlu0 %v1796
      %v1854 = vpop.xlane.xlu0 %1853
      %1855 = vadd.xlane.f32.xlu0 %v1797
      %v1856 = vpop.xlane.xlu0 %1855
      %1857 = vadd.xlane.f32.xlu0 %v1798
      %v1858 = vpop.xlane.xlu0 %1857
      %1859 = vadd.xlane.f32.xlu0 %v1799
      %v1860 = vpop.xlane.xlu0 %1859
      %1861 = vadd.xlane.f32.xlu0 %v1800
      %v1862 = vpop.xlane.xlu0 %1861
      %1863 = vadd.xlane.f32.xlu0 %v1801
      %v1864 = vpop.xlane.xlu0 %1863
      %1865 = vadd.xlane.f32.xlu0 %v1802
      %v1866 = vpop.xlane.xlu0 %1865
      %v1867 = vrcp.pop 128.0
      %v1868 = vmul.f32 128.0, %v1867
      %v1869 = vsub.f32 1.0, %v1868
      %v1870 = vmul.f32 %v1867, %v1869
      %v1871 = vadd.f32 %v1867, %v1870
      %vm1872 = vweird.f32 %v1867
      %v1873 = vsel %vm1872, %v1867, %v1871
      %v1874 = vmul.f32 %v1804, %v1873
      %v1875 = vmul.f32 %v1806, %v1873
      %v1876 = vmul.f32 %v1808, %v1873
      %v1877 = vmul.f32 %v1810, %v1873
      %v1878 = vmul.f32 %v1812, %v1873
      %v1879 = vmul.f32 %v1814, %v1873
      %v1880 = vmul.f32 %v1816, %v1873
      %v1881 = vmul.f32 %v1818, %v1873
      %v1882 = vmul.f32 %v1820, %v1873
      %v1883 = vmul.f32 %v1822, %v1873
      %v1884 = vmul.f32 %v1824, %v1873
      %v1885 = vmul.f32 %v1826, %v1873
      %v1886 = vmul.f32 %v1828, %v1873
      %v1887 = vmul.f32 %v1830, %v1873
      %v1888 = vmul.f32 %v1832, %v1873
      %v1889 = vmul.f32 %v1834, %v1873
      %v1890 = vmul.f32 %v1836, %v1873
      %v1891 = vmul.f32 %v1838, %v1873
      %v1892 = vmul.f32 %v1840, %v1873
      %v1893 = vmul.f32 %v1842, %v1873
      %v1894 = vmul.f32 %v1844, %v1873
      %v1895 = vmul.f32 %v1846, %v1873
      %v1896 = vmul.f32 %v1848, %v1873
      %v1897 = vmul.f32 %v1850, %v1873
      %v1898 = vmul.f32 %v1852, %v1873
      %v1899 = vmul.f32 %v1854, %v1873
      %v1900 = vmul.f32 %v1856, %v1873
      %v1901 = vmul.f32 %v1858, %v1873
      %v1902 = vmul.f32 %v1860, %v1873
      %v1903 = vmul.f32 %v1862, %v1873
      %v1904 = vmul.f32 %v1864, %v1873
      %v1905 = vmul.f32 %v1866, %v1873
      %v1906 = vmul.f32 %v1771, %v1771
      %v1907 = vmul.f32 %v1772, %v1772
      %v1908 = vmul.f32 %v1773, %v1773
      %v1909 = vmul.f32 %v1774, %v1774
      %v1910 = vmul.f32 %v1775, %v1775
      %v1911 = vmul.f32 %v1776, %v1776
      %v1912 = vmul.f32 %v1777, %v1777
      %v1913 = vmul.f32 %v1778, %v1778
      %v1914 = vmul.f32 %v1779, %v1779
      %v1915 = vmul.f32 %v1780, %v1780
      %v1916 = vmul.f32 %v1781, %v1781
      %v1917 = vmul.f32 %v1782, %v1782
      %v1918 = vmul.f32 %v1783, %v1783
      %v1919 = vmul.f32 %v1784, %v1784
      %v1920 = vmul.f32 %v1785, %v1785
      %v1921 = vmul.f32 %v1786, %v1786
      %v1922 = vmul.f32 %v1787, %v1787
      %v1923 = vmul.f32 %v1788, %v1788
      %v1924 = vmul.f32 %v1789, %v1789
      %v1925 = vmul.f32 %v1790, %v1790
      %v1926 = vmul.f32 %v1791, %v1791
      %v1927 = vmul.f32 %v1792, %v1792
      %v1928 = vmul.f32 %v1793, %v1793
      %v1929 = vmul.f32 %v1794, %v1794
      %v1930 = vmul.f32 %v1795, %v1795
      %v1931 = vmul.f32 %v1796, %v1796
      %v1932 = vmul.f32 %v1797, %v1797
      %v1933 = vmul.f32 %v1798, %v1798
      %v1934 = vmul.f32 %v1799, %v1799
      %v1935 = vmul.f32 %v1800, %v1800
      %v1936 = vmul.f32 %v1801, %v1801
      %v1937 = vmul.f32 %v1802, %v1802
      %1938 = vadd.xlane.f32.xlu0 %v1906
      %v1939 = vpop.xlane.xlu0 %1938
      %1940 = vadd.xlane.f32.xlu0 %v1907
      %v1941 = vpop.xlane.xlu0 %1940
      %1942 = vadd.xlane.f32.xlu0 %v1908
      %v1943 = vpop.xlane.xlu0 %1942
      %1944 = vadd.xlane.f32.xlu0 %v1909
      %v1945 = vpop.xlane.xlu0 %1944
      %1946 = vadd.xlane.f32.xlu0 %v1910
      %v1947 = vpop.xlane.xlu0 %1946
      %1948 = vadd.xlane.f32.xlu0 %v1911
      %v1949 = vpop.xlane.xlu0 %1948
      %1950 = vadd.xlane.f32.xlu0 %v1912
      %v1951 = vpop.xlane.xlu0 %1950
      %1952 = vadd.xlane.f32.xlu0 %v1913
      %v1953 = vpop.xlane.xlu0 %1952
      %1954 = vadd.xlane.f32.xlu0 %v1914
      %v1955 = vpop.xlane.xlu0 %1954
      %1956 = vadd.xlane.f32.xlu0 %v1915
      %v1957 = vpop.xlane.xlu0 %1956
      %1958 = vadd.xlane.f32.xlu0 %v1916
      %v1959 = vpop.xlane.xlu0 %1958
      %1960 = vadd.xlane.f32.xlu0 %v1917
      %v1961 = vpop.xlane.xlu0 %1960
      %1962 = vadd.xlane.f32.xlu0 %v1918
      %v1963 = vpop.xlane.xlu0 %1962
      %1964 = vadd.xlane.f32.xlu0 %v1919
      %v1965 = vpop.xlane.xlu0 %1964
      %1966 = vadd.xlane.f32.xlu0 %v1920
      %v1967 = vpop.xlane.xlu0 %1966
      %1968 = vadd.xlane.f32.xlu0 %v1921
      %v1969 = vpop.xlane.xlu0 %1968
      %1970 = vadd.xlane.f32.xlu0 %v1922
      %v1971 = vpop.xlane.xlu0 %1970
      %1972 = vadd.xlane.f32.xlu0 %v1923
      %v1973 = vpop.xlane.xlu0 %1972
      %1974 = vadd.xlane.f32.xlu0 %v1924
      %v1975 = vpop.xlane.xlu0 %1974
      %1976 = vadd.xlane.f32.xlu0 %v1925
      %v1977 = vpop.xlane.xlu0 %1976
      %1978 = vadd.xlane.f32.xlu0 %v1926
      %v1979 = vpop.xlane.xlu0 %1978
      %1980 = vadd.xlane.f32.xlu0 %v1927
      %v1981 = vpop.xlane.xlu0 %1980
      %1982 = vadd.xlane.f32.xlu0 %v1928
      %v1983 = vpop.xlane.xlu0 %1982
      %1984 = vadd.xlane.f32.xlu0 %v1929
      %v1985 = vpop.xlane.xlu0 %1984
      %1986 = vadd.xlane.f32.xlu0 %v1930
      %v1987 = vpop.xlane.xlu0 %1986
      %1988 = vadd.xlane.f32.xlu0 %v1931
      %v1989 = vpop.xlane.xlu0 %1988
      %1990 = vadd.xlane.f32.xlu0 %v1932
      %v1991 = vpop.xlane.xlu0 %1990
      %1992 = vadd.xlane.f32.xlu0 %v1933
      %v1993 = vpop.xlane.xlu0 %1992
      %1994 = vadd.xlane.f32.xlu0 %v1934
      %v1995 = vpop.xlane.xlu0 %1994
      %1996 = vadd.xlane.f32.xlu0 %v1935
      %v1997 = vpop.xlane.xlu0 %1996
      %1998 = vadd.xlane.f32.xlu0 %v1936
      %v1999 = vpop.xlane.xlu0 %1998
      %2000 = vadd.xlane.f32.xlu0 %v1937
      %v2001 = vpop.xlane.xlu0 %2000
      %v2002 = vmul.f32 %v1939, %v1873
      %v2003 = vmul.f32 %v1941, %v1873
      %v2004 = vmul.f32 %v1943, %v1873
      %v2005 = vmul.f32 %v1945, %v1873
      %v2006 = vmul.f32 %v1947, %v1873
      %v2007 = vmul.f32 %v1949, %v1873
      %v2008 = vmul.f32 %v1951, %v1873
      %v2009 = vmul.f32 %v1953, %v1873
      %v2010 = vmul.f32 %v1955, %v1873
      %v2011 = vmul.f32 %v1957, %v1873
      %v2012 = vmul.f32 %v1959, %v1873
      %v2013 = vmul.f32 %v1961, %v1873
      %v2014 = vmul.f32 %v1963, %v1873
      %v2015 = vmul.f32 %v1965, %v1873
      %v2016 = vmul.f32 %v1967, %v1873
      %v2017 = vmul.f32 %v1969, %v1873
      %v2018 = vmul.f32 %v1971, %v1873
      %v2019 = vmul.f32 %v1973, %v1873
      %v2020 = vmul.f32 %v1975, %v1873
      %v2021 = vmul.f32 %v1977, %v1873
      %v2022 = vmul.f32 %v1979, %v1873
      %v2023 = vmul.f32 %v1981, %v1873
      %v2024 = vmul.f32 %v1983, %v1873
      %v2025 = vmul.f32 %v1985, %v1873
      %v2026 = vmul.f32 %v1987, %v1873
      %v2027 = vmul.f32 %v1989, %v1873
      %v2028 = vmul.f32 %v1991, %v1873
      %v2029 = vmul.f32 %v1993, %v1873
      %v2030 = vmul.f32 %v1995, %v1873
      %v2031 = vmul.f32 %v1997, %v1873
      %v2032 = vmul.f32 %v1999, %v1873
      %v2033 = vmul.f32 %v2001, %v1873
      %v2034 = vmul.f32 %v1874, %v1874
      %v2035 = vmul.f32 %v1875, %v1875
      %v2036 = vmul.f32 %v1876, %v1876
      %v2037 = vmul.f32 %v1877, %v1877
      %v2038 = vmul.f32 %v1878, %v1878
      %v2039 = vmul.f32 %v1879, %v1879
      %v2040 = vmul.f32 %v1880, %v1880
      %v2041 = vmul.f32 %v1881, %v1881
      %v2042 = vmul.f32 %v1882, %v1882
      %v2043 = vmul.f32 %v1883, %v1883
      %v2044 = vmul.f32 %v1884, %v1884
      %v2045 = vmul.f32 %v1885, %v1885
      %v2046 = vmul.f32 %v1886, %v1886
      %v2047 = vmul.f32 %v1887, %v1887
      %v2048 = vmul.f32 %v1888, %v1888
      %v2049 = vmul.f32 %v1889, %v1889
      %v2050 = vmul.f32 %v1890, %v1890
      %v2051 = vmul.f32 %v1891, %v1891
      %v2052 = vmul.f32 %v1892, %v1892
      %v2053 = vmul.f32 %v1893, %v1893
      %v2054 = vmul.f32 %v1894, %v1894
      %v2055 = vmul.f32 %v1895, %v1895
      %v2056 = vmul.f32 %v1896, %v1896
      %v2057 = vmul.f32 %v1897, %v1897
      %v2058 = vmul.f32 %v1898, %v1898
      %v2059 = vmul.f32 %v1899, %v1899
      %v2060 = vmul.f32 %v1900, %v1900
      %v2061 = vmul.f32 %v1901, %v1901
      %v2062 = vmul.f32 %v1902, %v1902
      %v2063 = vmul.f32 %v1903, %v1903
      %v2064 = vmul.f32 %v1904, %v1904
      %v2065 = vmul.f32 %v1905, %v1905
      %v2066 = vsub.f32 %v2002, %v2034
      %v2067 = vsub.f32 %v2003, %v2035
      %v2068 = vsub.f32 %v2004, %v2036
      %v2069 = vsub.f32 %v2005, %v2037
      %v2070 = vsub.f32 %v2006, %v2038
      %v2071 = vsub.f32 %v2007, %v2039
      %v2072 = vsub.f32 %v2008, %v2040
      %v2073 = vsub.f32 %v2009, %v2041
      %v2074 = vsub.f32 %v2010, %v2042
      %v2075 = vsub.f32 %v2011, %v2043
      %v2076 = vsub.f32 %v2012, %v2044
      %v2077 = vsub.f32 %v2013, %v2045
      %v2078 = vsub.f32 %v2014, %v2046
      %v2079 = vsub.f32 %v2015, %v2047
      %v2080 = vsub.f32 %v2016, %v2048
      %v2081 = vsub.f32 %v2017, %v2049
      %v2082 = vsub.f32 %v2018, %v2050
      %v2083 = vsub.f32 %v2019, %v2051
      %v2084 = vsub.f32 %v2020, %v2052
      %v2085 = vsub.f32 %v2021, %v2053
      %v2086 = vsub.f32 %v2022, %v2054
      %v2087 = vsub.f32 %v2023, %v2055
      %v2088 = vsub.f32 %v2024, %v2056
      %v2089 = vsub.f32 %v2025, %v2057
      %v2090 = vsub.f32 %v2026, %v2058
      %v2091 = vsub.f32 %v2027, %v2059
      %v2092 = vsub.f32 %v2028, %v2060
      %v2093 = vsub.f32 %v2029, %v2061
      %v2094 = vsub.f32 %v2030, %v2062
      %v2095 = vsub.f32 %v2031, %v2063
      %v2096 = vsub.f32 %v2032, %v2064
      %v2097 = vsub.f32 %v2033, %v2065
      %v2098 = vmax.f32 %v2066, 0.0
      %v2099 = vmax.f32 %v2067, 0.0
      %v2100 = vmax.f32 %v2068, 0.0
      %v2101 = vmax.f32 %v2069, 0.0
      %v2102 = vmax.f32 %v2070, 0.0
      %v2103 = vmax.f32 %v2071, 0.0
      %v2104 = vmax.f32 %v2072, 0.0
      %v2105 = vmax.f32 %v2073, 0.0
      %v2106 = vmax.f32 %v2074, 0.0
      %v2107 = vmax.f32 %v2075, 0.0
      %v2108 = vmax.f32 %v2076, 0.0
      %v2109 = vmax.f32 %v2077, 0.0
      %v2110 = vmax.f32 %v2078, 0.0
      %v2111 = vmax.f32 %v2079, 0.0
      %v2112 = vmax.f32 %v2080, 0.0
      %v2113 = vmax.f32 %v2081, 0.0
      %v2114 = vmax.f32 %v2082, 0.0
      %v2115 = vmax.f32 %v2083, 0.0
      %v2116 = vmax.f32 %v2084, 0.0
      %v2117 = vmax.f32 %v2085, 0.0
      %v2118 = vmax.f32 %v2086, 0.0
      %v2119 = vmax.f32 %v2087, 0.0
      %v2120 = vmax.f32 %v2088, 0.0
      %v2121 = vmax.f32 %v2089, 0.0
      %v2122 = vmax.f32 %v2090, 0.0
      %v2123 = vmax.f32 %v2091, 0.0
      %v2124 = vmax.f32 %v2092, 0.0
      %v2125 = vmax.f32 %v2093, 0.0
      %v2126 = vmax.f32 %v2094, 0.0
      %v2127 = vmax.f32 %v2095, 0.0
      %v2128 = vmax.f32 %v2096, 0.0
      %v2129 = vmax.f32 %v2097, 0.0
      %v2130 = vsub.f32 %v1771, %v1874
      %v2131 = vsub.f32 %v1772, %v1875
      %v2132 = vsub.f32 %v1773, %v1876
      %v2133 = vsub.f32 %v1774, %v1877
      %v2134 = vsub.f32 %v1775, %v1878
      %v2135 = vsub.f32 %v1776, %v1879
      %v2136 = vsub.f32 %v1777, %v1880
      %v2137 = vsub.f32 %v1778, %v1881
      %v2138 = vsub.f32 %v1779, %v1882
      %v2139 = vsub.f32 %v1780, %v1883
      %v2140 = vsub.f32 %v1781, %v1884
      %v2141 = vsub.f32 %v1782, %v1885
      %v2142 = vsub.f32 %v1783, %v1886
      %v2143 = vsub.f32 %v1784, %v1887
      %v2144 = vsub.f32 %v1785, %v1888
      %v2145 = vsub.f32 %v1786, %v1889
      %v2146 = vsub.f32 %v1787, %v1890
      %v2147 = vsub.f32 %v1788, %v1891
      %v2148 = vsub.f32 %v1789, %v1892
      %v2149 = vsub.f32 %v1790, %v1893
      %v2150 = vsub.f32 %v1791, %v1894
      %v2151 = vsub.f32 %v1792, %v1895
      %v2152 = vsub.f32 %v1793, %v1896
      %v2153 = vsub.f32 %v1794, %v1897
      %v2154 = vsub.f32 %v1795, %v1898
      %v2155 = vsub.f32 %v1796, %v1899
      %v2156 = vsub.f32 %v1797, %v1900
      %v2157 = vsub.f32 %v1798, %v1901
      %v2158 = vsub.f32 %v1799, %v1902
      %v2159 = vsub.f32 %v1800, %v1903
      %v2160 = vsub.f32 %v1801, %v1904
      %v2161 = vsub.f32 %v1802, %v1905
      %v2162 = vadd.f32 %v2098, 1e-05
      %v2163 = vadd.f32 %v2099, 1e-05
      %v2164 = vadd.f32 %v2100, 1e-05
      %v2165 = vadd.f32 %v2101, 1e-05
      %v2166 = vadd.f32 %v2102, 1e-05
      %v2167 = vadd.f32 %v2103, 1e-05
      %v2168 = vadd.f32 %v2104, 1e-05
      %v2169 = vadd.f32 %v2105, 1e-05
      %v2170 = vadd.f32 %v2106, 1e-05
      %v2171 = vadd.f32 %v2107, 1e-05
      %v2172 = vadd.f32 %v2108, 1e-05
      %v2173 = vadd.f32 %v2109, 1e-05
      %v2174 = vadd.f32 %v2110, 1e-05
      %v2175 = vadd.f32 %v2111, 1e-05
      %v2176 = vadd.f32 %v2112, 1e-05
      %v2177 = vadd.f32 %v2113, 1e-05
      %v2178 = vadd.f32 %v2114, 1e-05
      %v2179 = vadd.f32 %v2115, 1e-05
      %v2180 = vadd.f32 %v2116, 1e-05
      %v2181 = vadd.f32 %v2117, 1e-05
      %v2182 = vadd.f32 %v2118, 1e-05
      %v2183 = vadd.f32 %v2119, 1e-05
      %v2184 = vadd.f32 %v2120, 1e-05
      %v2185 = vadd.f32 %v2121, 1e-05
      %v2186 = vadd.f32 %v2122, 1e-05
      %v2187 = vadd.f32 %v2123, 1e-05
      %v2188 = vadd.f32 %v2124, 1e-05
      %v2189 = vadd.f32 %v2125, 1e-05
      %v2190 = vadd.f32 %v2126, 1e-05
      %v2191 = vadd.f32 %v2127, 1e-05
      %v2192 = vadd.f32 %v2128, 1e-05
      %v2193 = vadd.f32 %v2129, 1e-05
      %v2194 = vrsqrt.pop %v2162
      %v2195 = vmul.f32 %v2194, %v2162
      %v2196 = vmul.f32 %v2195, %v2194
      %v2197 = vmul.f32 0.5, %v2196
      %v2198 = vsub.f32 1.5, %v2197
      %v2199 = vmul.f32 %v2194, %v2198
      %vm2200 = vweird.f32 %v2162
      %vm2201 = vweird.f32 %v2194
      %vm2202 = vmor %vm2200, %vm2201
      %v2203 = vsel %vm2202, %v2194, %v2199
      %v2204 = vrsqrt.pop %v2163
      %v2205 = vmul.f32 %v2204, %v2163
      %v2206 = vmul.f32 %v2205, %v2204
      %v2207 = vmul.f32 0.5, %v2206
      %v2208 = vsub.f32 1.5, %v2207
      %v2209 = vmul.f32 %v2204, %v2208
      %vm2210 = vweird.f32 %v2163
      %vm2211 = vweird.f32 %v2204
      %vm2212 = vmor %vm2210, %vm2211
      %v2213 = vsel %vm2212, %v2204, %v2209
      %v2214 = vrsqrt.pop %v2164
      %v2215 = vmul.f32 %v2214, %v2164
      %v2216 = vmul.f32 %v2215, %v2214
      %v2217 = vmul.f32 0.5, %v2216
      %v2218 = vsub.f32 1.5, %v2217
      %v2219 = vmul.f32 %v2214, %v2218
      %vm2220 = vweird.f32 %v2164
      %vm2221 = vweird.f32 %v2214
      %vm2222 = vmor %vm2220, %vm2221
      %v2223 = vsel %vm2222, %v2214, %v2219
      %v2224 = vrsqrt.pop %v2165
      %v2225 = vmul.f32 %v2224, %v2165
      %v2226 = vmul.f32 %v2225, %v2224
      %v2227 = vmul.f32 0.5, %v2226
      %v2228 = vsub.f32 1.5, %v2227
      %v2229 = vmul.f32 %v2224, %v2228
      %vm2230 = vweird.f32 %v2165
      %vm2231 = vweird.f32 %v2224
      %vm2232 = vmor %vm2230, %vm2231
      %v2233 = vsel %vm2232, %v2224, %v2229
      %v2234 = vrsqrt.pop %v2166
      %v2235 = vmul.f32 %v2234, %v2166
      %v2236 = vmul.f32 %v2235, %v2234
      %v2237 = vmul.f32 0.5, %v2236
      %v2238 = vsub.f32 1.5, %v2237
      %v2239 = vmul.f32 %v2234, %v2238
      %vm2240 = vweird.f32 %v2166
      %vm2241 = vweird.f32 %v2234
      %vm2242 = vmor %vm2240, %vm2241
      %v2243 = vsel %vm2242, %v2234, %v2239
      %v2244 = vrsqrt.pop %v2167
      %v2245 = vmul.f32 %v2244, %v2167
      %v2246 = vmul.f32 %v2245, %v2244
      %v2247 = vmul.f32 0.5, %v2246
      %v2248 = vsub.f32 1.5, %v2247
      %v2249 = vmul.f32 %v2244, %v2248
      %vm2250 = vweird.f32 %v2167
      %vm2251 = vweird.f32 %v2244
      %vm2252 = vmor %vm2250, %vm2251
      %v2253 = vsel %vm2252, %v2244, %v2249
      %v2254 = vrsqrt.pop %v2168
      %v2255 = vmul.f32 %v2254, %v2168
      %v2256 = vmul.f32 %v2255, %v2254
      %v2257 = vmul.f32 0.5, %v2256
      %v2258 = vsub.f32 1.5, %v2257
      %v2259 = vmul.f32 %v2254, %v2258
      %vm2260 = vweird.f32 %v2168
      %vm2261 = vweird.f32 %v2254
      %vm2262 = vmor %vm2260, %vm2261
      %v2263 = vsel %vm2262, %v2254, %v2259
      %v2264 = vrsqrt.pop %v2169
      %v2265 = vmul.f32 %v2264, %v2169
      %v2266 = vmul.f32 %v2265, %v2264
      %v2267 = vmul.f32 0.5, %v2266
      %v2268 = vsub.f32 1.5, %v2267
      %v2269 = vmul.f32 %v2264, %v2268
      %vm2270 = vweird.f32 %v2169
      %vm2271 = vweird.f32 %v2264
      %vm2272 = vmor %vm2270, %vm2271
      %v2273 = vsel %vm2272, %v2264, %v2269
      %v2274 = vrsqrt.pop %v2170
      %v2275 = vmul.f32 %v2274, %v2170
      %v2276 = vmul.f32 %v2275, %v2274
      %v2277 = vmul.f32 0.5, %v2276
      %v2278 = vsub.f32 1.5, %v2277
      %v2279 = vmul.f32 %v2274, %v2278
      %vm2280 = vweird.f32 %v2170
      %vm2281 = vweird.f32 %v2274
      %vm2282 = vmor %vm2280, %vm2281
      %v2283 = vsel %vm2282, %v2274, %v2279
      %v2284 = vrsqrt.pop %v2171
      %v2285 = vmul.f32 %v2284, %v2171
      %v2286 = vmul.f32 %v2285, %v2284
      %v2287 = vmul.f32 0.5, %v2286
      %v2288 = vsub.f32 1.5, %v2287
      %v2289 = vmul.f32 %v2284, %v2288
      %vm2290 = vweird.f32 %v2171
      %vm2291 = vweird.f32 %v2284
      %vm2292 = vmor %vm2290, %vm2291
      %v2293 = vsel %vm2292, %v2284, %v2289
      %v2294 = vrsqrt.pop %v2172
      %v2295 = vmul.f32 %v2294, %v2172
      %v2296 = vmul.f32 %v2295, %v2294
      %v2297 = vmul.f32 0.5, %v2296
      %v2298 = vsub.f32 1.5, %v2297
      %v2299 = vmul.f32 %v2294, %v2298
      %vm2300 = vweird.f32 %v2172
      %vm2301 = vweird.f32 %v2294
      %vm2302 = vmor %vm2300, %vm2301
      %v2303 = vsel %vm2302, %v2294, %v2299
      %v2304 = vrsqrt.pop %v2173
      %v2305 = vmul.f32 %v2304, %v2173
      %v2306 = vmul.f32 %v2305, %v2304
      %v2307 = vmul.f32 0.5, %v2306
      %v2308 = vsub.f32 1.5, %v2307
      %v2309 = vmul.f32 %v2304, %v2308
      %vm2310 = vweird.f32 %v2173
      %vm2311 = vweird.f32 %v2304
      %vm2312 = vmor %vm2310, %vm2311
      %v2313 = vsel %vm2312, %v2304, %v2309
      %v2314 = vrsqrt.pop %v2174
      %v2315 = vmul.f32 %v2314, %v2174
      %v2316 = vmul.f32 %v2315, %v2314
      %v2317 = vmul.f32 0.5, %v2316
      %v2318 = vsub.f32 1.5, %v2317
      %v2319 = vmul.f32 %v2314, %v2318
      %vm2320 = vweird.f32 %v2174
      %vm2321 = vweird.f32 %v2314
      %vm2322 = vmor %vm2320, %vm2321
      %v2323 = vsel %vm2322, %v2314, %v2319
      %v2324 = vrsqrt.pop %v2175
      %v2325 = vmul.f32 %v2324, %v2175
      %v2326 = vmul.f32 %v2325, %v2324
      %v2327 = vmul.f32 0.5, %v2326
      %v2328 = vsub.f32 1.5, %v2327
      %v2329 = vmul.f32 %v2324, %v2328
      %vm2330 = vweird.f32 %v2175
      %vm2331 = vweird.f32 %v2324
      %vm2332 = vmor %vm2330, %vm2331
      %v2333 = vsel %vm2332, %v2324, %v2329
      %v2334 = vrsqrt.pop %v2176
      %v2335 = vmul.f32 %v2334, %v2176
      %v2336 = vmul.f32 %v2335, %v2334
      %v2337 = vmul.f32 0.5, %v2336
      %v2338 = vsub.f32 1.5, %v2337
      %v2339 = vmul.f32 %v2334, %v2338
      %vm2340 = vweird.f32 %v2176
      %vm2341 = vweird.f32 %v2334
      %vm2342 = vmor %vm2340, %vm2341
      %v2343 = vsel %vm2342, %v2334, %v2339
      %v2344 = vrsqrt.pop %v2177
      %v2345 = vmul.f32 %v2344, %v2177
      %v2346 = vmul.f32 %v2345, %v2344
      %v2347 = vmul.f32 0.5, %v2346
      %v2348 = vsub.f32 1.5, %v2347
      %v2349 = vmul.f32 %v2344, %v2348
      %vm2350 = vweird.f32 %v2177
      %vm2351 = vweird.f32 %v2344
      %vm2352 = vmor %vm2350, %vm2351
      %v2353 = vsel %vm2352, %v2344, %v2349
      %v2354 = vrsqrt.pop %v2178
      %v2355 = vmul.f32 %v2354, %v2178
      %v2356 = vmul.f32 %v2355, %v2354
      %v2357 = vmul.f32 0.5, %v2356
      %v2358 = vsub.f32 1.5, %v2357
      %v2359 = vmul.f32 %v2354, %v2358
      %vm2360 = vweird.f32 %v2178
      %vm2361 = vweird.f32 %v2354
      %vm2362 = vmor %vm2360, %vm2361
      %v2363 = vsel %vm2362, %v2354, %v2359
      %v2364 = vrsqrt.pop %v2179
      %v2365 = vmul.f32 %v2364, %v2179
      %v2366 = vmul.f32 %v2365, %v2364
      %v2367 = vmul.f32 0.5, %v2366
      %v2368 = vsub.f32 1.5, %v2367
      %v2369 = vmul.f32 %v2364, %v2368
      %vm2370 = vweird.f32 %v2179
      %vm2371 = vweird.f32 %v2364
      %vm2372 = vmor %vm2370, %vm2371
      %v2373 = vsel %vm2372, %v2364, %v2369
      %v2374 = vrsqrt.pop %v2180
      %v2375 = vmul.f32 %v2374, %v2180
      %v2376 = vmul.f32 %v2375, %v2374
      %v2377 = vmul.f32 0.5, %v2376
      %v2378 = vsub.f32 1.5, %v2377
      %v2379 = vmul.f32 %v2374, %v2378
      %vm2380 = vweird.f32 %v2180
      %vm2381 = vweird.f32 %v2374
      %vm2382 = vmor %vm2380, %vm2381
      %v2383 = vsel %vm2382, %v2374, %v2379
      %v2384 = vrsqrt.pop %v2181
      %v2385 = vmul.f32 %v2384, %v2181
      %v2386 = vmul.f32 %v2385, %v2384
      %v2387 = vmul.f32 0.5, %v2386
      %v2388 = vsub.f32 1.5, %v2387
      %v2389 = vmul.f32 %v2384, %v2388
      %vm2390 = vweird.f32 %v2181
      %vm2391 = vweird.f32 %v2384
      %vm2392 = vmor %vm2390, %vm2391
      %v2393 = vsel %vm2392, %v2384, %v2389
      %v2394 = vrsqrt.pop %v2182
      %v2395 = vmul.f32 %v2394, %v2182
      %v2396 = vmul.f32 %v2395, %v2394
      %v2397 = vmul.f32 0.5, %v2396
      %v2398 = vsub.f32 1.5, %v2397
      %v2399 = vmul.f32 %v2394, %v2398
      %vm2400 = vweird.f32 %v2182
      %vm2401 = vweird.f32 %v2394
      %vm2402 = vmor %vm2400, %vm2401
      %v2403 = vsel %vm2402, %v2394, %v2399
      %v2404 = vrsqrt.pop %v2183
      %v2405 = vmul.f32 %v2404, %v2183
      %v2406 = vmul.f32 %v2405, %v2404
      %v2407 = vmul.f32 0.5, %v2406
      %v2408 = vsub.f32 1.5, %v2407
      %v2409 = vmul.f32 %v2404, %v2408
      %vm2410 = vweird.f32 %v2183
      %vm2411 = vweird.f32 %v2404
      %vm2412 = vmor %vm2410, %vm2411
      %v2413 = vsel %vm2412, %v2404, %v2409
      %v2414 = vrsqrt.pop %v2184
      %v2415 = vmul.f32 %v2414, %v2184
      %v2416 = vmul.f32 %v2415, %v2414
      %v2417 = vmul.f32 0.5, %v2416
      %v2418 = vsub.f32 1.5, %v2417
      %v2419 = vmul.f32 %v2414, %v2418
      %vm2420 = vweird.f32 %v2184
      %vm2421 = vweird.f32 %v2414
      %vm2422 = vmor %vm2420, %vm2421
      %v2423 = vsel %vm2422, %v2414, %v2419
      %v2424 = vrsqrt.pop %v2185
      %v2425 = vmul.f32 %v2424, %v2185
      %v2426 = vmul.f32 %v2425, %v2424
      %v2427 = vmul.f32 0.5, %v2426
      %v2428 = vsub.f32 1.5, %v2427
      %v2429 = vmul.f32 %v2424, %v2428
      %vm2430 = vweird.f32 %v2185
      %vm2431 = vweird.f32 %v2424
      %vm2432 = vmor %vm2430, %vm2431
      %v2433 = vsel %vm2432, %v2424, %v2429
      %v2434 = vrsqrt.pop %v2186
      %v2435 = vmul.f32 %v2434, %v2186
      %v2436 = vmul.f32 %v2435, %v2434
      %v2437 = vmul.f32 0.5, %v2436
      %v2438 = vsub.f32 1.5, %v2437
      %v2439 = vmul.f32 %v2434, %v2438
      %vm2440 = vweird.f32 %v2186
      %vm2441 = vweird.f32 %v2434
      %vm2442 = vmor %vm2440, %vm2441
      %v2443 = vsel %vm2442, %v2434, %v2439
      %v2444 = vrsqrt.pop %v2187
      %v2445 = vmul.f32 %v2444, %v2187
      %v2446 = vmul.f32 %v2445, %v2444
      %v2447 = vmul.f32 0.5, %v2446
      %v2448 = vsub.f32 1.5, %v2447
      %v2449 = vmul.f32 %v2444, %v2448
      %vm2450 = vweird.f32 %v2187
      %vm2451 = vweird.f32 %v2444
      %vm2452 = vmor %vm2450, %vm2451
      %v2453 = vsel %vm2452, %v2444, %v2449
      %v2454 = vrsqrt.pop %v2188
      %v2455 = vmul.f32 %v2454, %v2188
      %v2456 = vmul.f32 %v2455, %v2454
      %v2457 = vmul.f32 0.5, %v2456
      %v2458 = vsub.f32 1.5, %v2457
      %v2459 = vmul.f32 %v2454, %v2458
      %vm2460 = vweird.f32 %v2188
      %vm2461 = vweird.f32 %v2454
      %vm2462 = vmor %vm2460, %vm2461
      %v2463 = vsel %vm2462, %v2454, %v2459
      %v2464 = vrsqrt.pop %v2189
      %v2465 = vmul.f32 %v2464, %v2189
      %v2466 = vmul.f32 %v2465, %v2464
      %v2467 = vmul.f32 0.5, %v2466
      %v2468 = vsub.f32 1.5, %v2467
      %v2469 = vmul.f32 %v2464, %v2468
      %vm2470 = vweird.f32 %v2189
      %vm2471 = vweird.f32 %v2464
      %vm2472 = vmor %vm2470, %vm2471
      %v2473 = vsel %vm2472, %v2464, %v2469
      %v2474 = vrsqrt.pop %v2190
      %v2475 = vmul.f32 %v2474, %v2190
      %v2476 = vmul.f32 %v2475, %v2474
      %v2477 = vmul.f32 0.5, %v2476
      %v2478 = vsub.f32 1.5, %v2477
      %v2479 = vmul.f32 %v2474, %v2478
      %vm2480 = vweird.f32 %v2190
      %vm2481 = vweird.f32 %v2474
      %vm2482 = vmor %vm2480, %vm2481
      %v2483 = vsel %vm2482, %v2474, %v2479
      %v2484 = vrsqrt.pop %v2191
      %v2485 = vmul.f32 %v2484, %v2191
      %v2486 = vmul.f32 %v2485, %v2484
      %v2487 = vmul.f32 0.5, %v2486
      %v2488 = vsub.f32 1.5, %v2487
      %v2489 = vmul.f32 %v2484, %v2488
      %vm2490 = vweird.f32 %v2191
      %vm2491 = vweird.f32 %v2484
      %vm2492 = vmor %vm2490, %vm2491
      %v2493 = vsel %vm2492, %v2484, %v2489
      %v2494 = vrsqrt.pop %v2192
      %v2495 = vmul.f32 %v2494, %v2192
      %v2496 = vmul.f32 %v2495, %v2494
      %v2497 = vmul.f32 0.5, %v2496
      %v2498 = vsub.f32 1.5, %v2497
      %v2499 = vmul.f32 %v2494, %v2498
      %vm2500 = vweird.f32 %v2192
      %vm2501 = vweird.f32 %v2494
      %vm2502 = vmor %vm2500, %vm2501
      %v2503 = vsel %vm2502, %v2494, %v2499
      %v2504 = vrsqrt.pop %v2193
      %v2505 = vmul.f32 %v2504, %v2193
      %v2506 = vmul.f32 %v2505, %v2504
      %v2507 = vmul.f32 0.5, %v2506
      %v2508 = vsub.f32 1.5, %v2507
      %v2509 = vmul.f32 %v2504, %v2508
      %vm2510 = vweird.f32 %v2193
      %vm2511 = vweird.f32 %v2504
      %vm2512 = vmor %vm2510, %vm2511
      %v2513 = vsel %vm2512, %v2504, %v2509
      %v2514 = vmul.f32 %v2130, %v2203
      %v2515 = vmul.f32 %v2131, %v2213
      %v2516 = vmul.f32 %v2132, %v2223
      %v2517 = vmul.f32 %v2133, %v2233
      %v2518 = vmul.f32 %v2134, %v2243
      %v2519 = vmul.f32 %v2135, %v2253
      %v2520 = vmul.f32 %v2136, %v2263
      %v2521 = vmul.f32 %v2137, %v2273
      %v2522 = vmul.f32 %v2138, %v2283
      %v2523 = vmul.f32 %v2139, %v2293
      %v2524 = vmul.f32 %v2140, %v2303
      %v2525 = vmul.f32 %v2141, %v2313
      %v2526 = vmul.f32 %v2142, %v2323
      %v2527 = vmul.f32 %v2143, %v2333
      %v2528 = vmul.f32 %v2144, %v2343
      %v2529 = vmul.f32 %v2145, %v2353
      %v2530 = vmul.f32 %v2146, %v2363
      %v2531 = vmul.f32 %v2147, %v2373
      %v2532 = vmul.f32 %v2148, %v2383
      %v2533 = vmul.f32 %v2149, %v2393
      %v2534 = vmul.f32 %v2150, %v2403
      %v2535 = vmul.f32 %v2151, %v2413
      %v2536 = vmul.f32 %v2152, %v2423
      %v2537 = vmul.f32 %v2153, %v2433
      %v2538 = vmul.f32 %v2154, %v2443
      %v2539 = vmul.f32 %v2155, %v2453
      %v2540 = vmul.f32 %v2156, %v2463
      %v2541 = vmul.f32 %v2157, %v2473
      %v2542 = vmul.f32 %v2158, %v2483
      %v2543 = vmul.f32 %v2159, %v2493
      %v2544 = vmul.f32 %v2160, %v2503
      %v2545 = vmul.f32 %v2161, %v2513
      %v2546 = vperm.slane %v361, 2
      %v2547 = vmul.f32 %v2514, %v2546
      %v2548 = vmul.f32 %v2515, %v2546
      %v2549 = vmul.f32 %v2516, %v2546
      %v2550 = vmul.f32 %v2517, %v2546
      %v2551 = vmul.f32 %v2518, %v2546
      %v2552 = vmul.f32 %v2519, %v2546
      %v2553 = vmul.f32 %v2520, %v2546
      %v2554 = vmul.f32 %v2521, %v2546
      %v2555 = vmul.f32 %v2522, %v2546
      %v2556 = vmul.f32 %v2523, %v2546
      %v2557 = vmul.f32 %v2524, %v2546
      %v2558 = vmul.f32 %v2525, %v2546
      %v2559 = vmul.f32 %v2526, %v2546
      %v2560 = vmul.f32 %v2527, %v2546
      %v2561 = vmul.f32 %v2528, %v2546
      %v2562 = vmul.f32 %v2529, %v2546
      %v2563 = vmul.f32 %v2530, %v2546
      %v2564 = vmul.f32 %v2531, %v2546
      %v2565 = vmul.f32 %v2532, %v2546
      %v2566 = vmul.f32 %v2533, %v2546
      %v2567 = vmul.f32 %v2534, %v2546
      %v2568 = vmul.f32 %v2535, %v2546
      %v2569 = vmul.f32 %v2536, %v2546
      %v2570 = vmul.f32 %v2537, %v2546
      %v2571 = vmul.f32 %v2538, %v2546
      %v2572 = vmul.f32 %v2539, %v2546
      %v2573 = vmul.f32 %v2540, %v2546
      %v2574 = vmul.f32 %v2541, %v2546
      %v2575 = vmul.f32 %v2542, %v2546
      %v2576 = vmul.f32 %v2543, %v2546
      %v2577 = vmul.f32 %v2544, %v2546
      %v2578 = vmul.f32 %v2545, %v2546
      %v2579 = vperm.slane %v361, 3
      %v2580 = vadd.f32 %v2547, %v2579
      %v2581 = vadd.f32 %v2548, %v2579
      %v2582 = vadd.f32 %v2549, %v2579
      %v2583 = vadd.f32 %v2550, %v2579
      %v2584 = vadd.f32 %v2551, %v2579
      %v2585 = vadd.f32 %v2552, %v2579
      %v2586 = vadd.f32 %v2553, %v2579
      %v2587 = vadd.f32 %v2554, %v2579
      %v2588 = vadd.f32 %v2555, %v2579
      %v2589 = vadd.f32 %v2556, %v2579
      %v2590 = vadd.f32 %v2557, %v2579
      %v2591 = vadd.f32 %v2558, %v2579
      %v2592 = vadd.f32 %v2559, %v2579
      %v2593 = vadd.f32 %v2560, %v2579
      %v2594 = vadd.f32 %v2561, %v2579
      %v2595 = vadd.f32 %v2562, %v2579
      %v2596 = vadd.f32 %v2563, %v2579
      %v2597 = vadd.f32 %v2564, %v2579
      %v2598 = vadd.f32 %v2565, %v2579
      %v2599 = vadd.f32 %v2566, %v2579
      %v2600 = vadd.f32 %v2567, %v2579
      %v2601 = vadd.f32 %v2568, %v2579
      %v2602 = vadd.f32 %v2569, %v2579
      %v2603 = vadd.f32 %v2570, %v2579
      %v2604 = vadd.f32 %v2571, %v2579
      %v2605 = vadd.f32 %v2572, %v2579
      %v2606 = vadd.f32 %v2573, %v2579
      %v2607 = vadd.f32 %v2574, %v2579
      %v2608 = vadd.f32 %v2575, %v2579
      %v2609 = vadd.f32 %v2576, %v2579
      %v2610 = vadd.f32 %v2577, %v2579
      %v2611 = vadd.f32 %v2578, %v2579
      %v2612 = vmax.f32 %v2580, 0.0
      %v2613 = vmax.f32 %v2581, 0.0
      %v2614 = vmax.f32 %v2582, 0.0
      %v2615 = vmax.f32 %v2583, 0.0
      %v2616 = vmax.f32 %v2584, 0.0
      %v2617 = vmax.f32 %v2585, 0.0
      %v2618 = vmax.f32 %v2586, 0.0
      %v2619 = vmax.f32 %v2587, 0.0
      %v2620 = vmax.f32 %v2588, 0.0
      %v2621 = vmax.f32 %v2589, 0.0
      %v2622 = vmax.f32 %v2590, 0.0
      %v2623 = vmax.f32 %v2591, 0.0
      %v2624 = vmax.f32 %v2592, 0.0
      %v2625 = vmax.f32 %v2593, 0.0
      %v2626 = vmax.f32 %v2594, 0.0
      %v2627 = vmax.f32 %v2595, 0.0
      %v2628 = vmax.f32 %v2596, 0.0
      %v2629 = vmax.f32 %v2597, 0.0
      %v2630 = vmax.f32 %v2598, 0.0
      %v2631 = vmax.f32 %v2599, 0.0
      %v2632 = vmax.f32 %v2600, 0.0
      %v2633 = vmax.f32 %v2601, 0.0
      %v2634 = vmax.f32 %v2602, 0.0
      %v2635 = vmax.f32 %v2603, 0.0
      %v2636 = vmax.f32 %v2604, 0.0
      %v2637 = vmax.f32 %v2605, 0.0
      %v2638 = vmax.f32 %v2606, 0.0
      %v2639 = vmax.f32 %v2607, 0.0
      %v2640 = vmax.f32 %v2608, 0.0
      %v2641 = vmax.f32 %v2609, 0.0
      %v2642 = vmax.f32 %v2610, 0.0
      %v2643 = vmax.f32 %v2611, 0.0
      %v2644 = vpack.c.bf16 %v2613, %v2612
      %v2645 = vpack.c.bf16 %v2615, %v2614
      %v2646 = vpack.c.bf16 %v2617, %v2616
      %v2647 = vpack.c.bf16 %v2619, %v2618
      %v2648 = vpack.c.bf16 %v2621, %v2620
      %v2649 = vpack.c.bf16 %v2623, %v2622
      %v2650 = vpack.c.bf16 %v2625, %v2624
      %v2651 = vpack.c.bf16 %v2627, %v2626
      %v2652 = vpack.c.bf16 %v2629, %v2628
      %v2653 = vpack.c.bf16 %v2631, %v2630
      %v2654 = vpack.c.bf16 %v2633, %v2632
      %v2655 = vpack.c.bf16 %v2635, %v2634
      %v2656 = vpack.c.bf16 %v2637, %v2636
      %v2657 = vpack.c.bf16 %v2639, %v2638
      %v2658 = vpack.c.bf16 %v2641, %v2640
      %v2659 = vpack.c.bf16 %v2643, %v2642
      %v2660 = vld [vmem:[%s6] sm:$0xf]
      %v2661 = vld [vmem:[%s6 + $0x4] sm:$0xf]
      %v2662 = vld [vmem:[%s6 + $0x8] sm:$0xf]
      %v2663 = vld [vmem:[%s6 + $0xc] sm:$0xf]
      %v2664 = vld [vmem:[%s6 + $0x10] sm:$0xf]
      %v2665 = vld [vmem:[%s6 + $0x14] sm:$0xf]
      %v2666 = vld [vmem:[%s6 + $0x18] sm:$0xf]
      %v2667 = vld [vmem:[%s6 + $0x1c] sm:$0xf]
      %v2668 = vld [vmem:[%s6 + $0x20] sm:$0xf]
      %v2669 = vld [vmem:[%s6 + $0x24] sm:$0xf]
      %v2670 = vld [vmem:[%s6 + $0x28] sm:$0xf]
      %v2671 = vld [vmem:[%s6 + $0x2c] sm:$0xf]
      %v2672 = vld [vmem:[%s6 + $0x30] sm:$0xf]
      %v2673 = vld [vmem:[%s6 + $0x34] sm:$0xf]
      %v2674 = vld [vmem:[%s6 + $0x38] sm:$0xf]
      %v2675 = vld [vmem:[%s6 + $0x3c] sm:$0xf]
      %v2676 = vperm.slane %v361, 4
      %v2693 = vunpack.c.l.b16 %v2660
      %v2694 = vunpack.c.l.b16 %v2661
      %v2695 = vunpack.c.l.b16 %v2662
      %v2696 = vunpack.c.l.b16 %v2663
      %v2697 = vunpack.c.l.b16 %v2664
      %v2698 = vunpack.c.l.b16 %v2665
      %v2699 = vunpack.c.l.b16 %v2666
      %v2700 = vunpack.c.l.b16 %v2667
      %v2701 = vunpack.c.l.b16 %v2668
      %v2702 = vunpack.c.l.b16 %v2669
      %v2703 = vunpack.c.l.b16 %v2670
      %v2704 = vunpack.c.l.b16 %v2671
      %v2705 = vunpack.c.l.b16 %v2672
      %v2706 = vunpack.c.l.b16 %v2673
      %v2707 = vunpack.c.l.b16 %v2674
      %v2708 = vunpack.c.l.b16 %v2675
      %v2709 = vpack.c.b16 %v2694, %v2693
      %v2710 = vpack.c.b16 %v2696, %v2695
      %v2711 = vpack.c.b16 %v2698, %v2697
      %v2712 = vpack.c.b16 %v2700, %v2699
      %v2713 = vpack.c.b16 %v2702, %v2701
      %v2714 = vpack.c.b16 %v2704, %v2703
      %v2715 = vpack.c.b16 %v2706, %v2705
      %v2716 = vpack.c.b16 %v2708, %v2707
      %2725 = vmatpush.bf16.msra.mxu0 %v2716
      %2726 = vmatpush.bf16.msra.mxu0 %v2715
      %2727 = vmatpush.bf16.msra.mxu0 %v2714
      %2728 = vmatpush.bf16.msra.mxu0 %v2713
      %2729 = vmatpush.bf16.msra.mxu0 %v2712
      %2730 = vmatpush.bf16.msra.mxu0 %v2711
      %2731 = vmatpush.bf16.msra.mxu0 %v2710
      %2732 = vmatpush.bf16.msra.mxu0 %v2709
      %2733 = vmatmul.bf16.gmra.mxu0 %v2644
      %v2734 = vpop.f32.mrf.mxu0
      %v2735 = vadd.f32 %v2676, %v2734
      %v2736 = vpop.f32.mrf.mxu0
      %v2737 = vadd.f32 %v2676, %v2736
      %2738 = vmatmul.bf16.gmra.mxu0 %v2645
      %v2739 = vpop.f32.mrf.mxu0
      %v2740 = vadd.f32 %v2676, %v2739
      %v2741 = vpop.f32.mrf.mxu0
      %v2742 = vadd.f32 %v2676, %v2741
      %2743 = vmatmul.bf16.gmra.mxu0 %v2646
      %v2744 = vpop.f32.mrf.mxu0
      %v2745 = vadd.f32 %v2676, %v2744
      %v2746 = vpop.f32.mrf.mxu0
      %v2747 = vadd.f32 %v2676, %v2746
      %2748 = vmatmul.bf16.gmra.mxu0 %v2647
      %v2749 = vpop.f32.mrf.mxu0
      %v2750 = vadd.f32 %v2676, %v2749
      %v2751 = vpop.f32.mrf.mxu0
      %v2752 = vadd.f32 %v2676, %v2751
      %2753 = vmatmul.bf16.gmra.mxu0 %v2648
      %v2754 = vpop.f32.mrf.mxu0
      %v2755 = vadd.f32 %v2676, %v2754
      %v2756 = vpop.f32.mrf.mxu0
      %v2757 = vadd.f32 %v2676, %v2756
      %2758 = vmatmul.bf16.gmra.mxu0 %v2649
      %v2759 = vpop.f32.mrf.mxu0
      %v2760 = vadd.f32 %v2676, %v2759
      %v2761 = vpop.f32.mrf.mxu0
      %v2762 = vadd.f32 %v2676, %v2761
      %2763 = vmatmul.bf16.gmra.mxu0 %v2650
      %v2764 = vpop.f32.mrf.mxu0
      %v2765 = vadd.f32 %v2676, %v2764
      %v2766 = vpop.f32.mrf.mxu0
      %v2767 = vadd.f32 %v2676, %v2766
      %2768 = vmatmul.bf16.gmra.mxu0 %v2651
      %v2769 = vpop.f32.mrf.mxu0
      %v2770 = vadd.f32 %v2676, %v2769
      %v2771 = vpop.f32.mrf.mxu0
      %v2772 = vadd.f32 %v2676, %v2771
      %2773 = vmatmul.bf16.gmra.mxu0 %v2652
      %v2774 = vpop.f32.mrf.mxu0
      %v2775 = vadd.f32 %v2676, %v2774
      %v2776 = vpop.f32.mrf.mxu0
      %v2777 = vadd.f32 %v2676, %v2776
      %2778 = vmatmul.bf16.gmra.mxu0 %v2653
      %v2779 = vpop.f32.mrf.mxu0
      %v2780 = vadd.f32 %v2676, %v2779
      %v2781 = vpop.f32.mrf.mxu0
      %v2782 = vadd.f32 %v2676, %v2781
      %2783 = vmatmul.bf16.gmra.mxu0 %v2654
      %v2784 = vpop.f32.mrf.mxu0
      %v2785 = vadd.f32 %v2676, %v2784
      %v2786 = vpop.f32.mrf.mxu0
      %v2787 = vadd.f32 %v2676, %v2786
      %2788 = vmatmul.bf16.gmra.mxu0 %v2655
      %v2789 = vpop.f32.mrf.mxu0
      %v2790 = vadd.f32 %v2676, %v2789
      %v2791 = vpop.f32.mrf.mxu0
      %v2792 = vadd.f32 %v2676, %v2791
      %2793 = vmatmul.bf16.gmra.mxu0 %v2656
      %v2794 = vpop.f32.mrf.mxu0
      %v2795 = vadd.f32 %v2676, %v2794
      %v2796 = vpop.f32.mrf.mxu0
      %v2797 = vadd.f32 %v2676, %v2796
      %2798 = vmatmul.bf16.gmra.mxu0 %v2657
      %v2799 = vpop.f32.mrf.mxu0
      %v2800 = vadd.f32 %v2676, %v2799
      %v2801 = vpop.f32.mrf.mxu0
      %v2802 = vadd.f32 %v2676, %v2801
      %2803 = vmatmul.bf16.gmra.mxu0 %v2658
      %v2804 = vpop.f32.mrf.mxu0
      %v2805 = vadd.f32 %v2676, %v2804
      %v2806 = vpop.f32.mrf.mxu0
      %v2807 = vadd.f32 %v2676, %v2806
      %2808 = vmatmul.bf16.gmra.mxu0 %v2659
      %v2809 = vpop.f32.mrf.mxu0
      %v2810 = vadd.f32 %v2676, %v2809
      %v2811 = vpop.f32.mrf.mxu0
      %v2812 = vadd.f32 %v2676, %v2811
      %2813 = vdwg.mxu0
      %2814 = vadd.xlane.f32.xlu0 %v2735
      %v2815 = vpop.xlane.xlu0 %2814
      %2816 = vadd.xlane.f32.xlu0 %v2737
      %v2817 = vpop.xlane.xlu0 %2816
      %2818 = vadd.xlane.f32.xlu0 %v2740
      %v2819 = vpop.xlane.xlu0 %2818
      %2820 = vadd.xlane.f32.xlu0 %v2742
      %v2821 = vpop.xlane.xlu0 %2820
      %2822 = vadd.xlane.f32.xlu0 %v2745
      %v2823 = vpop.xlane.xlu0 %2822
      %2824 = vadd.xlane.f32.xlu0 %v2747
      %v2825 = vpop.xlane.xlu0 %2824
      %2826 = vadd.xlane.f32.xlu0 %v2750
      %v2827 = vpop.xlane.xlu0 %2826
      %2828 = vadd.xlane.f32.xlu0 %v2752
      %v2829 = vpop.xlane.xlu0 %2828
      %2830 = vadd.xlane.f32.xlu0 %v2755
      %v2831 = vpop.xlane.xlu0 %2830
      %2832 = vadd.xlane.f32.xlu0 %v2757
      %v2833 = vpop.xlane.xlu0 %2832
      %2834 = vadd.xlane.f32.xlu0 %v2760
      %v2835 = vpop.xlane.xlu0 %2834
      %2836 = vadd.xlane.f32.xlu0 %v2762
      %v2837 = vpop.xlane.xlu0 %2836
      %2838 = vadd.xlane.f32.xlu0 %v2765
      %v2839 = vpop.xlane.xlu0 %2838
      %2840 = vadd.xlane.f32.xlu0 %v2767
      %v2841 = vpop.xlane.xlu0 %2840
      %2842 = vadd.xlane.f32.xlu0 %v2770
      %v2843 = vpop.xlane.xlu0 %2842
      %2844 = vadd.xlane.f32.xlu0 %v2772
      %v2845 = vpop.xlane.xlu0 %2844
      %2846 = vadd.xlane.f32.xlu0 %v2775
      %v2847 = vpop.xlane.xlu0 %2846
      %2848 = vadd.xlane.f32.xlu0 %v2777
      %v2849 = vpop.xlane.xlu0 %2848
      %2850 = vadd.xlane.f32.xlu0 %v2780
      %v2851 = vpop.xlane.xlu0 %2850
      %2852 = vadd.xlane.f32.xlu0 %v2782
      %v2853 = vpop.xlane.xlu0 %2852
      %2854 = vadd.xlane.f32.xlu0 %v2785
      %v2855 = vpop.xlane.xlu0 %2854
      %2856 = vadd.xlane.f32.xlu0 %v2787
      %v2857 = vpop.xlane.xlu0 %2856
      %2858 = vadd.xlane.f32.xlu0 %v2790
      %v2859 = vpop.xlane.xlu0 %2858
      %2860 = vadd.xlane.f32.xlu0 %v2792
      %v2861 = vpop.xlane.xlu0 %2860
      %2862 = vadd.xlane.f32.xlu0 %v2795
      %v2863 = vpop.xlane.xlu0 %2862
      %2864 = vadd.xlane.f32.xlu0 %v2797
      %v2865 = vpop.xlane.xlu0 %2864
      %2866 = vadd.xlane.f32.xlu0 %v2800
      %v2867 = vpop.xlane.xlu0 %2866
      %2868 = vadd.xlane.f32.xlu0 %v2802
      %v2869 = vpop.xlane.xlu0 %2868
      %2870 = vadd.xlane.f32.xlu0 %v2805
      %v2871 = vpop.xlane.xlu0 %2870
      %2872 = vadd.xlane.f32.xlu0 %v2807
      %v2873 = vpop.xlane.xlu0 %2872
      %2874 = vadd.xlane.f32.xlu0 %v2810
      %v2875 = vpop.xlane.xlu0 %2874
      %2876 = vadd.xlane.f32.xlu0 %v2812
      %v2877 = vpop.xlane.xlu0 %2876
      %v2878 = vmul.f32 %v2815, %v1873
      %v2879 = vmul.f32 %v2817, %v1873
      %v2880 = vmul.f32 %v2819, %v1873
      %v2881 = vmul.f32 %v2821, %v1873
      %v2882 = vmul.f32 %v2823, %v1873
      %v2883 = vmul.f32 %v2825, %v1873
      %v2884 = vmul.f32 %v2827, %v1873
      %v2885 = vmul.f32 %v2829, %v1873
      %v2886 = vmul.f32 %v2831, %v1873
      %v2887 = vmul.f32 %v2833, %v1873
      %v2888 = vmul.f32 %v2835, %v1873
      %v2889 = vmul.f32 %v2837, %v1873
      %v2890 = vmul.f32 %v2839, %v1873
      %v2891 = vmul.f32 %v2841, %v1873
      %v2892 = vmul.f32 %v2843, %v1873
      %v2893 = vmul.f32 %v2845, %v1873
      %v2894 = vmul.f32 %v2847, %v1873
      %v2895 = vmul.f32 %v2849, %v1873
      %v2896 = vmul.f32 %v2851, %v1873
      %v2897 = vmul.f32 %v2853, %v1873
      %v2898 = vmul.f32 %v2855, %v1873
      %v2899 = vmul.f32 %v2857, %v1873
      %v2900 = vmul.f32 %v2859, %v1873
      %v2901 = vmul.f32 %v2861, %v1873
      %v2902 = vmul.f32 %v2863, %v1873
      %v2903 = vmul.f32 %v2865, %v1873
      %v2904 = vmul.f32 %v2867, %v1873
      %v2905 = vmul.f32 %v2869, %v1873
      %v2906 = vmul.f32 %v2871, %v1873
      %v2907 = vmul.f32 %v2873, %v1873
      %v2908 = vmul.f32 %v2875, %v1873
      %v2909 = vmul.f32 %v2877, %v1873
      %v2910 = vmul.f32 %v2735, %v2735
      %v2911 = vmul.f32 %v2737, %v2737
      %v2912 = vmul.f32 %v2740, %v2740
      %v2913 = vmul.f32 %v2742, %v2742
      %v2914 = vmul.f32 %v2745, %v2745
      %v2915 = vmul.f32 %v2747, %v2747
      %v2916 = vmul.f32 %v2750, %v2750
      %v2917 = vmul.f32 %v2752, %v2752
      %v2918 = vmul.f32 %v2755, %v2755
      %v2919 = vmul.f32 %v2757, %v2757
      %v2920 = vmul.f32 %v2760, %v2760
      %v2921 = vmul.f32 %v2762, %v2762
      %v2922 = vmul.f32 %v2765, %v2765
      %v2923 = vmul.f32 %v2767, %v2767
      %v2924 = vmul.f32 %v2770, %v2770
      %v2925 = vmul.f32 %v2772, %v2772
      %v2926 = vmul.f32 %v2775, %v2775
      %v2927 = vmul.f32 %v2777, %v2777
      %v2928 = vmul.f32 %v2780, %v2780
      %v2929 = vmul.f32 %v2782, %v2782
      %v2930 = vmul.f32 %v2785, %v2785
      %v2931 = vmul.f32 %v2787, %v2787
      %v2932 = vmul.f32 %v2790, %v2790
      %v2933 = vmul.f32 %v2792, %v2792
      %v2934 = vmul.f32 %v2795, %v2795
      %v2935 = vmul.f32 %v2797, %v2797
      %v2936 = vmul.f32 %v2800, %v2800
      %v2937 = vmul.f32 %v2802, %v2802
      %v2938 = vmul.f32 %v2805, %v2805
      %v2939 = vmul.f32 %v2807, %v2807
      %v2940 = vmul.f32 %v2810, %v2810
      %v2941 = vmul.f32 %v2812, %v2812
      %2942 = vadd.xlane.f32.xlu0 %v2910
      %v2943 = vpop.xlane.xlu0 %2942
      %2944 = vadd.xlane.f32.xlu0 %v2911
      %v2945 = vpop.xlane.xlu0 %2944
      %2946 = vadd.xlane.f32.xlu0 %v2912
      %v2947 = vpop.xlane.xlu0 %2946
      %2948 = vadd.xlane.f32.xlu0 %v2913
      %v2949 = vpop.xlane.xlu0 %2948
      %2950 = vadd.xlane.f32.xlu0 %v2914
      %v2951 = vpop.xlane.xlu0 %2950
      %2952 = vadd.xlane.f32.xlu0 %v2915
      %v2953 = vpop.xlane.xlu0 %2952
      %2954 = vadd.xlane.f32.xlu0 %v2916
      %v2955 = vpop.xlane.xlu0 %2954
      %2956 = vadd.xlane.f32.xlu0 %v2917
      %v2957 = vpop.xlane.xlu0 %2956
      %2958 = vadd.xlane.f32.xlu0 %v2918
      %v2959 = vpop.xlane.xlu0 %2958
      %2960 = vadd.xlane.f32.xlu0 %v2919
      %v2961 = vpop.xlane.xlu0 %2960
      %2962 = vadd.xlane.f32.xlu0 %v2920
      %v2963 = vpop.xlane.xlu0 %2962
      %2964 = vadd.xlane.f32.xlu0 %v2921
      %v2965 = vpop.xlane.xlu0 %2964
      %2966 = vadd.xlane.f32.xlu0 %v2922
      %v2967 = vpop.xlane.xlu0 %2966
      %2968 = vadd.xlane.f32.xlu0 %v2923
      %v2969 = vpop.xlane.xlu0 %2968
      %2970 = vadd.xlane.f32.xlu0 %v2924
      %v2971 = vpop.xlane.xlu0 %2970
      %2972 = vadd.xlane.f32.xlu0 %v2925
      %v2973 = vpop.xlane.xlu0 %2972
      %2974 = vadd.xlane.f32.xlu0 %v2926
      %v2975 = vpop.xlane.xlu0 %2974
      %2976 = vadd.xlane.f32.xlu0 %v2927
      %v2977 = vpop.xlane.xlu0 %2976
      %2978 = vadd.xlane.f32.xlu0 %v2928
      %v2979 = vpop.xlane.xlu0 %2978
      %2980 = vadd.xlane.f32.xlu0 %v2929
      %v2981 = vpop.xlane.xlu0 %2980
      %2982 = vadd.xlane.f32.xlu0 %v2930
      %v2983 = vpop.xlane.xlu0 %2982
      %2984 = vadd.xlane.f32.xlu0 %v2931
      %v2985 = vpop.xlane.xlu0 %2984
      %2986 = vadd.xlane.f32.xlu0 %v2932
      %v2987 = vpop.xlane.xlu0 %2986
      %2988 = vadd.xlane.f32.xlu0 %v2933
      %v2989 = vpop.xlane.xlu0 %2988
      %2990 = vadd.xlane.f32.xlu0 %v2934
      %v2991 = vpop.xlane.xlu0 %2990
      %2992 = vadd.xlane.f32.xlu0 %v2935
      %v2993 = vpop.xlane.xlu0 %2992
      %2994 = vadd.xlane.f32.xlu0 %v2936
      %v2995 = vpop.xlane.xlu0 %2994
      %2996 = vadd.xlane.f32.xlu0 %v2937
      %v2997 = vpop.xlane.xlu0 %2996
      %2998 = vadd.xlane.f32.xlu0 %v2938
      %v2999 = vpop.xlane.xlu0 %2998
      %3000 = vadd.xlane.f32.xlu0 %v2939
      %v3001 = vpop.xlane.xlu0 %3000
      %3002 = vadd.xlane.f32.xlu0 %v2940
      %v3003 = vpop.xlane.xlu0 %3002
      %3004 = vadd.xlane.f32.xlu0 %v2941
      %v3005 = vpop.xlane.xlu0 %3004
      %v3006 = vmul.f32 %v2943, %v1873
      %v3007 = vmul.f32 %v2945, %v1873
      %v3008 = vmul.f32 %v2947, %v1873
      %v3009 = vmul.f32 %v2949, %v1873
      %v3010 = vmul.f32 %v2951, %v1873
      %v3011 = vmul.f32 %v2953, %v1873
      %v3012 = vmul.f32 %v2955, %v1873
      %v3013 = vmul.f32 %v2957, %v1873
      %v3014 = vmul.f32 %v2959, %v1873
      %v3015 = vmul.f32 %v2961, %v1873
      %v3016 = vmul.f32 %v2963, %v1873
      %v3017 = vmul.f32 %v2965, %v1873
      %v3018 = vmul.f32 %v2967, %v1873
      %v3019 = vmul.f32 %v2969, %v1873
      %v3020 = vmul.f32 %v2971, %v1873
      %v3021 = vmul.f32 %v2973, %v1873
      %v3022 = vmul.f32 %v2975, %v1873
      %v3023 = vmul.f32 %v2977, %v1873
      %v3024 = vmul.f32 %v2979, %v1873
      %v3025 = vmul.f32 %v2981, %v1873
      %v3026 = vmul.f32 %v2983, %v1873
      %v3027 = vmul.f32 %v2985, %v1873
      %v3028 = vmul.f32 %v2987, %v1873
      %v3029 = vmul.f32 %v2989, %v1873
      %v3030 = vmul.f32 %v2991, %v1873
      %v3031 = vmul.f32 %v2993, %v1873
      %v3032 = vmul.f32 %v2995, %v1873
      %v3033 = vmul.f32 %v2997, %v1873
      %v3034 = vmul.f32 %v2999, %v1873
      %v3035 = vmul.f32 %v3001, %v1873
      %v3036 = vmul.f32 %v3003, %v1873
      %v3037 = vmul.f32 %v3005, %v1873
      %v3038 = vmul.f32 %v2878, %v2878
      %v3039 = vmul.f32 %v2879, %v2879
      %v3040 = vmul.f32 %v2880, %v2880
      %v3041 = vmul.f32 %v2881, %v2881
      %v3042 = vmul.f32 %v2882, %v2882
      %v3043 = vmul.f32 %v2883, %v2883
      %v3044 = vmul.f32 %v2884, %v2884
      %v3045 = vmul.f32 %v2885, %v2885
      %v3046 = vmul.f32 %v2886, %v2886
      %v3047 = vmul.f32 %v2887, %v2887
      %v3048 = vmul.f32 %v2888, %v2888
      %v3049 = vmul.f32 %v2889, %v2889
      %v3050 = vmul.f32 %v2890, %v2890
      %v3051 = vmul.f32 %v2891, %v2891
      %v3052 = vmul.f32 %v2892, %v2892
      %v3053 = vmul.f32 %v2893, %v2893
      %v3054 = vmul.f32 %v2894, %v2894
      %v3055 = vmul.f32 %v2895, %v2895
      %v3056 = vmul.f32 %v2896, %v2896
      %v3057 = vmul.f32 %v2897, %v2897
      %v3058 = vmul.f32 %v2898, %v2898
      %v3059 = vmul.f32 %v2899, %v2899
      %v3060 = vmul.f32 %v2900, %v2900
      %v3061 = vmul.f32 %v2901, %v2901
      %v3062 = vmul.f32 %v2902, %v2902
      %v3063 = vmul.f32 %v2903, %v2903
      %v3064 = vmul.f32 %v2904, %v2904
      %v3065 = vmul.f32 %v2905, %v2905
      %v3066 = vmul.f32 %v2906, %v2906
      %v3067 = vmul.f32 %v2907, %v2907
      %v3068 = vmul.f32 %v2908, %v2908
      %v3069 = vmul.f32 %v2909, %v2909
      %v3070 = vsub.f32 %v3006, %v3038
      %v3071 = vsub.f32 %v3007, %v3039
      %v3072 = vsub.f32 %v3008, %v3040
      %v3073 = vsub.f32 %v3009, %v3041
      %v3074 = vsub.f32 %v3010, %v3042
      %v3075 = vsub.f32 %v3011, %v3043
      %v3076 = vsub.f32 %v3012, %v3044
      %v3077 = vsub.f32 %v3013, %v3045
      %v3078 = vsub.f32 %v3014, %v3046
      %v3079 = vsub.f32 %v3015, %v3047
      %v3080 = vsub.f32 %v3016, %v3048
      %v3081 = vsub.f32 %v3017, %v3049
      %v3082 = vsub.f32 %v3018, %v3050
      %v3083 = vsub.f32 %v3019, %v3051
      %v3084 = vsub.f32 %v3020, %v3052
      %v3085 = vsub.f32 %v3021, %v3053
      %v3086 = vsub.f32 %v3022, %v3054
      %v3087 = vsub.f32 %v3023, %v3055
      %v3088 = vsub.f32 %v3024, %v3056
      %v3089 = vsub.f32 %v3025, %v3057
      %v3090 = vsub.f32 %v3026, %v3058
      %v3091 = vsub.f32 %v3027, %v3059
      %v3092 = vsub.f32 %v3028, %v3060
      %v3093 = vsub.f32 %v3029, %v3061
      %v3094 = vsub.f32 %v3030, %v3062
      %v3095 = vsub.f32 %v3031, %v3063
      %v3096 = vsub.f32 %v3032, %v3064
      %v3097 = vsub.f32 %v3033, %v3065
      %v3098 = vsub.f32 %v3034, %v3066
      %v3099 = vsub.f32 %v3035, %v3067
      %v3100 = vsub.f32 %v3036, %v3068
      %v3101 = vsub.f32 %v3037, %v3069
      %v3102 = vmax.f32 %v3070, 0.0
      %v3103 = vmax.f32 %v3071, 0.0
      %v3104 = vmax.f32 %v3072, 0.0
      %v3105 = vmax.f32 %v3073, 0.0
      %v3106 = vmax.f32 %v3074, 0.0
      %v3107 = vmax.f32 %v3075, 0.0
      %v3108 = vmax.f32 %v3076, 0.0
      %v3109 = vmax.f32 %v3077, 0.0
      %v3110 = vmax.f32 %v3078, 0.0
      %v3111 = vmax.f32 %v3079, 0.0
      %v3112 = vmax.f32 %v3080, 0.0
      %v3113 = vmax.f32 %v3081, 0.0
      %v3114 = vmax.f32 %v3082, 0.0
      %v3115 = vmax.f32 %v3083, 0.0
      %v3116 = vmax.f32 %v3084, 0.0
      %v3117 = vmax.f32 %v3085, 0.0
      %v3118 = vmax.f32 %v3086, 0.0
      %v3119 = vmax.f32 %v3087, 0.0
      %v3120 = vmax.f32 %v3088, 0.0
      %v3121 = vmax.f32 %v3089, 0.0
      %v3122 = vmax.f32 %v3090, 0.0
      %v3123 = vmax.f32 %v3091, 0.0
      %v3124 = vmax.f32 %v3092, 0.0
      %v3125 = vmax.f32 %v3093, 0.0
      %v3126 = vmax.f32 %v3094, 0.0
      %v3127 = vmax.f32 %v3095, 0.0
      %v3128 = vmax.f32 %v3096, 0.0
      %v3129 = vmax.f32 %v3097, 0.0
      %v3130 = vmax.f32 %v3098, 0.0
      %v3131 = vmax.f32 %v3099, 0.0
      %v3132 = vmax.f32 %v3100, 0.0
      %v3133 = vmax.f32 %v3101, 0.0
      %v3134 = vsub.f32 %v2735, %v2878
      %v3135 = vsub.f32 %v2737, %v2879
      %v3136 = vsub.f32 %v2740, %v2880
      %v3137 = vsub.f32 %v2742, %v2881
      %v3138 = vsub.f32 %v2745, %v2882
      %v3139 = vsub.f32 %v2747, %v2883
      %v3140 = vsub.f32 %v2750, %v2884
      %v3141 = vsub.f32 %v2752, %v2885
      %v3142 = vsub.f32 %v2755, %v2886
      %v3143 = vsub.f32 %v2757, %v2887
      %v3144 = vsub.f32 %v2760, %v2888
      %v3145 = vsub.f32 %v2762, %v2889
      %v3146 = vsub.f32 %v2765, %v2890
      %v3147 = vsub.f32 %v2767, %v2891
      %v3148 = vsub.f32 %v2770, %v2892
      %v3149 = vsub.f32 %v2772, %v2893
      %v3150 = vsub.f32 %v2775, %v2894
      %v3151 = vsub.f32 %v2777, %v2895
      %v3152 = vsub.f32 %v2780, %v2896
      %v3153 = vsub.f32 %v2782, %v2897
      %v3154 = vsub.f32 %v2785, %v2898
      %v3155 = vsub.f32 %v2787, %v2899
      %v3156 = vsub.f32 %v2790, %v2900
      %v3157 = vsub.f32 %v2792, %v2901
      %v3158 = vsub.f32 %v2795, %v2902
      %v3159 = vsub.f32 %v2797, %v2903
      %v3160 = vsub.f32 %v2800, %v2904
      %v3161 = vsub.f32 %v2802, %v2905
      %v3162 = vsub.f32 %v2805, %v2906
      %v3163 = vsub.f32 %v2807, %v2907
      %v3164 = vsub.f32 %v2810, %v2908
      %v3165 = vsub.f32 %v2812, %v2909
      %v3166 = vadd.f32 %v3102, 1e-05
      %v3167 = vadd.f32 %v3103, 1e-05
      %v3168 = vadd.f32 %v3104, 1e-05
      %v3169 = vadd.f32 %v3105, 1e-05
      %v3170 = vadd.f32 %v3106, 1e-05
      %v3171 = vadd.f32 %v3107, 1e-05
      %v3172 = vadd.f32 %v3108, 1e-05
      %v3173 = vadd.f32 %v3109, 1e-05
      %v3174 = vadd.f32 %v3110, 1e-05
      %v3175 = vadd.f32 %v3111, 1e-05
      %v3176 = vadd.f32 %v3112, 1e-05
      %v3177 = vadd.f32 %v3113, 1e-05
      %v3178 = vadd.f32 %v3114, 1e-05
      %v3179 = vadd.f32 %v3115, 1e-05
      %v3180 = vadd.f32 %v3116, 1e-05
      %v3181 = vadd.f32 %v3117, 1e-05
      %v3182 = vadd.f32 %v3118, 1e-05
      %v3183 = vadd.f32 %v3119, 1e-05
      %v3184 = vadd.f32 %v3120, 1e-05
      %v3185 = vadd.f32 %v3121, 1e-05
      %v3186 = vadd.f32 %v3122, 1e-05
      %v3187 = vadd.f32 %v3123, 1e-05
      %v3188 = vadd.f32 %v3124, 1e-05
      %v3189 = vadd.f32 %v3125, 1e-05
      %v3190 = vadd.f32 %v3126, 1e-05
      %v3191 = vadd.f32 %v3127, 1e-05
      %v3192 = vadd.f32 %v3128, 1e-05
      %v3193 = vadd.f32 %v3129, 1e-05
      %v3194 = vadd.f32 %v3130, 1e-05
      %v3195 = vadd.f32 %v3131, 1e-05
      %v3196 = vadd.f32 %v3132, 1e-05
      %v3197 = vadd.f32 %v3133, 1e-05
      %v3198 = vrsqrt.pop %v3166
      %v3199 = vmul.f32 %v3198, %v3166
      %v3200 = vmul.f32 %v3199, %v3198
      %v3201 = vmul.f32 0.5, %v3200
      %v3202 = vsub.f32 1.5, %v3201
      %v3203 = vmul.f32 %v3198, %v3202
      %vm3204 = vweird.f32 %v3166
      %vm3205 = vweird.f32 %v3198
      %vm3206 = vmor %vm3204, %vm3205
      %v3207 = vsel %vm3206, %v3198, %v3203
      %v3208 = vrsqrt.pop %v3167
      %v3209 = vmul.f32 %v3208, %v3167
      %v3210 = vmul.f32 %v3209, %v3208
      %v3211 = vmul.f32 0.5, %v3210
      %v3212 = vsub.f32 1.5, %v3211
      %v3213 = vmul.f32 %v3208, %v3212
      %vm3214 = vweird.f32 %v3167
      %vm3215 = vweird.f32 %v3208
      %vm3216 = vmor %vm3214, %vm3215
      %v3217 = vsel %vm3216, %v3208, %v3213
      %v3218 = vrsqrt.pop %v3168
      %v3219 = vmul.f32 %v3218, %v3168
      %v3220 = vmul.f32 %v3219, %v3218
      %v3221 = vmul.f32 0.5, %v3220
      %v3222 = vsub.f32 1.5, %v3221
      %v3223 = vmul.f32 %v3218, %v3222
      %vm3224 = vweird.f32 %v3168
      %vm3225 = vweird.f32 %v3218
      %vm3226 = vmor %vm3224, %vm3225
      %v3227 = vsel %vm3226, %v3218, %v3223
      %v3228 = vrsqrt.pop %v3169
      %v3229 = vmul.f32 %v3228, %v3169
      %v3230 = vmul.f32 %v3229, %v3228
      %v3231 = vmul.f32 0.5, %v3230
      %v3232 = vsub.f32 1.5, %v3231
      %v3233 = vmul.f32 %v3228, %v3232
      %vm3234 = vweird.f32 %v3169
      %vm3235 = vweird.f32 %v3228
      %vm3236 = vmor %vm3234, %vm3235
      %v3237 = vsel %vm3236, %v3228, %v3233
      %v3238 = vrsqrt.pop %v3170
      %v3239 = vmul.f32 %v3238, %v3170
      %v3240 = vmul.f32 %v3239, %v3238
      %v3241 = vmul.f32 0.5, %v3240
      %v3242 = vsub.f32 1.5, %v3241
      %v3243 = vmul.f32 %v3238, %v3242
      %vm3244 = vweird.f32 %v3170
      %vm3245 = vweird.f32 %v3238
      %vm3246 = vmor %vm3244, %vm3245
      %v3247 = vsel %vm3246, %v3238, %v3243
      %v3248 = vrsqrt.pop %v3171
      %v3249 = vmul.f32 %v3248, %v3171
      %v3250 = vmul.f32 %v3249, %v3248
      %v3251 = vmul.f32 0.5, %v3250
      %v3252 = vsub.f32 1.5, %v3251
      %v3253 = vmul.f32 %v3248, %v3252
      %vm3254 = vweird.f32 %v3171
      %vm3255 = vweird.f32 %v3248
      %vm3256 = vmor %vm3254, %vm3255
      %v3257 = vsel %vm3256, %v3248, %v3253
      %v3258 = vrsqrt.pop %v3172
      %v3259 = vmul.f32 %v3258, %v3172
      %v3260 = vmul.f32 %v3259, %v3258
      %v3261 = vmul.f32 0.5, %v3260
      %v3262 = vsub.f32 1.5, %v3261
      %v3263 = vmul.f32 %v3258, %v3262
      %vm3264 = vweird.f32 %v3172
      %vm3265 = vweird.f32 %v3258
      %vm3266 = vmor %vm3264, %vm3265
      %v3267 = vsel %vm3266, %v3258, %v3263
      %v3268 = vrsqrt.pop %v3173
      %v3269 = vmul.f32 %v3268, %v3173
      %v3270 = vmul.f32 %v3269, %v3268
      %v3271 = vmul.f32 0.5, %v3270
      %v3272 = vsub.f32 1.5, %v3271
      %v3273 = vmul.f32 %v3268, %v3272
      %vm3274 = vweird.f32 %v3173
      %vm3275 = vweird.f32 %v3268
      %vm3276 = vmor %vm3274, %vm3275
      %v3277 = vsel %vm3276, %v3268, %v3273
      %v3278 = vrsqrt.pop %v3174
      %v3279 = vmul.f32 %v3278, %v3174
      %v3280 = vmul.f32 %v3279, %v3278
      %v3281 = vmul.f32 0.5, %v3280
      %v3282 = vsub.f32 1.5, %v3281
      %v3283 = vmul.f32 %v3278, %v3282
      %vm3284 = vweird.f32 %v3174
      %vm3285 = vweird.f32 %v3278
      %vm3286 = vmor %vm3284, %vm3285
      %v3287 = vsel %vm3286, %v3278, %v3283
      %v3288 = vrsqrt.pop %v3175
      %v3289 = vmul.f32 %v3288, %v3175
      %v3290 = vmul.f32 %v3289, %v3288
      %v3291 = vmul.f32 0.5, %v3290
      %v3292 = vsub.f32 1.5, %v3291
      %v3293 = vmul.f32 %v3288, %v3292
      %vm3294 = vweird.f32 %v3175
      %vm3295 = vweird.f32 %v3288
      %vm3296 = vmor %vm3294, %vm3295
      %v3297 = vsel %vm3296, %v3288, %v3293
      %v3298 = vrsqrt.pop %v3176
      %v3299 = vmul.f32 %v3298, %v3176
      %v3300 = vmul.f32 %v3299, %v3298
      %v3301 = vmul.f32 0.5, %v3300
      %v3302 = vsub.f32 1.5, %v3301
      %v3303 = vmul.f32 %v3298, %v3302
      %vm3304 = vweird.f32 %v3176
      %vm3305 = vweird.f32 %v3298
      %vm3306 = vmor %vm3304, %vm3305
      %v3307 = vsel %vm3306, %v3298, %v3303
      %v3308 = vrsqrt.pop %v3177
      %v3309 = vmul.f32 %v3308, %v3177
      %v3310 = vmul.f32 %v3309, %v3308
      %v3311 = vmul.f32 0.5, %v3310
      %v3312 = vsub.f32 1.5, %v3311
      %v3313 = vmul.f32 %v3308, %v3312
      %vm3314 = vweird.f32 %v3177
      %vm3315 = vweird.f32 %v3308
      %vm3316 = vmor %vm3314, %vm3315
      %v3317 = vsel %vm3316, %v3308, %v3313
      %v3318 = vrsqrt.pop %v3178
      %v3319 = vmul.f32 %v3318, %v3178
      %v3320 = vmul.f32 %v3319, %v3318
      %v3321 = vmul.f32 0.5, %v3320
      %v3322 = vsub.f32 1.5, %v3321
      %v3323 = vmul.f32 %v3318, %v3322
      %vm3324 = vweird.f32 %v3178
      %vm3325 = vweird.f32 %v3318
      %vm3326 = vmor %vm3324, %vm3325
      %v3327 = vsel %vm3326, %v3318, %v3323
      %v3328 = vrsqrt.pop %v3179
      %v3329 = vmul.f32 %v3328, %v3179
      %v3330 = vmul.f32 %v3329, %v3328
      %v3331 = vmul.f32 0.5, %v3330
      %v3332 = vsub.f32 1.5, %v3331
      %v3333 = vmul.f32 %v3328, %v3332
      %vm3334 = vweird.f32 %v3179
      %vm3335 = vweird.f32 %v3328
      %vm3336 = vmor %vm3334, %vm3335
      %v3337 = vsel %vm3336, %v3328, %v3333
      %v3338 = vrsqrt.pop %v3180
      %v3339 = vmul.f32 %v3338, %v3180
      %v3340 = vmul.f32 %v3339, %v3338
      %v3341 = vmul.f32 0.5, %v3340
      %v3342 = vsub.f32 1.5, %v3341
      %v3343 = vmul.f32 %v3338, %v3342
      %vm3344 = vweird.f32 %v3180
      %vm3345 = vweird.f32 %v3338
      %vm3346 = vmor %vm3344, %vm3345
      %v3347 = vsel %vm3346, %v3338, %v3343
      %v3348 = vrsqrt.pop %v3181
      %v3349 = vmul.f32 %v3348, %v3181
      %v3350 = vmul.f32 %v3349, %v3348
      %v3351 = vmul.f32 0.5, %v3350
      %v3352 = vsub.f32 1.5, %v3351
      %v3353 = vmul.f32 %v3348, %v3352
      %vm3354 = vweird.f32 %v3181
      %vm3355 = vweird.f32 %v3348
      %vm3356 = vmor %vm3354, %vm3355
      %v3357 = vsel %vm3356, %v3348, %v3353
      %v3358 = vrsqrt.pop %v3182
      %v3359 = vmul.f32 %v3358, %v3182
      %v3360 = vmul.f32 %v3359, %v3358
      %v3361 = vmul.f32 0.5, %v3360
      %v3362 = vsub.f32 1.5, %v3361
      %v3363 = vmul.f32 %v3358, %v3362
      %vm3364 = vweird.f32 %v3182
      %vm3365 = vweird.f32 %v3358
      %vm3366 = vmor %vm3364, %vm3365
      %v3367 = vsel %vm3366, %v3358, %v3363
      %v3368 = vrsqrt.pop %v3183
      %v3369 = vmul.f32 %v3368, %v3183
      %v3370 = vmul.f32 %v3369, %v3368
      %v3371 = vmul.f32 0.5, %v3370
      %v3372 = vsub.f32 1.5, %v3371
      %v3373 = vmul.f32 %v3368, %v3372
      %vm3374 = vweird.f32 %v3183
      %vm3375 = vweird.f32 %v3368
      %vm3376 = vmor %vm3374, %vm3375
      %v3377 = vsel %vm3376, %v3368, %v3373
      %v3378 = vrsqrt.pop %v3184
      %v3379 = vmul.f32 %v3378, %v3184
      %v3380 = vmul.f32 %v3379, %v3378
      %v3381 = vmul.f32 0.5, %v3380
      %v3382 = vsub.f32 1.5, %v3381
      %v3383 = vmul.f32 %v3378, %v3382
      %vm3384 = vweird.f32 %v3184
      %vm3385 = vweird.f32 %v3378
      %vm3386 = vmor %vm3384, %vm3385
      %v3387 = vsel %vm3386, %v3378, %v3383
      %v3388 = vrsqrt.pop %v3185
      %v3389 = vmul.f32 %v3388, %v3185
      %v3390 = vmul.f32 %v3389, %v3388
      %v3391 = vmul.f32 0.5, %v3390
      %v3392 = vsub.f32 1.5, %v3391
      %v3393 = vmul.f32 %v3388, %v3392
      %vm3394 = vweird.f32 %v3185
      %vm3395 = vweird.f32 %v3388
      %vm3396 = vmor %vm3394, %vm3395
      %v3397 = vsel %vm3396, %v3388, %v3393
      %v3398 = vrsqrt.pop %v3186
      %v3399 = vmul.f32 %v3398, %v3186
      %v3400 = vmul.f32 %v3399, %v3398
      %v3401 = vmul.f32 0.5, %v3400
      %v3402 = vsub.f32 1.5, %v3401
      %v3403 = vmul.f32 %v3398, %v3402
      %vm3404 = vweird.f32 %v3186
      %vm3405 = vweird.f32 %v3398
      %vm3406 = vmor %vm3404, %vm3405
      %v3407 = vsel %vm3406, %v3398, %v3403
      %v3408 = vrsqrt.pop %v3187
      %v3409 = vmul.f32 %v3408, %v3187
      %v3410 = vmul.f32 %v3409, %v3408
      %v3411 = vmul.f32 0.5, %v3410
      %v3412 = vsub.f32 1.5, %v3411
      %v3413 = vmul.f32 %v3408, %v3412
      %vm3414 = vweird.f32 %v3187
      %vm3415 = vweird.f32 %v3408
      %vm3416 = vmor %vm3414, %vm3415
      %v3417 = vsel %vm3416, %v3408, %v3413
      %v3418 = vrsqrt.pop %v3188
      %v3419 = vmul.f32 %v3418, %v3188
      %v3420 = vmul.f32 %v3419, %v3418
      %v3421 = vmul.f32 0.5, %v3420
      %v3422 = vsub.f32 1.5, %v3421
      %v3423 = vmul.f32 %v3418, %v3422
      %vm3424 = vweird.f32 %v3188
      %vm3425 = vweird.f32 %v3418
      %vm3426 = vmor %vm3424, %vm3425
      %v3427 = vsel %vm3426, %v3418, %v3423
      %v3428 = vrsqrt.pop %v3189
      %v3429 = vmul.f32 %v3428, %v3189
      %v3430 = vmul.f32 %v3429, %v3428
      %v3431 = vmul.f32 0.5, %v3430
      %v3432 = vsub.f32 1.5, %v3431
      %v3433 = vmul.f32 %v3428, %v3432
      %vm3434 = vweird.f32 %v3189
      %vm3435 = vweird.f32 %v3428
      %vm3436 = vmor %vm3434, %vm3435
      %v3437 = vsel %vm3436, %v3428, %v3433
      %v3438 = vrsqrt.pop %v3190
      %v3439 = vmul.f32 %v3438, %v3190
      %v3440 = vmul.f32 %v3439, %v3438
      %v3441 = vmul.f32 0.5, %v3440
      %v3442 = vsub.f32 1.5, %v3441
      %v3443 = vmul.f32 %v3438, %v3442
      %vm3444 = vweird.f32 %v3190
      %vm3445 = vweird.f32 %v3438
      %vm3446 = vmor %vm3444, %vm3445
      %v3447 = vsel %vm3446, %v3438, %v3443
      %v3448 = vrsqrt.pop %v3191
      %v3449 = vmul.f32 %v3448, %v3191
      %v3450 = vmul.f32 %v3449, %v3448
      %v3451 = vmul.f32 0.5, %v3450
      %v3452 = vsub.f32 1.5, %v3451
      %v3453 = vmul.f32 %v3448, %v3452
      %vm3454 = vweird.f32 %v3191
      %vm3455 = vweird.f32 %v3448
      %vm3456 = vmor %vm3454, %vm3455
      %v3457 = vsel %vm3456, %v3448, %v3453
      %v3458 = vrsqrt.pop %v3192
      %v3459 = vmul.f32 %v3458, %v3192
      %v3460 = vmul.f32 %v3459, %v3458
      %v3461 = vmul.f32 0.5, %v3460
      %v3462 = vsub.f32 1.5, %v3461
      %v3463 = vmul.f32 %v3458, %v3462
      %vm3464 = vweird.f32 %v3192
      %vm3465 = vweird.f32 %v3458
      %vm3466 = vmor %vm3464, %vm3465
      %v3467 = vsel %vm3466, %v3458, %v3463
      %v3468 = vrsqrt.pop %v3193
      %v3469 = vmul.f32 %v3468, %v3193
      %v3470 = vmul.f32 %v3469, %v3468
      %v3471 = vmul.f32 0.5, %v3470
      %v3472 = vsub.f32 1.5, %v3471
      %v3473 = vmul.f32 %v3468, %v3472
      %vm3474 = vweird.f32 %v3193
      %vm3475 = vweird.f32 %v3468
      %vm3476 = vmor %vm3474, %vm3475
      %v3477 = vsel %vm3476, %v3468, %v3473
      %v3478 = vrsqrt.pop %v3194
      %v3479 = vmul.f32 %v3478, %v3194
      %v3480 = vmul.f32 %v3479, %v3478
      %v3481 = vmul.f32 0.5, %v3480
      %v3482 = vsub.f32 1.5, %v3481
      %v3483 = vmul.f32 %v3478, %v3482
      %vm3484 = vweird.f32 %v3194
      %vm3485 = vweird.f32 %v3478
      %vm3486 = vmor %vm3484, %vm3485
      %v3487 = vsel %vm3486, %v3478, %v3483
      %v3488 = vrsqrt.pop %v3195
      %v3489 = vmul.f32 %v3488, %v3195
      %v3490 = vmul.f32 %v3489, %v3488
      %v3491 = vmul.f32 0.5, %v3490
      %v3492 = vsub.f32 1.5, %v3491
      %v3493 = vmul.f32 %v3488, %v3492
      %vm3494 = vweird.f32 %v3195
      %vm3495 = vweird.f32 %v3488
      %vm3496 = vmor %vm3494, %vm3495
      %v3497 = vsel %vm3496, %v3488, %v3493
      %v3498 = vrsqrt.pop %v3196
      %v3499 = vmul.f32 %v3498, %v3196
      %v3500 = vmul.f32 %v3499, %v3498
      %v3501 = vmul.f32 0.5, %v3500
      %v3502 = vsub.f32 1.5, %v3501
      %v3503 = vmul.f32 %v3498, %v3502
      %vm3504 = vweird.f32 %v3196
      %vm3505 = vweird.f32 %v3498
      %vm3506 = vmor %vm3504, %vm3505
      %v3507 = vsel %vm3506, %v3498, %v3503
      %v3508 = vrsqrt.pop %v3197
      %v3509 = vmul.f32 %v3508, %v3197
      %v3510 = vmul.f32 %v3509, %v3508
      %v3511 = vmul.f32 0.5, %v3510
      %v3512 = vsub.f32 1.5, %v3511
      %v3513 = vmul.f32 %v3508, %v3512
      %vm3514 = vweird.f32 %v3197
      %vm3515 = vweird.f32 %v3508
      %vm3516 = vmor %vm3514, %vm3515
      %v3517 = vsel %vm3516, %v3508, %v3513
      %v3518 = vmul.f32 %v3134, %v3207
      %v3519 = vmul.f32 %v3135, %v3217
      %v3520 = vmul.f32 %v3136, %v3227
      %v3521 = vmul.f32 %v3137, %v3237
      %v3522 = vmul.f32 %v3138, %v3247
      %v3523 = vmul.f32 %v3139, %v3257
      %v3524 = vmul.f32 %v3140, %v3267
      %v3525 = vmul.f32 %v3141, %v3277
      %v3526 = vmul.f32 %v3142, %v3287
      %v3527 = vmul.f32 %v3143, %v3297
      %v3528 = vmul.f32 %v3144, %v3307
      %v3529 = vmul.f32 %v3145, %v3317
      %v3530 = vmul.f32 %v3146, %v3327
      %v3531 = vmul.f32 %v3147, %v3337
      %v3532 = vmul.f32 %v3148, %v3347
      %v3533 = vmul.f32 %v3149, %v3357
      %v3534 = vmul.f32 %v3150, %v3367
      %v3535 = vmul.f32 %v3151, %v3377
      %v3536 = vmul.f32 %v3152, %v3387
      %v3537 = vmul.f32 %v3153, %v3397
      %v3538 = vmul.f32 %v3154, %v3407
      %v3539 = vmul.f32 %v3155, %v3417
      %v3540 = vmul.f32 %v3156, %v3427
      %v3541 = vmul.f32 %v3157, %v3437
      %v3542 = vmul.f32 %v3158, %v3447
      %v3543 = vmul.f32 %v3159, %v3457
      %v3544 = vmul.f32 %v3160, %v3467
      %v3545 = vmul.f32 %v3161, %v3477
      %v3546 = vmul.f32 %v3162, %v3487
      %v3547 = vmul.f32 %v3163, %v3497
      %v3548 = vmul.f32 %v3164, %v3507
      %v3549 = vmul.f32 %v3165, %v3517
      %v3550 = vperm.slane %v361, 5
      %v3551 = vmul.f32 %v3518, %v3550
      %v3552 = vmul.f32 %v3519, %v3550
      %v3553 = vmul.f32 %v3520, %v3550
      %v3554 = vmul.f32 %v3521, %v3550
      %v3555 = vmul.f32 %v3522, %v3550
      %v3556 = vmul.f32 %v3523, %v3550
      %v3557 = vmul.f32 %v3524, %v3550
      %v3558 = vmul.f32 %v3525, %v3550
      %v3559 = vmul.f32 %v3526, %v3550
      %v3560 = vmul.f32 %v3527, %v3550
      %v3561 = vmul.f32 %v3528, %v3550
      %v3562 = vmul.f32 %v3529, %v3550
      %v3563 = vmul.f32 %v3530, %v3550
      %v3564 = vmul.f32 %v3531, %v3550
      %v3565 = vmul.f32 %v3532, %v3550
      %v3566 = vmul.f32 %v3533, %v3550
      %v3567 = vmul.f32 %v3534, %v3550
      %v3568 = vmul.f32 %v3535, %v3550
      %v3569 = vmul.f32 %v3536, %v3550
      %v3570 = vmul.f32 %v3537, %v3550
      %v3571 = vmul.f32 %v3538, %v3550
      %v3572 = vmul.f32 %v3539, %v3550
      %v3573 = vmul.f32 %v3540, %v3550
      %v3574 = vmul.f32 %v3541, %v3550
      %v3575 = vmul.f32 %v3542, %v3550
      %v3576 = vmul.f32 %v3543, %v3550
      %v3577 = vmul.f32 %v3544, %v3550
      %v3578 = vmul.f32 %v3545, %v3550
      %v3579 = vmul.f32 %v3546, %v3550
      %v3580 = vmul.f32 %v3547, %v3550
      %v3581 = vmul.f32 %v3548, %v3550
      %v3582 = vmul.f32 %v3549, %v3550
      %v3583 = vperm.slane %v361, 6
      %v3584 = vadd.f32 %v3551, %v3583
      %v3585 = vadd.f32 %v3552, %v3583
      %v3586 = vadd.f32 %v3553, %v3583
      %v3587 = vadd.f32 %v3554, %v3583
      %v3588 = vadd.f32 %v3555, %v3583
      %v3589 = vadd.f32 %v3556, %v3583
      %v3590 = vadd.f32 %v3557, %v3583
      %v3591 = vadd.f32 %v3558, %v3583
      %v3592 = vadd.f32 %v3559, %v3583
      %v3593 = vadd.f32 %v3560, %v3583
      %v3594 = vadd.f32 %v3561, %v3583
      %v3595 = vadd.f32 %v3562, %v3583
      %v3596 = vadd.f32 %v3563, %v3583
      %v3597 = vadd.f32 %v3564, %v3583
      %v3598 = vadd.f32 %v3565, %v3583
      %v3599 = vadd.f32 %v3566, %v3583
      %v3600 = vadd.f32 %v3567, %v3583
      %v3601 = vadd.f32 %v3568, %v3583
      %v3602 = vadd.f32 %v3569, %v3583
      %v3603 = vadd.f32 %v3570, %v3583
      %v3604 = vadd.f32 %v3571, %v3583
      %v3605 = vadd.f32 %v3572, %v3583
      %v3606 = vadd.f32 %v3573, %v3583
      %v3607 = vadd.f32 %v3574, %v3583
      %v3608 = vadd.f32 %v3575, %v3583
      %v3609 = vadd.f32 %v3576, %v3583
      %v3610 = vadd.f32 %v3577, %v3583
      %v3611 = vadd.f32 %v3578, %v3583
      %v3612 = vadd.f32 %v3579, %v3583
      %v3613 = vadd.f32 %v3580, %v3583
      %v3614 = vadd.f32 %v3581, %v3583
      %v3615 = vadd.f32 %v3582, %v3583
      %v3616 = vmax.f32 %v3584, 0.0
      %v3617 = vmax.f32 %v3585, 0.0
      %v3618 = vmax.f32 %v3586, 0.0
      %v3619 = vmax.f32 %v3587, 0.0
      %v3620 = vmax.f32 %v3588, 0.0
      %v3621 = vmax.f32 %v3589, 0.0
      %v3622 = vmax.f32 %v3590, 0.0
      %v3623 = vmax.f32 %v3591, 0.0
      %v3624 = vmax.f32 %v3592, 0.0
      %v3625 = vmax.f32 %v3593, 0.0
      %v3626 = vmax.f32 %v3594, 0.0
      %v3627 = vmax.f32 %v3595, 0.0
      %v3628 = vmax.f32 %v3596, 0.0
      %v3629 = vmax.f32 %v3597, 0.0
      %v3630 = vmax.f32 %v3598, 0.0
      %v3631 = vmax.f32 %v3599, 0.0
      %v3632 = vmax.f32 %v3600, 0.0
      %v3633 = vmax.f32 %v3601, 0.0
      %v3634 = vmax.f32 %v3602, 0.0
      %v3635 = vmax.f32 %v3603, 0.0
      %v3636 = vmax.f32 %v3604, 0.0
      %v3637 = vmax.f32 %v3605, 0.0
      %v3638 = vmax.f32 %v3606, 0.0
      %v3639 = vmax.f32 %v3607, 0.0
      %v3640 = vmax.f32 %v3608, 0.0
      %v3641 = vmax.f32 %v3609, 0.0
      %v3642 = vmax.f32 %v3610, 0.0
      %v3643 = vmax.f32 %v3611, 0.0
      %v3644 = vmax.f32 %v3612, 0.0
      %v3645 = vmax.f32 %v3613, 0.0
      %v3646 = vmax.f32 %v3614, 0.0
      %v3647 = vmax.f32 %v3615, 0.0
      %v3648 = vpack.c.bf16 %v3617, %v3616
      %v3649 = vpack.c.bf16 %v3619, %v3618
      %v3650 = vpack.c.bf16 %v3621, %v3620
      %v3651 = vpack.c.bf16 %v3623, %v3622
      %v3652 = vpack.c.bf16 %v3625, %v3624
      %v3653 = vpack.c.bf16 %v3627, %v3626
      %v3654 = vpack.c.bf16 %v3629, %v3628
      %v3655 = vpack.c.bf16 %v3631, %v3630
      %v3656 = vpack.c.bf16 %v3633, %v3632
      %v3657 = vpack.c.bf16 %v3635, %v3634
      %v3658 = vpack.c.bf16 %v3637, %v3636
      %v3659 = vpack.c.bf16 %v3639, %v3638
      %v3660 = vpack.c.bf16 %v3641, %v3640
      %v3661 = vpack.c.bf16 %v3643, %v3642
      %v3662 = vpack.c.bf16 %v3645, %v3644
      %v3663 = vpack.c.bf16 %v3647, %v3646
      %v3664 = vld [vmem:[%s7] sm:$0xf]
      %v3665 = vld [vmem:[%s7 + $0x4] sm:$0xf]
      %v3666 = vld [vmem:[%s7 + $0x8] sm:$0xf]
      %v3667 = vld [vmem:[%s7 + $0xc] sm:$0xf]
      %v3668 = vld [vmem:[%s7 + $0x10] sm:$0xf]
      %v3669 = vld [vmem:[%s7 + $0x14] sm:$0xf]
      %v3670 = vld [vmem:[%s7 + $0x18] sm:$0xf]
      %v3671 = vld [vmem:[%s7 + $0x1c] sm:$0xf]
      %v3672 = vld [vmem:[%s7 + $0x20] sm:$0xf]
      %v3673 = vld [vmem:[%s7 + $0x24] sm:$0xf]
      %v3674 = vld [vmem:[%s7 + $0x28] sm:$0xf]
      %v3675 = vld [vmem:[%s7 + $0x2c] sm:$0xf]
      %v3676 = vld [vmem:[%s7 + $0x30] sm:$0xf]
      %v3677 = vld [vmem:[%s7 + $0x34] sm:$0xf]
      %v3678 = vld [vmem:[%s7 + $0x38] sm:$0xf]
      %v3679 = vld [vmem:[%s7 + $0x3c] sm:$0xf]
      %v3680 = vperm.slane %v361, 7
      %v3697 = vunpack.c.l.b16 %v3664
      %v3698 = vunpack.c.l.b16 %v3665
      %v3699 = vunpack.c.l.b16 %v3666
      %v3700 = vunpack.c.l.b16 %v3667
      %v3701 = vunpack.c.l.b16 %v3668
      %v3702 = vunpack.c.l.b16 %v3669
      %v3703 = vunpack.c.l.b16 %v3670
      %v3704 = vunpack.c.l.b16 %v3671
      %v3705 = vunpack.c.l.b16 %v3672
      %v3706 = vunpack.c.l.b16 %v3673
      %v3707 = vunpack.c.l.b16 %v3674
      %v3708 = vunpack.c.l.b16 %v3675
      %v3709 = vunpack.c.l.b16 %v3676
      %v3710 = vunpack.c.l.b16 %v3677
      %v3711 = vunpack.c.l.b16 %v3678
      %v3712 = vunpack.c.l.b16 %v3679
      %v3713 = vpack.c.b16 %v3698, %v3697
      %v3714 = vpack.c.b16 %v3700, %v3699
      %v3715 = vpack.c.b16 %v3702, %v3701
      %v3716 = vpack.c.b16 %v3704, %v3703
      %v3717 = vpack.c.b16 %v3706, %v3705
      %v3718 = vpack.c.b16 %v3708, %v3707
      %v3719 = vpack.c.b16 %v3710, %v3709
      %v3720 = vpack.c.b16 %v3712, %v3711
      %3729 = vmatpush.bf16.msra.mxu0 %v3720
      %3730 = vmatpush.bf16.msra.mxu0 %v3719
      %3731 = vmatpush.bf16.msra.mxu0 %v3718
      %3732 = vmatpush.bf16.msra.mxu0 %v3717
      %3733 = vmatpush.bf16.msra.mxu0 %v3716
      %3734 = vmatpush.bf16.msra.mxu0 %v3715
      %3735 = vmatpush.bf16.msra.mxu0 %v3714
      %3736 = vmatpush.bf16.msra.mxu0 %v3713
      %3737 = vmatmul.bf16.gmra.mxu0 %v3648
      %v3738 = vpop.f32.mrf.mxu0
      %v3739 = vadd.f32 %v3680, %v3738
      %v3740 = vpop.f32.mrf.mxu0
      %v3741 = vadd.f32 %v3680, %v3740
      %3742 = vmatmul.bf16.gmra.mxu0 %v3649
      %v3743 = vpop.f32.mrf.mxu0
      %v3744 = vadd.f32 %v3680, %v3743
      %v3745 = vpop.f32.mrf.mxu0
      %v3746 = vadd.f32 %v3680, %v3745
      %3747 = vmatmul.bf16.gmra.mxu0 %v3650
      %v3748 = vpop.f32.mrf.mxu0
      %v3749 = vadd.f32 %v3680, %v3748
      %v3750 = vpop.f32.mrf.mxu0
      %v3751 = vadd.f32 %v3680, %v3750
      %3752 = vmatmul.bf16.gmra.mxu0 %v3651
      %v3753 = vpop.f32.mrf.mxu0
      %v3754 = vadd.f32 %v3680, %v3753
      %v3755 = vpop.f32.mrf.mxu0
      %v3756 = vadd.f32 %v3680, %v3755
      %3757 = vmatmul.bf16.gmra.mxu0 %v3652
      %v3758 = vpop.f32.mrf.mxu0
      %v3759 = vadd.f32 %v3680, %v3758
      %v3760 = vpop.f32.mrf.mxu0
      %v3761 = vadd.f32 %v3680, %v3760
      %3762 = vmatmul.bf16.gmra.mxu0 %v3653
      %v3763 = vpop.f32.mrf.mxu0
      %v3764 = vadd.f32 %v3680, %v3763
      %v3765 = vpop.f32.mrf.mxu0
      %v3766 = vadd.f32 %v3680, %v3765
      %3767 = vmatmul.bf16.gmra.mxu0 %v3654
      %v3768 = vpop.f32.mrf.mxu0
      %v3769 = vadd.f32 %v3680, %v3768
      %v3770 = vpop.f32.mrf.mxu0
      %v3771 = vadd.f32 %v3680, %v3770
      %3772 = vmatmul.bf16.gmra.mxu0 %v3655
      %v3773 = vpop.f32.mrf.mxu0
      %v3774 = vadd.f32 %v3680, %v3773
      %v3775 = vpop.f32.mrf.mxu0
      %v3776 = vadd.f32 %v3680, %v3775
      %3777 = vmatmul.bf16.gmra.mxu0 %v3656
      %v3778 = vpop.f32.mrf.mxu0
      %v3779 = vadd.f32 %v3680, %v3778
      %v3780 = vpop.f32.mrf.mxu0
      %v3781 = vadd.f32 %v3680, %v3780
      %3782 = vmatmul.bf16.gmra.mxu0 %v3657
      %v3783 = vpop.f32.mrf.mxu0
      %v3784 = vadd.f32 %v3680, %v3783
      %v3785 = vpop.f32.mrf.mxu0
      %v3786 = vadd.f32 %v3680, %v3785
      %3787 = vmatmul.bf16.gmra.mxu0 %v3658
      %v3788 = vpop.f32.mrf.mxu0
      %v3789 = vadd.f32 %v3680, %v3788
      %v3790 = vpop.f32.mrf.mxu0
      %v3791 = vadd.f32 %v3680, %v3790
      %3792 = vmatmul.bf16.gmra.mxu0 %v3659
      %v3793 = vpop.f32.mrf.mxu0
      %v3794 = vadd.f32 %v3680, %v3793
      %v3795 = vpop.f32.mrf.mxu0
      %v3796 = vadd.f32 %v3680, %v3795
      %3797 = vmatmul.bf16.gmra.mxu0 %v3660
      %v3798 = vpop.f32.mrf.mxu0
      %v3799 = vadd.f32 %v3680, %v3798
      %v3800 = vpop.f32.mrf.mxu0
      %v3801 = vadd.f32 %v3680, %v3800
      %3802 = vmatmul.bf16.gmra.mxu0 %v3661
      %v3803 = vpop.f32.mrf.mxu0
      %v3804 = vadd.f32 %v3680, %v3803
      %v3805 = vpop.f32.mrf.mxu0
      %v3806 = vadd.f32 %v3680, %v3805
      %3807 = vmatmul.bf16.gmra.mxu0 %v3662
      %v3808 = vpop.f32.mrf.mxu0
      %v3809 = vadd.f32 %v3680, %v3808
      %v3810 = vpop.f32.mrf.mxu0
      %v3811 = vadd.f32 %v3680, %v3810
      %3812 = vmatmul.bf16.gmra.mxu0 %v3663
      %v3813 = vpop.f32.mrf.mxu0
      %v3814 = vadd.f32 %v3680, %v3813
      %v3815 = vpop.f32.mrf.mxu0
      %v3816 = vadd.f32 %v3680, %v3815
      %3817 = vdwg.mxu0
      %vm3818 = vcmask 64512
      %3819 = vst.msk [vmem:[%s359] sm:$0xff] %vm3818, %v3739
      %3820 = vst.msk [vmem:[%s359 + $0x8] sm:$0xff] %vm3818, %v3741
      %3821 = vst.msk [vmem:[%s359 + $0x10] sm:$0xff] %vm3818, %v3744
      %3822 = vst.msk [vmem:[%s359 + $0x18] sm:$0xff] %vm3818, %v3746
      %3823 = vst.msk [vmem:[%s359 + $0x20] sm:$0xff] %vm3818, %v3749
      %3824 = vst.msk [vmem:[%s359 + $0x28] sm:$0xff] %vm3818, %v3751
      %3825 = vst.msk [vmem:[%s359 + $0x30] sm:$0xff] %vm3818, %v3754
      %3826 = vst.msk [vmem:[%s359 + $0x38] sm:$0xff] %vm3818, %v3756
      %3827 = vst.msk [vmem:[%s359 + $0x40] sm:$0xff] %vm3818, %v3759
      %3828 = vst.msk [vmem:[%s359 + $0x48] sm:$0xff] %vm3818, %v3761
      %3829 = vst.msk [vmem:[%s359 + $0x50] sm:$0xff] %vm3818, %v3764
      %3830 = vst.msk [vmem:[%s359 + $0x58] sm:$0xff] %vm3818, %v3766
      %3831 = vst.msk [vmem:[%s359 + $0x60] sm:$0xff] %vm3818, %v3769
      %3832 = vst.msk [vmem:[%s359 + $0x68] sm:$0xff] %vm3818, %v3771
      %3833 = vst.msk [vmem:[%s359 + $0x70] sm:$0xff] %vm3818, %v3774
      %3834 = vst.msk [vmem:[%s359 + $0x78] sm:$0xff] %vm3818, %v3776
      %3835 = vst.msk [vmem:[%s359 + $0x80] sm:$0xff] %vm3818, %v3779
      %3836 = vst.msk [vmem:[%s359 + $0x88] sm:$0xff] %vm3818, %v3781
      %3837 = vst.msk [vmem:[%s359 + $0x90] sm:$0xff] %vm3818, %v3784
      %3838 = vst.msk [vmem:[%s359 + $0x98] sm:$0xff] %vm3818, %v3786
      %3839 = vst.msk [vmem:[%s359 + $0xa0] sm:$0xff] %vm3818, %v3789
      %3840 = vst.msk [vmem:[%s359 + $0xa8] sm:$0xff] %vm3818, %v3791
      %3841 = vst.msk [vmem:[%s359 + $0xb0] sm:$0xff] %vm3818, %v3794
      %3842 = vst.msk [vmem:[%s359 + $0xb8] sm:$0xff] %vm3818, %v3796
      %3843 = vst.msk [vmem:[%s359 + $0xc0] sm:$0xff] %vm3818, %v3799
      %3844 = vst.msk [vmem:[%s359 + $0xc8] sm:$0xff] %vm3818, %v3801
      %3845 = vst.msk [vmem:[%s359 + $0xd0] sm:$0xff] %vm3818, %v3804
      %3846 = vst.msk [vmem:[%s359 + $0xd8] sm:$0xff] %vm3818, %v3806
      %3847 = vst.msk [vmem:[%s359 + $0xe0] sm:$0xff] %vm3818, %v3809
      %3848 = vst.msk [vmem:[%s359 + $0xe8] sm:$0xff] %vm3818, %v3811
      %3849 = vst.msk [vmem:[%s359 + $0xf0] sm:$0xff] %vm3818, %v3814
      %3850 = vst.msk [vmem:[%s359 + $0xf8] sm:$0xff] %vm3818, %v3816
      %s3851 = smul.u32 32, %s20
      %p3852 = scmp.lt.s32.totalorder %s3851, 63
      %s3853 = scalar_select %p3852, %s3851, 63
      %s3854 = smul.addr %s3853, 8
      %s3855 = scalar_lea.vmem %s9, %s3854
      // Predicated region
      $region57: #{ddpm_deformer_forward.1} parent=55 // pred_check
        %p3856 = pneg %p237
      $region58: #{ddpm_deformer_forward.1} parent=55 // pred_check_branch
        %3858 = sbr.rel (%p3856) target = $region60
      $region59: #{ddpm_deformer_forward.1} parent=55 // pred_region
        %s3859 = smul.u32 32, %s20
      $region60: #{ddpm_deformer_forward.1} parent=55 // pred_fallthru
        _
    $region56: #{ddpm_deformer_forward.1} parent=5 // pred_fallthru
      _
    %p3860 = scmp.le.s32.totalorder 2, %s15
    // Predicated region
    $region61: #{ddpm_deformer_forward.1} parent=5 // pred_check
      %p3861 = pneg %p3860
    $region62: #{ddpm_deformer_forward.1} parent=5 // pred_check_branch
      %3863 = sbr.rel (%p3861) target = $region64
    $region63: #{ddpm_deformer_forward.1} parent=5 // pred_region
      %s3864 = ssub.s32 %s15, 2
      // Predicated region
      $region65: #{ddpm_deformer_forward.1} parent=63 // pred_check
        %p3865 = pneg %p243
      $region66: #{ddpm_deformer_forward.1} parent=63 // pred_check_branch
        %3867 = sbr.rel (%p3865) target = $region68
      $region67: #{ddpm_deformer_forward.1} parent=63 // pred_region
        %s3868 = smul.u32 32, %s21
        %p3869 = scmp.lt.s32.totalorder %s3868, 63
        %s3870 = scalar_select %p3869, %s3868, 63
        %s3871 = smul.addr %s3870, 8
        %s3872 = scalar_lea.vmem %s9, %s3871
      $region68: #{ddpm_deformer_forward.1} parent=63 // pred_fallthru
        _
    $region64: #{ddpm_deformer_forward.1} parent=5 // pred_fallthru
      _
  $region6: #{ddpm_deformer_forward.1} parent=0 // loop_footer
    %s19 = sadd.s32 1, %s15
  $region7: #{ddpm_deformer_forward.1} parent=0 // loop_footer_branch
    %14 = sbr.rel target = $region3
  $region8: #{ddpm_deformer_forward.1} parent=0 // loop_exit
    _

</llo_original>
